<compile_context>
chip_gen: v7x
topology: tpu7x:2x2x1
jax: 0.10.0
libtpu: 0.0.40
codegen_flags: <defaults>
</compile_context>

<pallas_src>
import functools
import math

import numpy as np
import jax
import jax.numpy as jnp
from jax.experimental import pallas as pl
from jax.experimental.pallas import tpu as pltpu

MAX_SEQ_LEN = 8        # max_seq_len_dpct
D_MODEL = 32           # d_model
D_FF = 64
LN_EPS = 1e-5
NEG_INF = -1e9
OUT_LANES = 128        # lane-dense padded width for final_proj output (2*D = 64 -> 128)
DEFAULT_BLOCK_B = 128  # sequences per grid step -> TB*S = 1024 rows (multiple of 256)
CHUNK_SEQS = 32        # sequences per packed attention chunk (256 rows); use 16 on v5e


def _layer_norm(x, g, b):
    mu = jnp.mean(x, axis=-1, keepdims=True)
    var = jnp.mean((x - mu) ** 2, axis=-1, keepdims=True)
    return (x - mu) * jax.lax.rsqrt(var + LN_EPS) * g + b


# ----------------------------- Pallas kernel ------------------------------- #
def dpct_kernel(x_ref, bias_ref, vec_ref, wq_ref, wk_ref, wv_ref, wo_ref,
                w1_ref, w2_ref, wf_ref, out_ref):
    TB, S, D = x_ref.shape
    F = w1_ref.shape[1]
    N = TB * S
    CHN = bias_ref.shape[0]          # rows per packed attention chunk (= chunk_seqs * S)
    n_chunks = N // CHN
    bf16 = jnp.bfloat16
    f32 = jnp.float32

    # all TB sequences flattened to (N, D); residual stream kept in f32
    x = x_ref[...].astype(f32).reshape(N, D)

    # packed (1, width) vectors: LN params + all biases in one slab (f32)
    ln1_g = vec_ref[0:1, 0:D]
    ln1_b = vec_ref[1:2, 0:D]
    ln2_g = vec_ref[2:3, 0:D]
    ln2_b = vec_ref[3:4, 0:D]
    bq = vec_ref[4:5, 0:D]           # already pre-scaled by 1/sqrt(D) on host
    bk = vec_ref[5:6, 0:D]
    bv = vec_ref[6:7, 0:D]
    bo = vec_ref[7:8, 0:D]
    b1 = vec_ref[8:9, 0:F]
    b2 = vec_ref[9:10, 0:D]
    bf = vec_ref[10:11, :]

    # ---- pre-LN single-head self-attention ----
    xn = _layer_norm(x, ln1_g, ln1_b).astype(bf16)
    # three lane-aligned (D,D) projections; query scale folded into Wq/bq
    q = (jnp.dot(xn, wq_ref[...], preferred_element_type=f32) + bq).astype(bf16)
    k = (jnp.dot(xn, wk_ref[...], preferred_element_type=f32) + bk).astype(bf16)
    v = (jnp.dot(xn, wv_ref[...], preferred_element_type=f32) + bv).astype(bf16)

    # chunked block-diagonal attention: one packed (CHN, CHN) score tile per
    # chunk of CHN/S sequences, with a precomputed additive mask (no iotas).
    bias = bias_ref[...]
    attn_chunks = []
    for c in range(n_chunks):        # static unroll (small trip count)
        lo, hi = c * CHN, (c + 1) * CHN
        qc = q[lo:hi, :]
        kc = k[lo:hi, :]
        vc = v[lo:hi, :]
        s = jax.lax.dot_general(qc, kc, (((1,), (1,)), ((), ())),
                                preferred_element_type=f32) + bias   # (CHN, CHN)
        s = s - jnp.max(s, axis=-1, keepdims=True)
        p = jnp.exp(s)
        p = p * pl.reciprocal(jnp.sum(p, axis=-1, keepdims=True), approx=True)
        attn_chunks.append(jnp.dot(p.astype(bf16), vc,
                                   preferred_element_type=f32))      # (CHN, D)
    attn = attn_chunks[0] if n_chunks == 1 else jnp.concatenate(attn_chunks, axis=0)

    attn = jnp.dot(attn.astype(bf16), wo_ref[...], preferred_element_type=f32) + bo
    h = x + attn

    # ---- pre-LN feed-forward ----
    hn = _layer_norm(h, ln2_g, ln2_b).astype(bf16)
    ff = jnp.dot(hn, w1_ref[...], preferred_element_type=f32) + b1
    ff = jax.nn.gelu(ff, approximate=True)
    ff = jnp.dot(ff.astype(bf16), w2_ref[...], preferred_element_type=f32) + b2
    out_seq = h + ff                                                 # (N, D) f32

    # ---- last token of each sequence: static sublane slice, then final_proj ----
    last = out_seq.reshape(TB, S, D)[:, S - 1, :]                    # (TB, D)
    final = jnp.dot(last.astype(bf16), wf_ref[...],
                    preferred_element_type=f32) + bf                 # (TB, 128)
    out_ref[...] = final.astype(out_ref.dtype)                       # lane-dense store


# ----------------------------- parameters ---------------------------------- #
def init_params(key):
    D, F, S = D_MODEL, D_FF, MAX_SEQ_LEN
    ks = jax.random.split(key, 10)
    bf16 = jnp.bfloat16

    def w(k, shape):
        return jax.random.normal(k, shape, jnp.float32) / math.sqrt(shape[0])

    wq = w(ks[2], (D, D)) * (1.0 / math.sqrt(D))   # query scale folded into Wq
    wk = w(ks[3], (D, D))
    wv = w(ks[4], (D, D))
    wo = w(ks[5], (D, D))
    w1 = w(ks[6], (D, F))
    w2 = w(ks[7], (F, D))
    wf = w(ks[8], (D, 2 * D))
    wf_pad = jnp.zeros((D, OUT_LANES), jnp.float32).at[:, :2 * D].set(wf)

    def vrow(vals):
        r = jnp.zeros((OUT_LANES,), jnp.float32)
        return r.at[:vals.shape[0]].set(vals)

    vec_rows = [
        vrow(jnp.ones((D,), jnp.float32)),        # 0: ln1_g
        vrow(jnp.zeros((D,), jnp.float32)),       # 1: ln1_b
        vrow(jnp.ones((D,), jnp.float32)),        # 2: ln2_g
        vrow(jnp.zeros((D,), jnp.float32)),       # 3: ln2_b
        vrow(jnp.zeros((D,), jnp.float32)),       # 4: bq (pre-scaled)
        vrow(jnp.zeros((D,), jnp.float32)),       # 5: bk
        vrow(jnp.zeros((D,), jnp.float32)),       # 6: bv
        vrow(jnp.zeros((D,), jnp.float32)),       # 7: bo
        vrow(jnp.zeros((F,), jnp.float32)),       # 8: b1
        vrow(jnp.zeros((D,), jnp.float32)),       # 9: b2
        vrow(jnp.zeros((2 * D,), jnp.float32)),   # 10: bf
    ]
    while len(vec_rows) < 16:
        vec_rows.append(jnp.zeros((OUT_LANES,), jnp.float32))
    vec_slab = jnp.stack(vec_rows)                                   # (16, 128) f32

    return dict(
        pos_emb=0.02 * jax.random.normal(ks[0], (S, D), jnp.float32),
        query_tok=0.02 * jax.random.normal(ks[1], (1, D), jnp.float32),
        vec_slab=vec_slab,
        wq=wq.astype(bf16), wk=wk.astype(bf16), wv=wv.astype(bf16),
        wo=wo.astype(bf16), w1=w1.astype(bf16), w2=w2.astype(bf16),
        wf_pad=wf_pad.astype(bf16),
    )


# ---------------------- host-side precomputed attention mask --------------- #
@functools.lru_cache(maxsize=None)
def _attn_bias_np(chunk_seqs, use_pad_mask):
    S = MAX_SEQ_LEN
    CHN = chunk_seqs * S
    r = np.arange(CHN)[:, None]
    c = np.arange(CHN)[None, :]
    attend = (r // S == c // S) & ((c % S) <= (r % S))     # block-diagonal + causal
    if use_pad_mask:
        attend = attend & ((c % S) < (S - 3))              # last 3 keys padded
    return np.where(attend, 0.0, NEG_INF).astype(np.float32)


# ------------------------------ forward ------------------------------------ #
def sinusoidal_time_emb(t, dim):
    half = dim // 2
    freqs = jnp.exp(-math.log(10000.0) * jnp.arange(half, dtype=jnp.float32) / half)
    args = t.astype(jnp.float32)[:, None] * freqs[None, :]
    return jnp.concatenate([jnp.sin(args), jnp.cos(args)], axis=-1)


def dpct_forward(params, clip_img_emb, t, clip_txt_out,
                 block_b=DEFAULT_BLOCK_B, chunk_seqs=CHUNK_SEQS):
    B = clip_img_emb.shape[0]
    S, D = MAX_SEQ_LEN, D_MODEL

    use_pad_mask = clip_txt_out is None
    if use_pad_mask:
        encoded_txt = jnp.zeros((B, S - 4, D), jnp.float32)
        clip_txt_emb = jnp.zeros((B, D), jnp.float32)
    else:
        encoded_txt = clip_txt_out[:, :-1]
        clip_txt_emb = clip_txt_out[:, -1]

    # --- embedder (plain-JAX glue): build the (B, S, D) input sequence ---
    t_emb = sinusoidal_time_emb(t, D)
    seq = jnp.concatenate(
        [encoded_txt,
         clip_txt_emb[:, None, :],
         t_emb[:, None, :],
         clip_img_emb[:, None, :],
         jnp.broadcast_to(params["query_tok"][None, :, :], (B, 1, D))],
        axis=1) + params["pos_emb"][None, :, :]
    seq = seq.astype(jnp.bfloat16)                                   # halve input DMA

    # --- batch blocking: TB sequences per grid step (multiple of chunk_seqs) ---
    TB = min(block_b, pl.cdiv(B, chunk_seqs) * chunk_seqs)
    TB = max(chunk_seqs, (TB // chunk_seqs) * chunk_seqs)
    n_blocks = pl.cdiv(B, TB)
    B_pad = n_blocks * TB
    if B_pad != B:
        seq = jnp.pad(seq, ((0, B_pad - B), (0, 0), (0, 0)))

    CHN = chunk_seqs * S
    attn_bias = jnp.asarray(_attn_bias_np(chunk_seqs, use_pad_mask))

    full = lambda b: (0, 0)
    out = pl.pallas_call(
        dpct_kernel,
        out_shape=jax.ShapeDtypeStruct((B_pad, OUT_LANES), jnp.bfloat16),
        grid_spec=pltpu.PrefetchScalarGridSpec(
            num_scalar_prefetch=0,
            grid=(n_blocks,),
            in_specs=[
                pl.BlockSpec((TB, S, D), lambda b: (b, 0, 0)),       # sequences (bf16)
                pl.BlockSpec((CHN, CHN), full),                      # additive attention bias
                pl.BlockSpec((16, OUT_LANES), full),                 # LN params + biases slab
                pl.BlockSpec((D, D), full),                          # Wq (pre-scaled)
                pl.BlockSpec((D, D), full),                          # Wk
                pl.BlockSpec((D, D), full),                          # Wv
                pl.BlockSpec((D, D), full),                          # Wo
                pl.BlockSpec((D, D_FF), full),                       # W1
                pl.BlockSpec((D_FF, D), full),                       # W2
                pl.BlockSpec((D, OUT_LANES), full),                  # final_proj W (padded)
            ],
            out_specs=pl.BlockSpec((TB, OUT_LANES), lambda b: (b, 0)),
        ),
        compiler_params=pltpu.CompilerParams(
            dimension_semantics=("parallel",)),   # batch-block axis shards across TCs (v7x)
    )(seq, attn_bias, params["vec_slab"], params["wq"], params["wk"],
      params["wv"], params["wo"], params["w1"], params["w2"], params["wf_pad"])

    return out[:B, :2 * D].astype(jnp.float32)


if __name__ == "__main__":
    key = jax.random.PRNGKey(0)
    kp, k1, k2, k3, k4, k5, k6 = jax.random.split(key, 7)
    params = init_params(kp)

    # small demo batch, both branches (text / null-text)
    B = 2
    clip_img_emb = jax.random.normal(k1, (B, D_MODEL), jnp.float32)
    t = jax.random.randint(k2, (B,), 0, 1000)
    # clip_txt_out: [:, :-1] -> encoded_txt (S-4 tokens), [:, -1] -> clip_txt_emb
    clip_txt_out = jax.random.normal(k3, (B, MAX_SEQ_LEN - 3, D_MODEL), jnp.float32)

    out_txt = dpct_forward(params, clip_img_emb, t, clip_txt_out)    # text branch
    out_null = dpct_forward(params, clip_img_emb, t, None)           # null-text branch

    # larger batch exercises the multi-block (TB=128, grid=3, chunked-attn) path
    B2 = 300
    clip_img_emb2 = jax.random.normal(k4, (B2, D_MODEL), jnp.float32)
    t2 = jax.random.randint(k5, (B2,), 0, 1000)
    clip_txt_out2 = jax.random.normal(k6, (B2, MAX_SEQ_LEN - 3, D_MODEL), jnp.float32)
    out_big = dpct_forward(params, clip_img_emb2, t2, clip_txt_out2)

    jax.block_until_ready((out_txt, out_null, out_big))

    assert out_txt.shape == (B, 2 * D_MODEL) and out_null.shape == (B, 2 * D_MODEL)
    assert out_big.shape == (B2, 2 * D_MODEL)
    assert jnp.all(jnp.isfinite(out_txt)) and jnp.all(jnp.isfinite(out_null))
    assert jnp.all(jnp.isfinite(out_big))
    print("KERNEL_OK")
</pallas_src>

<mosaic_0001>
module attributes {stable_mosaic.version = 11 : i64} {
  func.func @dpct_kernel(%arg0: i32, %arg1: memref<32x8x32xbf16, #tpu.memory_space<vmem>>, %arg2: memref<256x256xf32, #tpu.memory_space<vmem>>, %arg3: memref<16x128xf32, #tpu.memory_space<vmem>>, %arg4: memref<32x32xbf16, #tpu.memory_space<vmem>>, %arg5: memref<32x32xbf16, #tpu.memory_space<vmem>>, %arg6: memref<32x32xbf16, #tpu.memory_space<vmem>>, %arg7: memref<32x32xbf16, #tpu.memory_space<vmem>>, %arg8: memref<32x64xbf16, #tpu.memory_space<vmem>>, %arg9: memref<64x32xbf16, #tpu.memory_space<vmem>>, %arg10: memref<32x128xbf16, #tpu.memory_space<vmem>>, %arg11: memref<32x128xbf16, #tpu.memory_space<vmem>>) attributes {dimension_semantics = [#tpu.dimension_semantics<parallel>], iteration_bounds = array<i64: 1>, scalar_prefetch = 0 : i64, scratch_operands = 0 : i64, tpu.core_type = #tpu.core_type<tc>, window_params = [{transform_indices = @transform_0, window_bounds = array<i64: 32, 8, 32>}, {pipeline_mode = #tpu.pipeline_mode<synchronous>, transform_indices = @transform_1, window_bounds = array<i64: 256, 256>}, {pipeline_mode = #tpu.pipeline_mode<synchronous>, transform_indices = @transform_2, window_bounds = array<i64: 16, 128>}, {pipeline_mode = #tpu.pipeline_mode<synchronous>, transform_indices = @transform_3, window_bounds = array<i64: 32, 32>}, {pipeline_mode = #tpu.pipeline_mode<synchronous>, transform_indices = @transform_4, window_bounds = array<i64: 32, 32>}, {pipeline_mode = #tpu.pipeline_mode<synchronous>, transform_indices = @transform_5, window_bounds = array<i64: 32, 32>}, {pipeline_mode = #tpu.pipeline_mode<synchronous>, transform_indices = @transform_6, window_bounds = array<i64: 32, 32>}, {pipeline_mode = #tpu.pipeline_mode<synchronous>, transform_indices = @transform_7, window_bounds = array<i64: 32, 64>}, {pipeline_mode = #tpu.pipeline_mode<synchronous>, transform_indices = @transform_8, window_bounds = array<i64: 64, 32>}, {pipeline_mode = #tpu.pipeline_mode<synchronous>, transform_indices = @transform_9, window_bounds = array<i64: 32, 128>}, {transform_indices = @transform_10, window_bounds = array<i64: 32, 128>}]} {
    %c0 = arith.constant 0 : index
    %c0_0 = arith.constant 0 : index
    %c0_1 = arith.constant 0 : index
    %0 = vector.load %arg1[%c0, %c0_0, %c0_1] : memref<32x8x32xbf16, #tpu.memory_space<vmem>>, vector<32x8x32xbf16>
    %1 = arith.extf %0 : vector<32x8x32xbf16> to vector<32x8x32xf32>
    %2 = vector.shape_cast %1 : vector<32x8x32xf32> to vector<256x32xf32>
    %c0_2 = arith.constant 0 : index
    %c0_3 = arith.constant 0 : index
    %3 = vector.load %arg3[%c0_2, %c0_3] : memref<16x128xf32, #tpu.memory_space<vmem>>, vector<1x32xf32>
    %c1 = arith.constant 1 : index
    %c0_4 = arith.constant 0 : index
    %4 = vector.load %arg3[%c1, %c0_4] : memref<16x128xf32, #tpu.memory_space<vmem>>, vector<1x32xf32>
    %c2 = arith.constant 2 : index
    %c0_5 = arith.constant 0 : index
    %5 = vector.load %arg3[%c2, %c0_5] : memref<16x128xf32, #tpu.memory_space<vmem>>, vector<1x32xf32>
    %c3 = arith.constant 3 : index
    %c0_6 = arith.constant 0 : index
    %6 = vector.load %arg3[%c3, %c0_6] : memref<16x128xf32, #tpu.memory_space<vmem>>, vector<1x32xf32>
    %c4 = arith.constant 4 : index
    %c0_7 = arith.constant 0 : index
    %7 = vector.load %arg3[%c4, %c0_7] : memref<16x128xf32, #tpu.memory_space<vmem>>, vector<1x32xf32>
    %c5 = arith.constant 5 : index
    %c0_8 = arith.constant 0 : index
    %8 = vector.load %arg3[%c5, %c0_8] : memref<16x128xf32, #tpu.memory_space<vmem>>, vector<1x32xf32>
    %c6 = arith.constant 6 : index
    %c0_9 = arith.constant 0 : index
    %9 = vector.load %arg3[%c6, %c0_9] : memref<16x128xf32, #tpu.memory_space<vmem>>, vector<1x32xf32>
    %c7 = arith.constant 7 : index
    %c0_10 = arith.constant 0 : index
    %10 = vector.load %arg3[%c7, %c0_10] : memref<16x128xf32, #tpu.memory_space<vmem>>, vector<1x32xf32>
    %c8 = arith.constant 8 : index
    %c0_11 = arith.constant 0 : index
    %11 = vector.load %arg3[%c8, %c0_11] : memref<16x128xf32, #tpu.memory_space<vmem>>, vector<1x64xf32>
    %c9 = arith.constant 9 : index
    %c0_12 = arith.constant 0 : index
    %12 = vector.load %arg3[%c9, %c0_12] : memref<16x128xf32, #tpu.memory_space<vmem>>, vector<1x32xf32>
    %c10 = arith.constant 10 : index
    %c0_13 = arith.constant 0 : index
    %13 = vector.load %arg3[%c10, %c0_13] : memref<16x128xf32, #tpu.memory_space<vmem>>, vector<1x128xf32>
    %cst = arith.constant dense<0.000000e+00> : vector<256xf32>
    %14 = vector.multi_reduction <add>, %2, %cst [1] : vector<256x32xf32> to vector<256xf32>
    %15 = vector.shape_cast %14 : vector<256xf32> to vector<256x1xf32>
    %cst_14 = arith.constant 3.200000e+01 : f32
    %16 = vector.broadcast %cst_14 : f32 to vector<256x1xf32>
    %17 = arith.divf %15, %16 : vector<256x1xf32>
    %18 = vector.broadcast %17 : vector<256x1xf32> to vector<256x32xf32>
    %19 = arith.subf %2, %18 : vector<256x32xf32>
    %20 = arith.mulf %19, %19 : vector<256x32xf32>
    %cst_15 = arith.constant dense<0.000000e+00> : vector<256xf32>
    %21 = vector.multi_reduction <add>, %20, %cst_15 [1] : vector<256x32xf32> to vector<256xf32>
    %22 = vector.shape_cast %21 : vector<256xf32> to vector<256x1xf32>
    %cst_16 = arith.constant 3.200000e+01 : f32
    %23 = vector.broadcast %cst_16 : f32 to vector<256x1xf32>
    %24 = arith.divf %22, %23 : vector<256x1xf32>
    %25 = vector.broadcast %17 : vector<256x1xf32> to vector<256x32xf32>
    %26 = arith.subf %2, %25 : vector<256x32xf32>
    %cst_17 = arith.constant 9.99999974E-6 : f32
    %27 = vector.broadcast %cst_17 : f32 to vector<256x1xf32>
    %28 = arith.addf %24, %27 : vector<256x1xf32>
    %29 = math.rsqrt %28 : vector<256x1xf32>
    %30 = vector.broadcast %29 : vector<256x1xf32> to vector<256x32xf32>
    %31 = arith.mulf %26, %30 : vector<256x32xf32>
    %32 = vector.broadcast %3 : vector<1x32xf32> to vector<256x32xf32>
    %33 = arith.mulf %31, %32 : vector<256x32xf32>
    %34 = vector.broadcast %4 : vector<1x32xf32> to vector<256x32xf32>
    %35 = arith.addf %33, %34 : vector<256x32xf32>
    %36 = arith.truncf %35 : vector<256x32xf32> to vector<256x32xbf16>
    %c0_18 = arith.constant 0 : index
    %c0_19 = arith.constant 0 : index
    %37 = vector.load %arg4[%c0_18, %c0_19] : memref<32x32xbf16, #tpu.memory_space<vmem>>, vector<32x32xbf16>
    %cst_20 = arith.constant dense<0.000000e+00> : vector<256x32xf32>
    %38 = tpu.matmul %36, %37, %cst_20 {dimension_numbers = #tpu.dot_dimension_numbers<[1], [0], [0], [1], [0, 0, 1, 1], [], []>} : vector<256x32xbf16>, vector<32x32xbf16>, vector<256x32xf32> -> vector<256x32xf32>
    %39 = vector.broadcast %7 : vector<1x32xf32> to vector<256x32xf32>
    %40 = arith.addf %38, %39 : vector<256x32xf32>
    %41 = arith.truncf %40 : vector<256x32xf32> to vector<256x32xbf16>
    %c0_21 = arith.constant 0 : index
    %c0_22 = arith.constant 0 : index
    %42 = vector.load %arg5[%c0_21, %c0_22] : memref<32x32xbf16, #tpu.memory_space<vmem>>, vector<32x32xbf16>
    %cst_23 = arith.constant dense<0.000000e+00> : vector<256x32xf32>
    %43 = tpu.matmul %36, %42, %cst_23 {dimension_numbers = #tpu.dot_dimension_numbers<[1], [0], [0], [1], [0, 0, 1, 1], [], []>} : vector<256x32xbf16>, vector<32x32xbf16>, vector<256x32xf32> -> vector<256x32xf32>
    %44 = vector.broadcast %8 : vector<1x32xf32> to vector<256x32xf32>
    %45 = arith.addf %43, %44 : vector<256x32xf32>
    %46 = arith.truncf %45 : vector<256x32xf32> to vector<256x32xbf16>
    %c0_24 = arith.constant 0 : index
    %c0_25 = arith.constant 0 : index
    %47 = vector.load %arg6[%c0_24, %c0_25] : memref<32x32xbf16, #tpu.memory_space<vmem>>, vector<32x32xbf16>
    %cst_26 = arith.constant dense<0.000000e+00> : vector<256x32xf32>
    %48 = tpu.matmul %36, %47, %cst_26 {dimension_numbers = #tpu.dot_dimension_numbers<[1], [0], [0], [1], [0, 0, 1, 1], [], []>} : vector<256x32xbf16>, vector<32x32xbf16>, vector<256x32xf32> -> vector<256x32xf32>
    %49 = vector.broadcast %9 : vector<1x32xf32> to vector<256x32xf32>
    %50 = arith.addf %48, %49 : vector<256x32xf32>
    %51 = arith.truncf %50 : vector<256x32xf32> to vector<256x32xbf16>
    %c0_27 = arith.constant 0 : index
    %c0_28 = arith.constant 0 : index
    %52 = vector.load %arg2[%c0_27, %c0_28] : memref<256x256xf32, #tpu.memory_space<vmem>>, vector<256x256xf32>
    %cst_29 = arith.constant dense<0.000000e+00> : vector<256x256xf32>
    %53 = tpu.matmul %41, %46, %cst_29 {dimension_numbers = #tpu.dot_dimension_numbers<[1], [1], [0], [0], [0, 0, 1, 0], [], []>} : vector<256x32xbf16>, vector<256x32xbf16>, vector<256x256xf32> -> vector<256x256xf32>
    %54 = arith.addf %53, %52 : vector<256x256xf32>
    %cst_30 = arith.constant dense<0xFF800000> : vector<256xf32>
    %55 = vector.multi_reduction <maximumf>, %54, %cst_30 [1] : vector<256x256xf32> to vector<256xf32>
    %56 = vector.shape_cast %55 : vector<256xf32> to vector<256x1xf32>
    %57 = vector.broadcast %56 : vector<256x1xf32> to vector<256x256xf32>
    %58 = arith.subf %54, %57 : vector<256x256xf32>
    %59 = math.exp %58 : vector<256x256xf32>
    %cst_31 = arith.constant dense<0.000000e+00> : vector<256xf32>
    %60 = vector.multi_reduction <add>, %59, %cst_31 [1] : vector<256x256xf32> to vector<256xf32>
    %61 = vector.shape_cast %60 : vector<256xf32> to vector<256x1xf32>
    %62 = tpu.reciprocal %61 {approx = true} : vector<256x1xf32> -> vector<256x1xf32>
    %63 = vector.broadcast %62 : vector<256x1xf32> to vector<256x256xf32>
    %64 = arith.mulf %59, %63 : vector<256x256xf32>
    %65 = arith.truncf %64 : vector<256x256xf32> to vector<256x256xbf16>
    %cst_32 = arith.constant dense<0.000000e+00> : vector<256x32xf32>
    %66 = tpu.matmul %65, %51, %cst_32 {dimension_numbers = #tpu.dot_dimension_numbers<[1], [0], [0], [1], [0, 0, 1, 1], [], []>} : vector<256x256xbf16>, vector<256x32xbf16>, vector<256x32xf32> -> vector<256x32xf32>
    %67 = arith.truncf %66 : vector<256x32xf32> to vector<256x32xbf16>
    %c0_33 = arith.constant 0 : index
    %c0_34 = arith.constant 0 : index
    %68 = vector.load %arg7[%c0_33, %c0_34] : memref<32x32xbf16, #tpu.memory_space<vmem>>, vector<32x32xbf16>
    %cst_35 = arith.constant dense<0.000000e+00> : vector<256x32xf32>
    %69 = tpu.matmul %67, %68, %cst_35 {dimension_numbers = #tpu.dot_dimension_numbers<[1], [0], [0], [1], [0, 0, 1, 1], [], []>} : vector<256x32xbf16>, vector<32x32xbf16>, vector<256x32xf32> -> vector<256x32xf32>
    %70 = vector.broadcast %10 : vector<1x32xf32> to vector<256x32xf32>
    %71 = arith.addf %69, %70 : vector<256x32xf32>
    %72 = arith.addf %2, %71 : vector<256x32xf32>
    %cst_36 = arith.constant dense<0.000000e+00> : vector<256xf32>
    %73 = vector.multi_reduction <add>, %72, %cst_36 [1] : vector<256x32xf32> to vector<256xf32>
    %74 = vector.shape_cast %73 : vector<256xf32> to vector<256x1xf32>
    %cst_37 = arith.constant 3.200000e+01 : f32
    %75 = vector.broadcast %cst_37 : f32 to vector<256x1xf32>
    %76 = arith.divf %74, %75 : vector<256x1xf32>
    %77 = vector.broadcast %76 : vector<256x1xf32> to vector<256x32xf32>
    %78 = arith.subf %72, %77 : vector<256x32xf32>
    %79 = arith.mulf %78, %78 : vector<256x32xf32>
    %cst_38 = arith.constant dense<0.000000e+00> : vector<256xf32>
    %80 = vector.multi_reduction <add>, %79, %cst_38 [1] : vector<256x32xf32> to vector<256xf32>
    %81 = vector.shape_cast %80 : vector<256xf32> to vector<256x1xf32>
    %cst_39 = arith.constant 3.200000e+01 : f32
    %82 = vector.broadcast %cst_39 : f32 to vector<256x1xf32>
    %83 = arith.divf %81, %82 : vector<256x1xf32>
    %84 = vector.broadcast %76 : vector<256x1xf32> to vector<256x32xf32>
    %85 = arith.subf %72, %84 : vector<256x32xf32>
    %cst_40 = arith.constant 9.99999974E-6 : f32
    %86 = vector.broadcast %cst_40 : f32 to vector<256x1xf32>
    %87 = arith.addf %83, %86 : vector<256x1xf32>
    %88 = math.rsqrt %87 : vector<256x1xf32>
    %89 = vector.broadcast %88 : vector<256x1xf32> to vector<256x32xf32>
    %90 = arith.mulf %85, %89 : vector<256x32xf32>
    %91 = vector.broadcast %5 : vector<1x32xf32> to vector<256x32xf32>
    %92 = arith.mulf %90, %91 : vector<256x32xf32>
    %93 = vector.broadcast %6 : vector<1x32xf32> to vector<256x32xf32>
    %94 = arith.addf %92, %93 : vector<256x32xf32>
    %95 = arith.truncf %94 : vector<256x32xf32> to vector<256x32xbf16>
    %c0_41 = arith.constant 0 : index
    %c0_42 = arith.constant 0 : index
    %96 = vector.load %arg8[%c0_41, %c0_42] : memref<32x64xbf16, #tpu.memory_space<vmem>>, vector<32x64xbf16>
    %cst_43 = arith.constant dense<0.000000e+00> : vector<256x64xf32>
    %97 = tpu.matmul %95, %96, %cst_43 {dimension_numbers = #tpu.dot_dimension_numbers<[1], [0], [0], [1], [0, 0, 1, 1], [], []>} : vector<256x32xbf16>, vector<32x64xbf16>, vector<256x64xf32> -> vector<256x64xf32>
    %98 = vector.broadcast %11 : vector<1x64xf32> to vector<256x64xf32>
    %99 = arith.addf %97, %98 : vector<256x64xf32>
    %100 = arith.mulf %99, %99 : vector<256x64xf32>
    %101 = arith.mulf %99, %100 : vector<256x64xf32>
    %cst_44 = arith.constant 4.471500e-02 : f32
    %102 = vector.broadcast %cst_44 : f32 to vector<256x64xf32>
    %103 = arith.mulf %102, %101 : vector<256x64xf32>
    %104 = arith.addf %99, %103 : vector<256x64xf32>
    %cst_45 = arith.constant 0.797884583 : f32
    %105 = vector.broadcast %cst_45 : f32 to vector<256x64xf32>
    %106 = arith.mulf %105, %104 : vector<256x64xf32>
    %107 = math.tanh %106 : vector<256x64xf32>
    %cst_46 = arith.constant 1.000000e+00 : f32
    %108 = vector.broadcast %cst_46 : f32 to vector<256x64xf32>
    %109 = arith.addf %108, %107 : vector<256x64xf32>
    %cst_47 = arith.constant 5.000000e-01 : f32
    %110 = vector.broadcast %cst_47 : f32 to vector<256x64xf32>
    %111 = arith.mulf %110, %109 : vector<256x64xf32>
    %112 = arith.mulf %99, %111 : vector<256x64xf32>
    %113 = arith.truncf %112 : vector<256x64xf32> to vector<256x64xbf16>
    %c0_48 = arith.constant 0 : index
    %c0_49 = arith.constant 0 : index
    %114 = vector.load %arg9[%c0_48, %c0_49] : memref<64x32xbf16, #tpu.memory_space<vmem>>, vector<64x32xbf16>
    %cst_50 = arith.constant dense<0.000000e+00> : vector<256x32xf32>
    %115 = tpu.matmul %113, %114, %cst_50 {dimension_numbers = #tpu.dot_dimension_numbers<[1], [0], [0], [1], [0, 0, 1, 1], [], []>} : vector<256x64xbf16>, vector<64x32xbf16>, vector<256x32xf32> -> vector<256x32xf32>
    %116 = vector.broadcast %12 : vector<1x32xf32> to vector<256x32xf32>
    %117 = arith.addf %115, %116 : vector<256x32xf32>
    %118 = arith.addf %72, %117 : vector<256x32xf32>
    %119 = vector.shape_cast %118 : vector<256x32xf32> to vector<32x8x32xf32>
    %120 = vector.extract_strided_slice %119 {offsets = [0, 7, 0], sizes = [32, 1, 32], strides = [1, 1, 1]} : vector<32x8x32xf32> to vector<32x1x32xf32>
    %121 = vector.shape_cast %120 : vector<32x1x32xf32> to vector<32x32xf32>
    %122 = arith.truncf %121 : vector<32x32xf32> to vector<32x32xbf16>
    %c0_51 = arith.constant 0 : index
    %c0_52 = arith.constant 0 : index
    %123 = vector.load %arg10[%c0_51, %c0_52] : memref<32x128xbf16, #tpu.memory_space<vmem>>, vector<32x128xbf16>
    %cst_53 = arith.constant dense<0.000000e+00> : vector<32x128xf32>
    %124 = tpu.matmul %122, %123, %cst_53 {dimension_numbers = #tpu.dot_dimension_numbers<[1], [0], [0], [1], [0, 0, 1, 1], [], []>} : vector<32x32xbf16>, vector<32x128xbf16>, vector<32x128xf32> -> vector<32x128xf32>
    %125 = vector.broadcast %13 : vector<1x128xf32> to vector<32x128xf32>
    %126 = arith.addf %124, %125 : vector<32x128xf32>
    %127 = arith.truncf %126 : vector<32x128xf32> to vector<32x128xbf16>
    %c0_54 = arith.constant 0 : index
    %c0_55 = arith.constant 0 : index
    %128 = vector.load %arg11[%c0_54, %c0_55] : memref<32x128xbf16, #tpu.memory_space<vmem>>, vector<32x128xbf16>
    tpu.vector_store %arg11[%c0_54, %c0_55], %127 {strides = array<i32>} : memref<32x128xbf16, #tpu.memory_space<vmem>>, vector<32x128xbf16>,
    return
  }
  func.func @transform_0(%arg0: i32) -> (i32, i32, i32) {
    %c0_i32 = arith.constant 0 : i32
    %c0_i32_0 = arith.constant 0 : i32
    %c0_i32_1 = arith.constant 0 : i32
    return %arg0, %c0_i32, %c0_i32_0 : i32, i32, i32
  }
  func.func @transform_1(%arg0: i32) -> (i32, i32) {
    %c0_i32 = arith.constant 0 : i32
    %c0_i32_0 = arith.constant 0 : i32
    %c0_i32_1 = arith.constant 0 : i32
    return %c0_i32, %c0_i32_0 : i32, i32
  }
  func.func @transform_2(%arg0: i32) -> (i32, i32) {
    %c0_i32 = arith.constant 0 : i32
    %c0_i32_0 = arith.constant 0 : i32
    %c0_i32_1 = arith.constant 0 : i32
    return %c0_i32, %c0_i32_0 : i32, i32
  }
  func.func @transform_3(%arg0: i32) -> (i32, i32) {
    %c0_i32 = arith.constant 0 : i32
    %c0_i32_0 = arith.constant 0 : i32
    %c0_i32_1 = arith.constant 0 : i32
    return %c0_i32, %c0_i32_0 : i32, i32
  }
  func.func @transform_4(%arg0: i32) -> (i32, i32) {
    %c0_i32 = arith.constant 0 : i32
    %c0_i32_0 = arith.constant 0 : i32
    %c0_i32_1 = arith.constant 0 : i32
    return %c0_i32, %c0_i32_0 : i32, i32
  }
  func.func @transform_5(%arg0: i32) -> (i32, i32) {
    %c0_i32 = arith.constant 0 : i32
    %c0_i32_0 = arith.constant 0 : i32
    %c0_i32_1 = arith.constant 0 : i32
    return %c0_i32, %c0_i32_0 : i32, i32
  }
  func.func @transform_6(%arg0: i32) -> (i32, i32) {
    %c0_i32 = arith.constant 0 : i32
    %c0_i32_0 = arith.constant 0 : i32
    %c0_i32_1 = arith.constant 0 : i32
    return %c0_i32, %c0_i32_0 : i32, i32
  }
  func.func @transform_7(%arg0: i32) -> (i32, i32) {
    %c0_i32 = arith.constant 0 : i32
    %c0_i32_0 = arith.constant 0 : i32
    %c0_i32_1 = arith.constant 0 : i32
    return %c0_i32, %c0_i32_0 : i32, i32
  }
  func.func @transform_8(%arg0: i32) -> (i32, i32) {
    %c0_i32 = arith.constant 0 : i32
    %c0_i32_0 = arith.constant 0 : i32
    %c0_i32_1 = arith.constant 0 : i32
    return %c0_i32, %c0_i32_0 : i32, i32
  }
  func.func @transform_9(%arg0: i32) -> (i32, i32) {
    %c0_i32 = arith.constant 0 : i32
    %c0_i32_0 = arith.constant 0 : i32
    %c0_i32_1 = arith.constant 0 : i32
    return %c0_i32, %c0_i32_0 : i32, i32
  }
  func.func @transform_10(%arg0: i32) -> (i32, i32) {
    %c0_i32 = arith.constant 0 : i32
    %c0_i32_0 = arith.constant 0 : i32
    return %arg0, %c0_i32 : i32, i32
  }
}

</mosaic_0001>

<llo_original>
// kernel: tpu_custom_call.1
$region0: #{tpu_custom_call.1}
  #allocation0 [shape = 'u32[]', space=smem, size = 0x4, offset = 0x4, fixed_abs, tag = 'smem constant byte address 0x4 - core index']
  #allocation1 [shape = 'u32[144,128]{1,0:T(1,128)}', space=vmem, size = 0x12000, scoped, tag = 'internal scratch']
  %s0 = inlined_call_operand.hbm [shape: bf16[32,8,32], index: 0, kind: input, shape index: {}]
  %s1 = inlined_call_operand.hbm [shape: f32[256,256], index: 1, kind: input, shape index: {}]
  %s2 = inlined_call_operand.vmem [shape: f32[16,128], index: 2, kind: input, shape index: {}]
  %s3 = inlined_call_operand.vmem [shape: bf16[32,32], index: 3, kind: input, shape index: {}]
  %s4 = inlined_call_operand.vmem [shape: bf16[32,32], index: 4, kind: input, shape index: {}]
  %s5 = inlined_call_operand.hbm [shape: bf16[32,32], index: 5, kind: input, shape index: {}]
  %s6 = inlined_call_operand.hbm [shape: bf16[32,32], index: 6, kind: input, shape index: {}]
  %s7 = inlined_call_operand.hbm [shape: bf16[32,64], index: 7, kind: input, shape index: {}]
  %s8 = inlined_call_operand.vmem [shape: bf16[64,32], index: 8, kind: input, shape index: {}]
  %s9 = inlined_call_operand.vmem [shape: bf16[32,128], index: 9, kind: input, shape index: {}]
  %s10 = inlined_call_operand.hbm [shape: bf16[32,128], index: 10, kind: output, shape index: {}]
  %s11 = sld [smem:[#allocation0]]
  $region70: #{tpu_custom_call.1} parent=0
    _
  %s13 = ssub.s32 1, %s11
  %s14 = scalar_select 0, %s13, %s11
  $region1: #{tpu_custom_call.1} parent=0
    #allocation2 [shape = 'u8[65536]{0}', space=vmem, size = 0x10000, scoped, tag = 'input window, operand 0, single buffered']
    #allocation3 [shape = 's32[1]{0}', space=sflag, size = 0x4, scoped, tag = 'scoped memory for tpu_custom_call.1']
    #allocation4 [shape = 's32[1]{0}', space=sflag, size = 0x4, scoped, tag = 'scoped memory for tpu_custom_call.1']
    #allocation5 [shape = 'u8[262144]{0}', space=vmem, size = 0x40000, scoped, tag = 'input window, operand 1, single buffered']
    #allocation6 [shape = 's32[1]{0}', space=sflag, size = 0x4, scoped, tag = 'scoped memory for tpu_custom_call.1']
    #allocation7 [shape = 'u8[8192]{0}', space=vmem, size = 0x2000, scoped, tag = 'input window, operand 5, single buffered']
    #allocation8 [shape = 'u8[8192]{0}', space=vmem, size = 0x2000, scoped, tag = 'input window, operand 6, single buffered']
    #allocation9 [shape = 's32[1]{0}', space=sflag, size = 0x4, scoped, tag = 'scoped memory for tpu_custom_call.1']
    #allocation10 [shape = 'u8[8192]{0}', space=vmem, size = 0x2000, scoped, tag = 'input window, operand 7, single buffered']
    #allocation11 [shape = 'u8[8192]{0}', space=vmem, size = 0x2000, scoped, tag = 'output window, operand 0, single buffered']
    %15 = vsyncpa [#allocation3], 0
    %16 = vsyncpa [#allocation6], 0
    %17 = vsyncpa [#allocation9], 0
    %18 = vsyncpa [#allocation4], 0
    // Predicated region
    $region2: #{tpu_custom_call.1} parent=1 // pred_check
      _
    $region3: #{tpu_custom_call.1} parent=1 // pred_check_branch
      %20 = sbr.rel (0) target = $region5
    $region4: #{tpu_custom_call.1} parent=1 // pred_region
      %s22 = ssub.s32 2048, 2048
      %23 = vsyncadd [#allocation3], %s22
      %s24 = sshll.u32 [#allocation2], 4
      %s25 = int_to_ptr.vmem [resolvable:$true] %s24
      %30 = dma.hbm_to_vmem [thread:$0]  %s0, 2048, %s25, [#allocation3], 64, 64, 4
    $region5: #{tpu_custom_call.1} parent=1 // pred_fallthru
      _
    // Predicated region
    $region6: #{tpu_custom_call.1} parent=1 // pred_check
      _
    $region7: #{tpu_custom_call.1} parent=1 // pred_check_branch
      %32 = sbr.rel (0) target = $region9
    $region8: #{tpu_custom_call.1} parent=1 // pred_region
      %s34 = ssub.s32 8192, 8192
      %35 = vsyncadd [#allocation6], %s34
      %s36 = sshll.u32 [#allocation5], 4
      %s37 = int_to_ptr.vmem [resolvable:$true] %s36
      %42 = dma.hbm_to_vmem [thread:$0]  %s1, 8192, %s37, [#allocation6], 256, 256, 16
    $region9: #{tpu_custom_call.1} parent=1 // pred_fallthru
      _
    // Predicated region
    $region10: #{tpu_custom_call.1} parent=1 // pred_check
      _
    $region11: #{tpu_custom_call.1} parent=1 // pred_check_branch
      %44 = sbr.rel (0) target = $region13
    $region12: #{tpu_custom_call.1} parent=1 // pred_region
      _
    $region13: #{tpu_custom_call.1} parent=1 // pred_fallthru
      _
    // Predicated region
    $region14: #{tpu_custom_call.1} parent=1 // pred_check
      _
    $region15: #{tpu_custom_call.1} parent=1 // pred_check_branch
      %46 = sbr.rel (0) target = $region17
    $region16: #{tpu_custom_call.1} parent=1 // pred_region
      _
    $region17: #{tpu_custom_call.1} parent=1 // pred_fallthru
      _
    // Predicated region
    $region18: #{tpu_custom_call.1} parent=1 // pred_check
      _
    $region19: #{tpu_custom_call.1} parent=1 // pred_check_branch
      %48 = sbr.rel (0) target = $region21
    $region20: #{tpu_custom_call.1} parent=1 // pred_region
      _
    $region21: #{tpu_custom_call.1} parent=1 // pred_fallthru
      _
    // Predicated region
    $region22: #{tpu_custom_call.1} parent=1 // pred_check
      _
    $region23: #{tpu_custom_call.1} parent=1 // pred_check_branch
      %50 = sbr.rel (0) target = $region25
    $region24: #{tpu_custom_call.1} parent=1 // pred_region
      %s52 = ssub.s32 256, 256
      %53 = vsyncadd [#allocation6], %s52
      %s54 = sshll.u32 [#allocation7], 4
      %s55 = int_to_ptr.vmem [resolvable:$true] %s54
      %60 = dma.hbm_to_vmem [thread:$0]  %s5, 256, %s55, [#allocation6], 64, 64, 4
    $region25: #{tpu_custom_call.1} parent=1 // pred_fallthru
      _
    // Predicated region
    $region26: #{tpu_custom_call.1} parent=1 // pred_check
      _
    $region27: #{tpu_custom_call.1} parent=1 // pred_check_branch
      %62 = sbr.rel (0) target = $region29
    $region28: #{tpu_custom_call.1} parent=1 // pred_region
      %s64 = ssub.s32 256, 256
      %65 = vsyncadd [#allocation9], %s64
      %s66 = sshll.u32 [#allocation8], 4
      %s67 = int_to_ptr.vmem [resolvable:$true] %s66
      %72 = dma.hbm_to_vmem [thread:$0]  %s6, 256, %s67, [#allocation9], 64, 64, 4
    $region29: #{tpu_custom_call.1} parent=1 // pred_fallthru
      _
    // Predicated region
    $region30: #{tpu_custom_call.1} parent=1 // pred_check
      _
    $region31: #{tpu_custom_call.1} parent=1 // pred_check_branch
      %74 = sbr.rel (0) target = $region33
    $region32: #{tpu_custom_call.1} parent=1 // pred_region
      %s76 = ssub.s32 256, 256
      %77 = vsyncadd [#allocation9], %s76
      %s78 = sshll.u32 [#allocation10], 4
      %s79 = int_to_ptr.vmem [resolvable:$true] %s78
      %84 = dma.hbm_to_vmem [thread:$0]  %s7, 256, %s79, [#allocation9], 64, 64, 4
    $region33: #{tpu_custom_call.1} parent=1 // pred_fallthru
      _
    // Predicated region
    $region34: #{tpu_custom_call.1} parent=1 // pred_check
      _
    $region35: #{tpu_custom_call.1} parent=1 // pred_check_branch
      %86 = sbr.rel (0) target = $region37
    $region36: #{tpu_custom_call.1} parent=1 // pred_region
      _
    $region37: #{tpu_custom_call.1} parent=1 // pred_fallthru
      _
    // Predicated region
    $region38: #{tpu_custom_call.1} parent=1 // pred_check
      _
    $region39: #{tpu_custom_call.1} parent=1 // pred_check_branch
      %88 = sbr.rel (0) target = $region41
    $region40: #{tpu_custom_call.1} parent=1 // pred_region
      _
    $region41: #{tpu_custom_call.1} parent=1 // pred_fallthru
      _
    // Predicated region
    $region42: #{tpu_custom_call.1} parent=1 // pred_check
      _
    $region43: #{tpu_custom_call.1} parent=1 // pred_check_branch
      %90 = sbr.rel (0) target = $region45
    $region44: #{tpu_custom_call.1} parent=1 // pred_region
      %91 = dma.done [#allocation3], 2048
    $region45: #{tpu_custom_call.1} parent=1 // pred_fallthru
      _
    // Predicated region
    $region46: #{tpu_custom_call.1} parent=1 // pred_check
      _
    $region47: #{tpu_custom_call.1} parent=1 // pred_check_branch
      %93 = sbr.rel (0) target = $region49
    $region48: #{tpu_custom_call.1} parent=1 // pred_region
      %94 = dma.done [#allocation6], 8192
    $region49: #{tpu_custom_call.1} parent=1 // pred_fallthru
      _
    // Predicated region
    $region50: #{tpu_custom_call.1} parent=1 // pred_check
      _
    $region51: #{tpu_custom_call.1} parent=1 // pred_check_branch
      %96 = sbr.rel (0) target = $region53
    $region52: #{tpu_custom_call.1} parent=1 // pred_region
      %97 = dma.done [#allocation6], 256
    $region53: #{tpu_custom_call.1} parent=1 // pred_fallthru
      _
    // Predicated region
    $region54: #{tpu_custom_call.1} parent=1 // pred_check
      _
    $region55: #{tpu_custom_call.1} parent=1 // pred_check_branch
      %99 = sbr.rel (0) target = $region57
    $region56: #{tpu_custom_call.1} parent=1 // pred_region
      %100 = dma.done [#allocation9], 256
    $region57: #{tpu_custom_call.1} parent=1 // pred_fallthru
      _
    // Predicated region
    $region58: #{tpu_custom_call.1} parent=1 // pred_check
      _
    $region59: #{tpu_custom_call.1} parent=1 // pred_check_branch
      %102 = sbr.rel (0) target = $region61
    $region60: #{tpu_custom_call.1} parent=1 // pred_region
      %103 = dma.done [#allocation9], 256
    $region61: #{tpu_custom_call.1} parent=1 // pred_fallthru
      _
    %v105 = vld [vmem:[#allocation2] sm:$0xf]
    %v106 = vld [vmem:[#allocation2 + $0x4] sm:$0xf]
    %v107 = vld [vmem:[#allocation2 + $0x8] sm:$0xf]
    %v108 = vld [vmem:[#allocation2 + $0xc] sm:$0xf]
    %v109 = vld [vmem:[#allocation2 + $0x10] sm:$0xf]
    %v110 = vld [vmem:[#allocation2 + $0x14] sm:$0xf]
    %v111 = vld [vmem:[#allocation2 + $0x18] sm:$0xf]
    %v112 = vld [vmem:[#allocation2 + $0x1c] sm:$0xf]
    %v113 = vld [vmem:[#allocation2 + $0x20] sm:$0xf]
    %v114 = vld [vmem:[#allocation2 + $0x24] sm:$0xf]
    %v115 = vld [vmem:[#allocation2 + $0x28] sm:$0xf]
    %v116 = vld [vmem:[#allocation2 + $0x2c] sm:$0xf]
    %v117 = vld [vmem:[#allocation2 + $0x30] sm:$0xf]
    %v118 = vld [vmem:[#allocation2 + $0x34] sm:$0xf]
    %v119 = vld [vmem:[#allocation2 + $0x38] sm:$0xf]
    %v120 = vld [vmem:[#allocation2 + $0x3c] sm:$0xf]
    %v121 = vld [vmem:[#allocation2 + $0x40] sm:$0xf]
    %v122 = vld [vmem:[#allocation2 + $0x44] sm:$0xf]
    %v123 = vld [vmem:[#allocation2 + $0x48] sm:$0xf]
    %v124 = vld [vmem:[#allocation2 + $0x4c] sm:$0xf]
    %v125 = vld [vmem:[#allocation2 + $0x50] sm:$0xf]
    %v126 = vld [vmem:[#allocation2 + $0x54] sm:$0xf]
    %v127 = vld [vmem:[#allocation2 + $0x58] sm:$0xf]
    %v128 = vld [vmem:[#allocation2 + $0x5c] sm:$0xf]
    %v129 = vld [vmem:[#allocation2 + $0x60] sm:$0xf]
    %v130 = vld [vmem:[#allocation2 + $0x64] sm:$0xf]
    %v131 = vld [vmem:[#allocation2 + $0x68] sm:$0xf]
    %v132 = vld [vmem:[#allocation2 + $0x6c] sm:$0xf]
    %v133 = vld [vmem:[#allocation2 + $0x70] sm:$0xf]
    %v134 = vld [vmem:[#allocation2 + $0x74] sm:$0xf]
    %v135 = vld [vmem:[#allocation2 + $0x78] sm:$0xf]
    %v136 = vld [vmem:[#allocation2 + $0x7c] sm:$0xf]
    %v137 = vunpack.c.l.bf16 %v105
    %v138 = vunpack.c.l.bf16 %v106
    %v139 = vunpack.c.l.bf16 %v107
    %v140 = vunpack.c.l.bf16 %v108
    %v141 = vunpack.c.l.bf16 %v109
    %v142 = vunpack.c.l.bf16 %v110
    %v143 = vunpack.c.l.bf16 %v111
    %v144 = vunpack.c.l.bf16 %v112
    %v145 = vunpack.c.l.bf16 %v113
    %v146 = vunpack.c.l.bf16 %v114
    %v147 = vunpack.c.l.bf16 %v115
    %v148 = vunpack.c.l.bf16 %v116
    %v149 = vunpack.c.l.bf16 %v117
    %v150 = vunpack.c.l.bf16 %v118
    %v151 = vunpack.c.l.bf16 %v119
    %v152 = vunpack.c.l.bf16 %v120
    %v153 = vunpack.c.l.bf16 %v121
    %v154 = vunpack.c.l.bf16 %v122
    %v155 = vunpack.c.l.bf16 %v123
    %v156 = vunpack.c.l.bf16 %v124
    %v157 = vunpack.c.l.bf16 %v125
    %v158 = vunpack.c.l.bf16 %v126
    %v159 = vunpack.c.l.bf16 %v127
    %v160 = vunpack.c.l.bf16 %v128
    %v161 = vunpack.c.l.bf16 %v129
    %v162 = vunpack.c.l.bf16 %v130
    %v163 = vunpack.c.l.bf16 %v131
    %v164 = vunpack.c.l.bf16 %v132
    %v165 = vunpack.c.l.bf16 %v133
    %v166 = vunpack.c.l.bf16 %v134
    %v167 = vunpack.c.l.bf16 %v135
    %v168 = vunpack.c.l.bf16 %v136
    %v169 = vld [vmem:[%s2] sm:$0x1]
    %v170 = vld [vmem:[%s2 + $0x1] sm:$0x1]
    %v171 = vld [vmem:[%s2 + $0x2] sm:$0x1]
    %v172 = vld [vmem:[%s2 + $0x3] sm:$0x1]
    %v173 = vld [vmem:[%s2 + $0x4] sm:$0x1]
    %v174 = vld [vmem:[%s2 + $0x5] sm:$0x1]
    %v175 = vld [vmem:[%s2 + $0x6] sm:$0x1]
    %v176 = vld [vmem:[%s2 + $0x7] sm:$0x1]
    %v177 = vld [vmem:[%s2 + $0x8] sm:$0x1]
    %v178 = vld [vmem:[%s2 + $0x9] sm:$0x1]
    %v179 = vld [vmem:[%s2 + $0xa] sm:$0x1]
    %vm180 = vcmask 261120
    %v181 = vsel %vm180, %v137, 0.0
    %182 = vadd.xlane.f32.xlu0 %v181
    %v183 = vpop.xlane.xlu0 %182
    %v184 = vsel %vm180, %v138, 0.0
    %185 = vadd.xlane.f32.xlu0 %v184
    %v186 = vpop.xlane.xlu0 %185
    %v187 = vsel %vm180, %v139, 0.0
    %188 = vadd.xlane.f32.xlu0 %v187
    %v189 = vpop.xlane.xlu0 %188
    %v190 = vsel %vm180, %v140, 0.0
    %191 = vadd.xlane.f32.xlu0 %v190
    %v192 = vpop.xlane.xlu0 %191
    %v193 = vsel %vm180, %v141, 0.0
    %194 = vadd.xlane.f32.xlu0 %v193
    %v195 = vpop.xlane.xlu0 %194
    %v196 = vsel %vm180, %v142, 0.0
    %197 = vadd.xlane.f32.xlu0 %v196
    %v198 = vpop.xlane.xlu0 %197
    %v199 = vsel %vm180, %v143, 0.0
    %200 = vadd.xlane.f32.xlu0 %v199
    %v201 = vpop.xlane.xlu0 %200
    %v202 = vsel %vm180, %v144, 0.0
    %203 = vadd.xlane.f32.xlu0 %v202
    %v204 = vpop.xlane.xlu0 %203
    %v205 = vsel %vm180, %v145, 0.0
    %206 = vadd.xlane.f32.xlu0 %v205
    %v207 = vpop.xlane.xlu0 %206
    %v208 = vsel %vm180, %v146, 0.0
    %209 = vadd.xlane.f32.xlu0 %v208
    %v210 = vpop.xlane.xlu0 %209
    %v211 = vsel %vm180, %v147, 0.0
    %212 = vadd.xlane.f32.xlu0 %v211
    %v213 = vpop.xlane.xlu0 %212
    %v214 = vsel %vm180, %v148, 0.0
    %215 = vadd.xlane.f32.xlu0 %v214
    %v216 = vpop.xlane.xlu0 %215
    %v217 = vsel %vm180, %v149, 0.0
    %218 = vadd.xlane.f32.xlu0 %v217
    %v219 = vpop.xlane.xlu0 %218
    %v220 = vsel %vm180, %v150, 0.0
    %221 = vadd.xlane.f32.xlu0 %v220
    %v222 = vpop.xlane.xlu0 %221
    %v223 = vsel %vm180, %v151, 0.0
    %224 = vadd.xlane.f32.xlu0 %v223
    %v225 = vpop.xlane.xlu0 %224
    %v226 = vsel %vm180, %v152, 0.0
    %227 = vadd.xlane.f32.xlu0 %v226
    %v228 = vpop.xlane.xlu0 %227
    %v229 = vsel %vm180, %v153, 0.0
    %230 = vadd.xlane.f32.xlu0 %v229
    %v231 = vpop.xlane.xlu0 %230
    %v232 = vsel %vm180, %v154, 0.0
    %233 = vadd.xlane.f32.xlu0 %v232
    %v234 = vpop.xlane.xlu0 %233
    %v235 = vsel %vm180, %v155, 0.0
    %236 = vadd.xlane.f32.xlu0 %v235
    %v237 = vpop.xlane.xlu0 %236
    %v238 = vsel %vm180, %v156, 0.0
    %239 = vadd.xlane.f32.xlu0 %v238
    %v240 = vpop.xlane.xlu0 %239
    %v241 = vsel %vm180, %v157, 0.0
    %242 = vadd.xlane.f32.xlu0 %v241
    %v243 = vpop.xlane.xlu0 %242
    %v244 = vsel %vm180, %v158, 0.0
    %245 = vadd.xlane.f32.xlu0 %v244
    %v246 = vpop.xlane.xlu0 %245
    %v247 = vsel %vm180, %v159, 0.0
    %248 = vadd.xlane.f32.xlu0 %v247
    %v249 = vpop.xlane.xlu0 %248
    %v250 = vsel %vm180, %v160, 0.0
    %251 = vadd.xlane.f32.xlu0 %v250
    %v252 = vpop.xlane.xlu0 %251
    %v253 = vsel %vm180, %v161, 0.0
    %254 = vadd.xlane.f32.xlu0 %v253
    %v255 = vpop.xlane.xlu0 %254
    %v256 = vsel %vm180, %v162, 0.0
    %257 = vadd.xlane.f32.xlu0 %v256
    %v258 = vpop.xlane.xlu0 %257
    %v259 = vsel %vm180, %v163, 0.0
    %260 = vadd.xlane.f32.xlu0 %v259
    %v261 = vpop.xlane.xlu0 %260
    %v262 = vsel %vm180, %v164, 0.0
    %263 = vadd.xlane.f32.xlu0 %v262
    %v264 = vpop.xlane.xlu0 %263
    %v265 = vsel %vm180, %v165, 0.0
    %266 = vadd.xlane.f32.xlu0 %v265
    %v267 = vpop.xlane.xlu0 %266
    %v268 = vsel %vm180, %v166, 0.0
    %269 = vadd.xlane.f32.xlu0 %v268
    %v270 = vpop.xlane.xlu0 %269
    %v271 = vsel %vm180, %v167, 0.0
    %272 = vadd.xlane.f32.xlu0 %v271
    %v273 = vpop.xlane.xlu0 %272
    %v274 = vsel %vm180, %v168, 0.0
    %275 = vadd.xlane.f32.xlu0 %v274
    %v276 = vpop.xlane.xlu0 %275
    %v277 = vrcp.pop 32.0
    %v278 = vmul.f32 %v183, %v277
    %v279 = vmul.f32 %v186, %v277
    %v280 = vmul.f32 %v189, %v277
    %v281 = vmul.f32 %v192, %v277
    %v282 = vmul.f32 %v195, %v277
    %v283 = vmul.f32 %v198, %v277
    %v284 = vmul.f32 %v201, %v277
    %v285 = vmul.f32 %v204, %v277
    %v286 = vmul.f32 %v207, %v277
    %v287 = vmul.f32 %v210, %v277
    %v288 = vmul.f32 %v213, %v277
    %v289 = vmul.f32 %v216, %v277
    %v290 = vmul.f32 %v219, %v277
    %v291 = vmul.f32 %v222, %v277
    %v292 = vmul.f32 %v225, %v277
    %v293 = vmul.f32 %v228, %v277
    %v294 = vmul.f32 %v231, %v277
    %v295 = vmul.f32 %v234, %v277
    %v296 = vmul.f32 %v237, %v277
    %v297 = vmul.f32 %v240, %v277
    %v298 = vmul.f32 %v243, %v277
    %v299 = vmul.f32 %v246, %v277
    %v300 = vmul.f32 %v249, %v277
    %v301 = vmul.f32 %v252, %v277
    %v302 = vmul.f32 %v255, %v277
    %v303 = vmul.f32 %v258, %v277
    %v304 = vmul.f32 %v261, %v277
    %v305 = vmul.f32 %v264, %v277
    %v306 = vmul.f32 %v267, %v277
    %v307 = vmul.f32 %v270, %v277
    %v308 = vmul.f32 %v273, %v277
    %v309 = vmul.f32 %v276, %v277
    %v310 = vsub.f32 %v137, %v278
    %v311 = vsub.f32 %v138, %v279
    %v312 = vsub.f32 %v139, %v280
    %v313 = vsub.f32 %v140, %v281
    %v314 = vsub.f32 %v141, %v282
    %v315 = vsub.f32 %v142, %v283
    %v316 = vsub.f32 %v143, %v284
    %v317 = vsub.f32 %v144, %v285
    %v318 = vsub.f32 %v145, %v286
    %v319 = vsub.f32 %v146, %v287
    %v320 = vsub.f32 %v147, %v288
    %v321 = vsub.f32 %v148, %v289
    %v322 = vsub.f32 %v149, %v290
    %v323 = vsub.f32 %v150, %v291
    %v324 = vsub.f32 %v151, %v292
    %v325 = vsub.f32 %v152, %v293
    %v326 = vsub.f32 %v153, %v294
    %v327 = vsub.f32 %v154, %v295
    %v328 = vsub.f32 %v155, %v296
    %v329 = vsub.f32 %v156, %v297
    %v330 = vsub.f32 %v157, %v298
    %v331 = vsub.f32 %v158, %v299
    %v332 = vsub.f32 %v159, %v300
    %v333 = vsub.f32 %v160, %v301
    %v334 = vsub.f32 %v161, %v302
    %v335 = vsub.f32 %v162, %v303
    %v336 = vsub.f32 %v163, %v304
    %v337 = vsub.f32 %v164, %v305
    %v338 = vsub.f32 %v165, %v306
    %v339 = vsub.f32 %v166, %v307
    %v340 = vsub.f32 %v167, %v308
    %v341 = vsub.f32 %v168, %v309
    %v342 = vmul.f32 %v310, %v310
    %v343 = vmul.f32 %v311, %v311
    %v344 = vmul.f32 %v312, %v312
    %v345 = vmul.f32 %v313, %v313
    %v346 = vmul.f32 %v314, %v314
    %v347 = vmul.f32 %v315, %v315
    %v348 = vmul.f32 %v316, %v316
    %v349 = vmul.f32 %v317, %v317
    %v350 = vmul.f32 %v318, %v318
    %v351 = vmul.f32 %v319, %v319
    %v352 = vmul.f32 %v320, %v320
    %v353 = vmul.f32 %v321, %v321
    %v354 = vmul.f32 %v322, %v322
    %v355 = vmul.f32 %v323, %v323
    %v356 = vmul.f32 %v324, %v324
    %v357 = vmul.f32 %v325, %v325
    %v358 = vmul.f32 %v326, %v326
    %v359 = vmul.f32 %v327, %v327
    %v360 = vmul.f32 %v328, %v328
    %v361 = vmul.f32 %v329, %v329
    %v362 = vmul.f32 %v330, %v330
    %v363 = vmul.f32 %v331, %v331
    %v364 = vmul.f32 %v332, %v332
    %v365 = vmul.f32 %v333, %v333
    %v366 = vmul.f32 %v334, %v334
    %v367 = vmul.f32 %v335, %v335
    %v368 = vmul.f32 %v336, %v336
    %v369 = vmul.f32 %v337, %v337
    %v370 = vmul.f32 %v338, %v338
    %v371 = vmul.f32 %v339, %v339
    %v372 = vmul.f32 %v340, %v340
    %v373 = vmul.f32 %v341, %v341
    %v374 = vsel %vm180, %v342, 0.0
    %375 = vadd.xlane.f32.xlu0 %v374
    %v376 = vpop.xlane.xlu0 %375
    %v377 = vsel %vm180, %v343, 0.0
    %378 = vadd.xlane.f32.xlu0 %v377
    %v379 = vpop.xlane.xlu0 %378
    %v380 = vsel %vm180, %v344, 0.0
    %381 = vadd.xlane.f32.xlu0 %v380
    %v382 = vpop.xlane.xlu0 %381
    %v383 = vsel %vm180, %v345, 0.0
    %384 = vadd.xlane.f32.xlu0 %v383
    %v385 = vpop.xlane.xlu0 %384
    %v386 = vsel %vm180, %v346, 0.0
    %387 = vadd.xlane.f32.xlu0 %v386
    %v388 = vpop.xlane.xlu0 %387
    %v389 = vsel %vm180, %v347, 0.0
    %390 = vadd.xlane.f32.xlu0 %v389
    %v391 = vpop.xlane.xlu0 %390
    %v392 = vsel %vm180, %v348, 0.0
    %393 = vadd.xlane.f32.xlu0 %v392
    %v394 = vpop.xlane.xlu0 %393
    %v395 = vsel %vm180, %v349, 0.0
    %396 = vadd.xlane.f32.xlu0 %v395
    %v397 = vpop.xlane.xlu0 %396
    %v398 = vsel %vm180, %v350, 0.0
    %399 = vadd.xlane.f32.xlu0 %v398
    %v400 = vpop.xlane.xlu0 %399
    %v401 = vsel %vm180, %v351, 0.0
    %402 = vadd.xlane.f32.xlu0 %v401
    %v403 = vpop.xlane.xlu0 %402
    %v404 = vsel %vm180, %v352, 0.0
    %405 = vadd.xlane.f32.xlu0 %v404
    %v406 = vpop.xlane.xlu0 %405
    %v407 = vsel %vm180, %v353, 0.0
    %408 = vadd.xlane.f32.xlu0 %v407
    %v409 = vpop.xlane.xlu0 %408
    %v410 = vsel %vm180, %v354, 0.0
    %411 = vadd.xlane.f32.xlu0 %v410
    %v412 = vpop.xlane.xlu0 %411
    %v413 = vsel %vm180, %v355, 0.0
    %414 = vadd.xlane.f32.xlu0 %v413
    %v415 = vpop.xlane.xlu0 %414
    %v416 = vsel %vm180, %v356, 0.0
    %417 = vadd.xlane.f32.xlu0 %v416
    %v418 = vpop.xlane.xlu0 %417
    %v419 = vsel %vm180, %v357, 0.0
    %420 = vadd.xlane.f32.xlu0 %v419
    %v421 = vpop.xlane.xlu0 %420
    %v422 = vsel %vm180, %v358, 0.0
    %423 = vadd.xlane.f32.xlu0 %v422
    %v424 = vpop.xlane.xlu0 %423
    %v425 = vsel %vm180, %v359, 0.0
    %426 = vadd.xlane.f32.xlu0 %v425
    %v427 = vpop.xlane.xlu0 %426
    %v428 = vsel %vm180, %v360, 0.0
    %429 = vadd.xlane.f32.xlu0 %v428
    %v430 = vpop.xlane.xlu0 %429
    %v431 = vsel %vm180, %v361, 0.0
    %432 = vadd.xlane.f32.xlu0 %v431
    %v433 = vpop.xlane.xlu0 %432
    %v434 = vsel %vm180, %v362, 0.0
    %435 = vadd.xlane.f32.xlu0 %v434
    %v436 = vpop.xlane.xlu0 %435
    %v437 = vsel %vm180, %v363, 0.0
    %438 = vadd.xlane.f32.xlu0 %v437
    %v439 = vpop.xlane.xlu0 %438
    %v440 = vsel %vm180, %v364, 0.0
    %441 = vadd.xlane.f32.xlu0 %v440
    %v442 = vpop.xlane.xlu0 %441
    %v443 = vsel %vm180, %v365, 0.0
    %444 = vadd.xlane.f32.xlu0 %v443
    %v445 = vpop.xlane.xlu0 %444
    %v446 = vsel %vm180, %v366, 0.0
    %447 = vadd.xlane.f32.xlu0 %v446
    %v448 = vpop.xlane.xlu0 %447
    %v449 = vsel %vm180, %v367, 0.0
    %450 = vadd.xlane.f32.xlu0 %v449
    %v451 = vpop.xlane.xlu0 %450
    %v452 = vsel %vm180, %v368, 0.0
    %453 = vadd.xlane.f32.xlu0 %v452
    %v454 = vpop.xlane.xlu0 %453
    %v455 = vsel %vm180, %v369, 0.0
    %456 = vadd.xlane.f32.xlu0 %v455
    %v457 = vpop.xlane.xlu0 %456
    %v458 = vsel %vm180, %v370, 0.0
    %459 = vadd.xlane.f32.xlu0 %v458
    %v460 = vpop.xlane.xlu0 %459
    %v461 = vsel %vm180, %v371, 0.0
    %462 = vadd.xlane.f32.xlu0 %v461
    %v463 = vpop.xlane.xlu0 %462
    %v464 = vsel %vm180, %v372, 0.0
    %465 = vadd.xlane.f32.xlu0 %v464
    %v466 = vpop.xlane.xlu0 %465
    %v467 = vsel %vm180, %v373, 0.0
    %468 = vadd.xlane.f32.xlu0 %v467
    %v469 = vpop.xlane.xlu0 %468
    %v470 = vmul.f32 %v376, %v277
    %v471 = vmul.f32 %v379, %v277
    %v472 = vmul.f32 %v382, %v277
    %v473 = vmul.f32 %v385, %v277
    %v474 = vmul.f32 %v388, %v277
    %v475 = vmul.f32 %v391, %v277
    %v476 = vmul.f32 %v394, %v277
    %v477 = vmul.f32 %v397, %v277
    %v478 = vmul.f32 %v400, %v277
    %v479 = vmul.f32 %v403, %v277
    %v480 = vmul.f32 %v406, %v277
    %v481 = vmul.f32 %v409, %v277
    %v482 = vmul.f32 %v412, %v277
    %v483 = vmul.f32 %v415, %v277
    %v484 = vmul.f32 %v418, %v277
    %v485 = vmul.f32 %v421, %v277
    %v486 = vmul.f32 %v424, %v277
    %v487 = vmul.f32 %v427, %v277
    %v488 = vmul.f32 %v430, %v277
    %v489 = vmul.f32 %v433, %v277
    %v490 = vmul.f32 %v436, %v277
    %v491 = vmul.f32 %v439, %v277
    %v492 = vmul.f32 %v442, %v277
    %v493 = vmul.f32 %v445, %v277
    %v494 = vmul.f32 %v448, %v277
    %v495 = vmul.f32 %v451, %v277
    %v496 = vmul.f32 %v454, %v277
    %v497 = vmul.f32 %v457, %v277
    %v498 = vmul.f32 %v460, %v277
    %v499 = vmul.f32 %v463, %v277
    %v500 = vmul.f32 %v466, %v277
    %v501 = vmul.f32 %v469, %v277
    %v502 = vadd.f32 %v470, 1e-05
    %v503 = vadd.f32 %v471, 1e-05
    %v504 = vadd.f32 %v472, 1e-05
    %v505 = vadd.f32 %v473, 1e-05
    %v506 = vadd.f32 %v474, 1e-05
    %v507 = vadd.f32 %v475, 1e-05
    %v508 = vadd.f32 %v476, 1e-05
    %v509 = vadd.f32 %v477, 1e-05
    %v510 = vadd.f32 %v478, 1e-05
    %v511 = vadd.f32 %v479, 1e-05
    %v512 = vadd.f32 %v480, 1e-05
    %v513 = vadd.f32 %v481, 1e-05
    %v514 = vadd.f32 %v482, 1e-05
    %v515 = vadd.f32 %v483, 1e-05
    %v516 = vadd.f32 %v484, 1e-05
    %v517 = vadd.f32 %v485, 1e-05
    %v518 = vadd.f32 %v486, 1e-05
    %v519 = vadd.f32 %v487, 1e-05
    %v520 = vadd.f32 %v488, 1e-05
    %v521 = vadd.f32 %v489, 1e-05
    %v522 = vadd.f32 %v490, 1e-05
    %v523 = vadd.f32 %v491, 1e-05
    %v524 = vadd.f32 %v492, 1e-05
    %v525 = vadd.f32 %v493, 1e-05
    %v526 = vadd.f32 %v494, 1e-05
    %v527 = vadd.f32 %v495, 1e-05
    %v528 = vadd.f32 %v496, 1e-05
    %v529 = vadd.f32 %v497, 1e-05
    %v530 = vadd.f32 %v498, 1e-05
    %v531 = vadd.f32 %v499, 1e-05
    %v532 = vadd.f32 %v500, 1e-05
    %v533 = vadd.f32 %v501, 1e-05
    %v534 = vrsqrt.pop %v502
    %v535 = vrsqrt.pop %v503
    %v536 = vrsqrt.pop %v504
    %v537 = vrsqrt.pop %v505
    %v538 = vrsqrt.pop %v506
    %v539 = vrsqrt.pop %v507
    %v540 = vrsqrt.pop %v508
    %v541 = vrsqrt.pop %v509
    %v542 = vrsqrt.pop %v510
    %v543 = vrsqrt.pop %v511
    %v544 = vrsqrt.pop %v512
    %v545 = vrsqrt.pop %v513
    %v546 = vrsqrt.pop %v514
    %v547 = vrsqrt.pop %v515
    %v548 = vrsqrt.pop %v516
    %v549 = vrsqrt.pop %v517
    %v550 = vrsqrt.pop %v518
    %v551 = vrsqrt.pop %v519
    %v552 = vrsqrt.pop %v520
    %v553 = vrsqrt.pop %v521
    %v554 = vrsqrt.pop %v522
    %v555 = vrsqrt.pop %v523
    %v556 = vrsqrt.pop %v524
    %v557 = vrsqrt.pop %v525
    %v558 = vrsqrt.pop %v526
    %v559 = vrsqrt.pop %v527
    %v560 = vrsqrt.pop %v528
    %v561 = vrsqrt.pop %v529
    %v562 = vrsqrt.pop %v530
    %v563 = vrsqrt.pop %v531
    %v564 = vrsqrt.pop %v532
    %v565 = vrsqrt.pop %v533
    %v566 = vmul.f32 %v310, %v534
    %v567 = vmul.f32 %v311, %v535
    %v568 = vmul.f32 %v312, %v536
    %v569 = vmul.f32 %v313, %v537
    %v570 = vmul.f32 %v314, %v538
    %v571 = vmul.f32 %v315, %v539
    %v572 = vmul.f32 %v316, %v540
    %v573 = vmul.f32 %v317, %v541
    %v574 = vmul.f32 %v318, %v542
    %v575 = vmul.f32 %v319, %v543
    %v576 = vmul.f32 %v320, %v544
    %v577 = vmul.f32 %v321, %v545
    %v578 = vmul.f32 %v322, %v546
    %v579 = vmul.f32 %v323, %v547
    %v580 = vmul.f32 %v324, %v548
    %v581 = vmul.f32 %v325, %v549
    %v582 = vmul.f32 %v326, %v550
    %v583 = vmul.f32 %v327, %v551
    %v584 = vmul.f32 %v328, %v552
    %v585 = vmul.f32 %v329, %v553
    %v586 = vmul.f32 %v330, %v554
    %v587 = vmul.f32 %v331, %v555
    %v588 = vmul.f32 %v332, %v556
    %v589 = vmul.f32 %v333, %v557
    %v590 = vmul.f32 %v334, %v558
    %v591 = vmul.f32 %v335, %v559
    %v592 = vmul.f32 %v336, %v560
    %v593 = vmul.f32 %v337, %v561
    %v594 = vmul.f32 %v338, %v562
    %v595 = vmul.f32 %v339, %v563
    %v596 = vmul.f32 %v340, %v564
    %v597 = vmul.f32 %v341, %v565
    %v598 = vlaneseq
    %v599 = vshrl.u32 %v598, 7
    %v600 = vsub.s32 0, %v599
    %v601 = vrot.slane %v169, %v600
    %v602 = vmul.f32 %v566, %v601
    %v603 = vmul.f32 %v567, %v601
    %v604 = vmul.f32 %v568, %v601
    %v605 = vmul.f32 %v569, %v601
    %v606 = vmul.f32 %v570, %v601
    %v607 = vmul.f32 %v571, %v601
    %v608 = vmul.f32 %v572, %v601
    %v609 = vmul.f32 %v573, %v601
    %v610 = vmul.f32 %v574, %v601
    %v611 = vmul.f32 %v575, %v601
    %v612 = vmul.f32 %v576, %v601
    %v613 = vmul.f32 %v577, %v601
    %v614 = vmul.f32 %v578, %v601
    %v615 = vmul.f32 %v579, %v601
    %v616 = vmul.f32 %v580, %v601
    %v617 = vmul.f32 %v581, %v601
    %v618 = vmul.f32 %v582, %v601
    %v619 = vmul.f32 %v583, %v601
    %v620 = vmul.f32 %v584, %v601
    %v621 = vmul.f32 %v585, %v601
    %v622 = vmul.f32 %v586, %v601
    %v623 = vmul.f32 %v587, %v601
    %v624 = vmul.f32 %v588, %v601
    %v625 = vmul.f32 %v589, %v601
    %v626 = vmul.f32 %v590, %v601
    %v627 = vmul.f32 %v591, %v601
    %v628 = vmul.f32 %v592, %v601
    %v629 = vmul.f32 %v593, %v601
    %v630 = vmul.f32 %v594, %v601
    %v631 = vmul.f32 %v595, %v601
    %v632 = vmul.f32 %v596, %v601
    %v633 = vmul.f32 %v597, %v601
    %v634 = vlaneseq
    %v635 = vshrl.u32 %v634, 7
    %v636 = vsub.s32 0, %v635
    %v637 = vrot.slane %v170, %v636
    %v638 = vadd.f32 %v602, %v637
    %v639 = vadd.f32 %v603, %v637
    %v640 = vadd.f32 %v604, %v637
    %v641 = vadd.f32 %v605, %v637
    %v642 = vadd.f32 %v606, %v637
    %v643 = vadd.f32 %v607, %v637
    %v644 = vadd.f32 %v608, %v637
    %v645 = vadd.f32 %v609, %v637
    %v646 = vadd.f32 %v610, %v637
    %v647 = vadd.f32 %v611, %v637
    %v648 = vadd.f32 %v612, %v637
    %v649 = vadd.f32 %v613, %v637
    %v650 = vadd.f32 %v614, %v637
    %v651 = vadd.f32 %v615, %v637
    %v652 = vadd.f32 %v616, %v637
    %v653 = vadd.f32 %v617, %v637
    %v654 = vadd.f32 %v618, %v637
    %v655 = vadd.f32 %v619, %v637
    %v656 = vadd.f32 %v620, %v637
    %v657 = vadd.f32 %v621, %v637
    %v658 = vadd.f32 %v622, %v637
    %v659 = vadd.f32 %v623, %v637
    %v660 = vadd.f32 %v624, %v637
    %v661 = vadd.f32 %v625, %v637
    %v662 = vadd.f32 %v626, %v637
    %v663 = vadd.f32 %v627, %v637
    %v664 = vadd.f32 %v628, %v637
    %v665 = vadd.f32 %v629, %v637
    %v666 = vadd.f32 %v630, %v637
    %v667 = vadd.f32 %v631, %v637
    %v668 = vadd.f32 %v632, %v637
    %v669 = vadd.f32 %v633, %v637
    %v670 = vpack.c.bf16 %v639, %v638
    %v671 = vpack.c.bf16 %v641, %v640
    %v672 = vpack.c.bf16 %v643, %v642
    %v673 = vpack.c.bf16 %v645, %v644
    %v674 = vpack.c.bf16 %v647, %v646
    %v675 = vpack.c.bf16 %v649, %v648
    %v676 = vpack.c.bf16 %v651, %v650
    %v677 = vpack.c.bf16 %v653, %v652
    %v678 = vpack.c.bf16 %v655, %v654
    %v679 = vpack.c.bf16 %v657, %v656
    %v680 = vpack.c.bf16 %v659, %v658
    %v681 = vpack.c.bf16 %v661, %v660
    %v682 = vpack.c.bf16 %v663, %v662
    %v683 = vpack.c.bf16 %v665, %v664
    %v684 = vpack.c.bf16 %v667, %v666
    %v685 = vpack.c.bf16 %v669, %v668
    %v686 = vld [vmem:[%s3] sm:$0xf]
    %v687 = vld [vmem:[%s3 + $0x4] sm:$0xf]
    %v688 = vld [vmem:[%s3 + $0x8] sm:$0xf]
    %v689 = vld [vmem:[%s3 + $0xc] sm:$0xf]
    %v690 = vlaneseq
    %v691 = vshrl.u32 %v690, 7
    %v692 = vsub.s32 0, %v691
    %v693 = vrot.slane %v173, %v692
    %v698 = vunpack.c.l.b16 %v686
    %v699 = vunpack.c.l.b16 %v687
    %v700 = vunpack.c.l.b16 %v688
    %v701 = vunpack.c.l.b16 %v689
    %v702 = vpack.c.b16 %v699, %v698
    %v703 = vpack.c.b16 %v701, %v700
    %v707 = vsel %vm180, %v670, 0
    %v710 = vsel %vm180, %v671, 0
    %v713 = vsel %vm180, %v672, 0
    %v716 = vsel %vm180, %v673, 0
    %v719 = vsel %vm180, %v674, 0
    %v722 = vsel %vm180, %v675, 0
    %v725 = vsel %vm180, %v676, 0
    %v728 = vsel %vm180, %v677, 0
    %v731 = vsel %vm180, %v678, 0
    %v734 = vsel %vm180, %v679, 0
    %v737 = vsel %vm180, %v680, 0
    %v740 = vsel %vm180, %v681, 0
    %v743 = vsel %vm180, %v682, 0
    %v746 = vsel %vm180, %v683, 0
    %v749 = vsel %vm180, %v684, 0
    %v752 = vsel %vm180, %v685, 0
    %754 = vmatprep.subr.bf16.mxu0 0
    %755 = vmatpush1.bf16.msra.mxu0 %v702
    %756 = vmatprep.subr.bf16.mxu0 0
    %757 = vmatpush1.bf16.msra.mxu0 %v703
    %758 = vmatprep.subr.bf16.mxu0 0
    %759 = vmatpush1.bf16.msra.mxu0 0
    %760 = vmatprep.subr.bf16.mxu0 0
    %761 = vmatpush1.bf16.msra.mxu0 0
    %762 = vmatprep.subr.bf16.mxu0 0
    %763 = vmatpush1.bf16.msra.mxu0 0
    %764 = vmatprep.subr.bf16.mxu0 0
    %765 = vmatpush1.bf16.msra.mxu0 0
    %766 = vmatprep.subr.bf16.mxu0 0
    %767 = vmatpush1.bf16.msra.mxu0 0
    %768 = vmatprep.subr.bf16.mxu0 0
    %769 = vmatpush1.bf16.msra.mxu0 0
    %770 = vmatprep.subr.bf16.mxu0 0
    %771 = vmatpush1.bf16.msra.mxu0 0
    %772 = vmatprep.subr.bf16.mxu0 0
    %773 = vmatpush1.bf16.msra.mxu0 0
    %774 = vmatprep.subr.bf16.mxu0 0
    %775 = vmatpush1.bf16.msra.mxu0 0
    %776 = vmatprep.subr.bf16.mxu0 0
    %777 = vmatpush1.bf16.msra.mxu0 0
    %778 = vmatprep.subr.bf16.mxu0 0
    %779 = vmatpush1.bf16.msra.mxu0 0
    %780 = vmatprep.subr.bf16.mxu0 0
    %781 = vmatpush1.bf16.msra.mxu0 0
    %782 = vmatprep.subr.bf16.mxu0 0
    %783 = vmatpush1.bf16.msra.mxu0 0
    %784 = vmatprep.subr.bf16.mxu0 0
    %785 = vmatpush1.bf16.msra.mxu0 0
    %786 = vmatprep.mubr.bf16.mxu0 0
    %787 = vmatmul.mubr.bf16.gmra.mrb[0].mxu0 %v707
    %v788 = vpop.f32.mrb[0].mxu0
    %v789 = vadd.f32 %v693, %v788
    %v790 = vpop.f32.mrb[0].mxu0
    %v791 = vpop.f32.mrb[0].mxu0
    %v792 = vadd.f32 %v693, %v791
    %v793 = vpop.f32.mrb[0].mxu0
    %794 = vmatprep.mubr.bf16.mxu0 0
    %795 = vmatmul.mubr.bf16.gmra.mrb[0].mxu0 %v710
    %v796 = vpop.f32.mrb[0].mxu0
    %v797 = vadd.f32 %v693, %v796
    %v798 = vpop.f32.mrb[0].mxu0
    %v799 = vpop.f32.mrb[0].mxu0
    %v800 = vadd.f32 %v693, %v799
    %v801 = vpop.f32.mrb[0].mxu0
    %802 = vmatprep.mubr.bf16.mxu0 0
    %803 = vmatmul.mubr.bf16.gmra.mrb[0].mxu0 %v713
    %v804 = vpop.f32.mrb[0].mxu0
    %v805 = vadd.f32 %v693, %v804
    %v806 = vpop.f32.mrb[0].mxu0
    %v807 = vpop.f32.mrb[0].mxu0
    %v808 = vadd.f32 %v693, %v807
    %v809 = vpop.f32.mrb[0].mxu0
    %810 = vmatprep.mubr.bf16.mxu0 0
    %811 = vmatmul.mubr.bf16.gmra.mrb[0].mxu0 %v716
    %v812 = vpop.f32.mrb[0].mxu0
    %v813 = vadd.f32 %v693, %v812
    %v814 = vpop.f32.mrb[0].mxu0
    %v815 = vpop.f32.mrb[0].mxu0
    %v816 = vadd.f32 %v693, %v815
    %v817 = vpop.f32.mrb[0].mxu0
    %818 = vmatprep.mubr.bf16.mxu0 0
    %819 = vmatmul.mubr.bf16.gmra.mrb[0].mxu0 %v719
    %v820 = vpop.f32.mrb[0].mxu0
    %v821 = vadd.f32 %v693, %v820
    %v822 = vpop.f32.mrb[0].mxu0
    %v823 = vpop.f32.mrb[0].mxu0
    %v824 = vadd.f32 %v693, %v823
    %v825 = vpop.f32.mrb[0].mxu0
    %826 = vmatprep.mubr.bf16.mxu0 0
    %827 = vmatmul.mubr.bf16.gmra.mrb[0].mxu0 %v722
    %v828 = vpop.f32.mrb[0].mxu0
    %v829 = vadd.f32 %v693, %v828
    %v830 = vpop.f32.mrb[0].mxu0
    %v831 = vpop.f32.mrb[0].mxu0
    %v832 = vadd.f32 %v693, %v831
    %v833 = vpop.f32.mrb[0].mxu0
    %834 = vmatprep.mubr.bf16.mxu0 0
    %835 = vmatmul.mubr.bf16.gmra.mrb[0].mxu0 %v725
    %v836 = vpop.f32.mrb[0].mxu0
    %v837 = vadd.f32 %v693, %v836
    %v838 = vpop.f32.mrb[0].mxu0
    %v839 = vpop.f32.mrb[0].mxu0
    %v840 = vadd.f32 %v693, %v839
    %v841 = vpop.f32.mrb[0].mxu0
    %842 = vmatprep.mubr.bf16.mxu0 0
    %843 = vmatmul.mubr.bf16.gmra.mrb[0].mxu0 %v728
    %v844 = vpop.f32.mrb[0].mxu0
    %v845 = vadd.f32 %v693, %v844
    %v846 = vpop.f32.mrb[0].mxu0
    %v847 = vpop.f32.mrb[0].mxu0
    %v848 = vadd.f32 %v693, %v847
    %v849 = vpop.f32.mrb[0].mxu0
    %850 = vmatprep.mubr.bf16.mxu0 0
    %851 = vmatmul.mubr.bf16.gmra.mrb[0].mxu0 %v731
    %v852 = vpop.f32.mrb[0].mxu0
    %v853 = vadd.f32 %v693, %v852
    %v854 = vpop.f32.mrb[0].mxu0
    %v855 = vpop.f32.mrb[0].mxu0
    %v856 = vadd.f32 %v693, %v855
    %v857 = vpop.f32.mrb[0].mxu0
    %858 = vmatprep.mubr.bf16.mxu0 0
    %859 = vmatmul.mubr.bf16.gmra.mrb[0].mxu0 %v734
    %v860 = vpop.f32.mrb[0].mxu0
    %v861 = vadd.f32 %v693, %v860
    %v862 = vpop.f32.mrb[0].mxu0
    %v863 = vpop.f32.mrb[0].mxu0
    %v864 = vadd.f32 %v693, %v863
    %v865 = vpop.f32.mrb[0].mxu0
    %866 = vmatprep.mubr.bf16.mxu0 0
    %867 = vmatmul.mubr.bf16.gmra.mrb[0].mxu0 %v737
    %v868 = vpop.f32.mrb[0].mxu0
    %v869 = vadd.f32 %v693, %v868
    %v870 = vpop.f32.mrb[0].mxu0
    %v871 = vpop.f32.mrb[0].mxu0
    %v872 = vadd.f32 %v693, %v871
    %v873 = vpop.f32.mrb[0].mxu0
    %874 = vmatprep.mubr.bf16.mxu0 0
    %875 = vmatmul.mubr.bf16.gmra.mrb[0].mxu0 %v740
    %v876 = vpop.f32.mrb[0].mxu0
    %v877 = vadd.f32 %v693, %v876
    %v878 = vpop.f32.mrb[0].mxu0
    %v879 = vpop.f32.mrb[0].mxu0
    %v880 = vadd.f32 %v693, %v879
    %v881 = vpop.f32.mrb[0].mxu0
    %882 = vmatprep.mubr.bf16.mxu0 0
    %883 = vmatmul.mubr.bf16.gmra.mrb[0].mxu0 %v743
    %v884 = vpop.f32.mrb[0].mxu0
    %v885 = vadd.f32 %v693, %v884
    %v886 = vpop.f32.mrb[0].mxu0
    %v887 = vpop.f32.mrb[0].mxu0
    %v888 = vadd.f32 %v693, %v887
    %v889 = vpop.f32.mrb[0].mxu0
    %890 = vmatprep.mubr.bf16.mxu0 0
    %891 = vmatmul.mubr.bf16.gmra.mrb[0].mxu0 %v746
    %v892 = vpop.f32.mrb[0].mxu0
    %v893 = vadd.f32 %v693, %v892
    %v894 = vpop.f32.mrb[0].mxu0
    %v895 = vpop.f32.mrb[0].mxu0
    %v896 = vadd.f32 %v693, %v895
    %v897 = vpop.f32.mrb[0].mxu0
    %898 = vmatprep.mubr.bf16.mxu0 0
    %899 = vmatmul.mubr.bf16.gmra.mrb[0].mxu0 %v749
    %v900 = vpop.f32.mrb[0].mxu0
    %v901 = vadd.f32 %v693, %v900
    %v902 = vpop.f32.mrb[0].mxu0
    %v903 = vpop.f32.mrb[0].mxu0
    %v904 = vadd.f32 %v693, %v903
    %v905 = vpop.f32.mrb[0].mxu0
    %906 = vmatprep.mubr.bf16.mxu0 0
    %907 = vmatmul.mubr.bf16.gmra.mrb[0].mxu0 %v752
    %v908 = vpop.f32.mrb[0].mxu0
    %v909 = vadd.f32 %v693, %v908
    %v910 = vpop.f32.mrb[0].mxu0
    %v911 = vpop.f32.mrb[0].mxu0
    %v912 = vadd.f32 %v693, %v911
    %v913 = vpop.f32.mrb[0].mxu0
    %914 = vdwg.mxu0
    %v915 = vpack.c.bf16 %v792, %v789
    %v916 = vpack.c.bf16 %v800, %v797
    %v917 = vpack.c.bf16 %v808, %v805
    %v918 = vpack.c.bf16 %v816, %v813
    %v919 = vpack.c.bf16 %v824, %v821
    %v920 = vpack.c.bf16 %v832, %v829
    %v921 = vpack.c.bf16 %v840, %v837
    %v922 = vpack.c.bf16 %v848, %v845
    %v923 = vpack.c.bf16 %v856, %v853
    %v924 = vpack.c.bf16 %v864, %v861
    %v925 = vpack.c.bf16 %v872, %v869
    %v926 = vpack.c.bf16 %v880, %v877
    %v927 = vpack.c.bf16 %v888, %v885
    %v928 = vpack.c.bf16 %v896, %v893
    %v929 = vpack.c.bf16 %v904, %v901
    %v930 = vpack.c.bf16 %v912, %v909
    %v931 = vld [vmem:[%s4] sm:$0xf]
    %v932 = vld [vmem:[%s4 + $0x4] sm:$0xf]
    %v933 = vld [vmem:[%s4 + $0x8] sm:$0xf]
    %v934 = vld [vmem:[%s4 + $0xc] sm:$0xf]
    %v935 = vlaneseq
    %v936 = vshrl.u32 %v935, 7
    %v937 = vsub.s32 0, %v936
    %v938 = vrot.slane %v174, %v937
    %v943 = vunpack.c.l.b16 %v931
    %v944 = vunpack.c.l.b16 %v932
    %v945 = vunpack.c.l.b16 %v933
    %v946 = vunpack.c.l.b16 %v934
    %v947 = vpack.c.b16 %v944, %v943
    %v948 = vpack.c.b16 %v946, %v945
    %951 = vmatprep.subr.bf16.mxu0 0
    %952 = vmatpush1.bf16.msra.mxu0 %v947
    %953 = vmatprep.subr.bf16.mxu0 0
    %954 = vmatpush1.bf16.msra.mxu0 %v948
    %955 = vmatprep.subr.bf16.mxu0 0
    %956 = vmatpush1.bf16.msra.mxu0 0
    %957 = vmatprep.subr.bf16.mxu0 0
    %958 = vmatpush1.bf16.msra.mxu0 0
    %959 = vmatprep.subr.bf16.mxu0 0
    %960 = vmatpush1.bf16.msra.mxu0 0
    %961 = vmatprep.subr.bf16.mxu0 0
    %962 = vmatpush1.bf16.msra.mxu0 0
    %963 = vmatprep.subr.bf16.mxu0 0
    %964 = vmatpush1.bf16.msra.mxu0 0
    %965 = vmatprep.subr.bf16.mxu0 0
    %966 = vmatpush1.bf16.msra.mxu0 0
    %967 = vmatprep.subr.bf16.mxu0 0
    %968 = vmatpush1.bf16.msra.mxu0 0
    %969 = vmatprep.subr.bf16.mxu0 0
    %970 = vmatpush1.bf16.msra.mxu0 0
    %971 = vmatprep.subr.bf16.mxu0 0
    %972 = vmatpush1.bf16.msra.mxu0 0
    %973 = vmatprep.subr.bf16.mxu0 0
    %974 = vmatpush1.bf16.msra.mxu0 0
    %975 = vmatprep.subr.bf16.mxu0 0
    %976 = vmatpush1.bf16.msra.mxu0 0
    %977 = vmatprep.subr.bf16.mxu0 0
    %978 = vmatpush1.bf16.msra.mxu0 0
    %979 = vmatprep.subr.bf16.mxu0 0
    %980 = vmatpush1.bf16.msra.mxu0 0
    %981 = vmatprep.subr.bf16.mxu0 0
    %982 = vmatpush1.bf16.msra.mxu0 0
    %983 = vmatprep.mubr.bf16.mxu0 0
    %984 = vmatmul.mubr.bf16.gmra.mrb[0].mxu0 %v707
    %v985 = vpop.f32.mrb[0].mxu0
    %v986 = vadd.f32 %v938, %v985
    %v987 = vpop.f32.mrb[0].mxu0
    %v988 = vpop.f32.mrb[0].mxu0
    %v989 = vadd.f32 %v938, %v988
    %v990 = vpop.f32.mrb[0].mxu0
    %991 = vmatprep.mubr.bf16.mxu0 0
    %992 = vmatmul.mubr.bf16.gmra.mrb[0].mxu0 %v710
    %v993 = vpop.f32.mrb[0].mxu0
    %v994 = vadd.f32 %v938, %v993
    %v995 = vpop.f32.mrb[0].mxu0
    %v996 = vpop.f32.mrb[0].mxu0
    %v997 = vadd.f32 %v938, %v996
    %v998 = vpop.f32.mrb[0].mxu0
    %999 = vmatprep.mubr.bf16.mxu0 0
    %1000 = vmatmul.mubr.bf16.gmra.mrb[0].mxu0 %v713
    %v1001 = vpop.f32.mrb[0].mxu0
    %v1002 = vadd.f32 %v938, %v1001
    %v1003 = vpop.f32.mrb[0].mxu0
    %v1004 = vpop.f32.mrb[0].mxu0
    %v1005 = vadd.f32 %v938, %v1004
    %v1006 = vpop.f32.mrb[0].mxu0
    %1007 = vmatprep.mubr.bf16.mxu0 0
    %1008 = vmatmul.mubr.bf16.gmra.mrb[0].mxu0 %v716
    %v1009 = vpop.f32.mrb[0].mxu0
    %v1010 = vadd.f32 %v938, %v1009
    %v1011 = vpop.f32.mrb[0].mxu0
    %v1012 = vpop.f32.mrb[0].mxu0
    %v1013 = vadd.f32 %v938, %v1012
    %v1014 = vpop.f32.mrb[0].mxu0
    %1015 = vmatprep.mubr.bf16.mxu0 0
    %1016 = vmatmul.mubr.bf16.gmra.mrb[0].mxu0 %v719
    %v1017 = vpop.f32.mrb[0].mxu0
    %v1018 = vadd.f32 %v938, %v1017
    %v1019 = vpop.f32.mrb[0].mxu0
    %v1020 = vpop.f32.mrb[0].mxu0
    %v1021 = vadd.f32 %v938, %v1020
    %v1022 = vpop.f32.mrb[0].mxu0
    %1023 = vmatprep.mubr.bf16.mxu0 0
    %1024 = vmatmul.mubr.bf16.gmra.mrb[0].mxu0 %v722
    %v1025 = vpop.f32.mrb[0].mxu0
    %v1026 = vadd.f32 %v938, %v1025
    %v1027 = vpop.f32.mrb[0].mxu0
    %v1028 = vpop.f32.mrb[0].mxu0
    %v1029 = vadd.f32 %v938, %v1028
    %v1030 = vpop.f32.mrb[0].mxu0
    %1031 = vmatprep.mubr.bf16.mxu0 0
    %1032 = vmatmul.mubr.bf16.gmra.mrb[0].mxu0 %v725
    %v1033 = vpop.f32.mrb[0].mxu0
    %v1034 = vadd.f32 %v938, %v1033
    %v1035 = vpop.f32.mrb[0].mxu0
    %v1036 = vpop.f32.mrb[0].mxu0
    %v1037 = vadd.f32 %v938, %v1036
    %v1038 = vpop.f32.mrb[0].mxu0
    %1039 = vmatprep.mubr.bf16.mxu0 0
    %1040 = vmatmul.mubr.bf16.gmra.mrb[0].mxu0 %v728
    %v1041 = vpop.f32.mrb[0].mxu0
    %v1042 = vadd.f32 %v938, %v1041
    %v1043 = vpop.f32.mrb[0].mxu0
    %v1044 = vpop.f32.mrb[0].mxu0
    %v1045 = vadd.f32 %v938, %v1044
    %v1046 = vpop.f32.mrb[0].mxu0
    %1047 = vmatprep.mubr.bf16.mxu0 0
    %1048 = vmatmul.mubr.bf16.gmra.mrb[0].mxu0 %v731
    %v1049 = vpop.f32.mrb[0].mxu0
    %v1050 = vadd.f32 %v938, %v1049
    %v1051 = vpop.f32.mrb[0].mxu0
    %v1052 = vpop.f32.mrb[0].mxu0
    %v1053 = vadd.f32 %v938, %v1052
    %v1054 = vpop.f32.mrb[0].mxu0
    %1055 = vmatprep.mubr.bf16.mxu0 0
    %1056 = vmatmul.mubr.bf16.gmra.mrb[0].mxu0 %v734
    %v1057 = vpop.f32.mrb[0].mxu0
    %v1058 = vadd.f32 %v938, %v1057
    %v1059 = vpop.f32.mrb[0].mxu0
    %v1060 = vpop.f32.mrb[0].mxu0
    %v1061 = vadd.f32 %v938, %v1060
    %v1062 = vpop.f32.mrb[0].mxu0
    %1063 = vmatprep.mubr.bf16.mxu0 0
    %1064 = vmatmul.mubr.bf16.gmra.mrb[0].mxu0 %v737
    %v1065 = vpop.f32.mrb[0].mxu0
    %v1066 = vadd.f32 %v938, %v1065
    %v1067 = vpop.f32.mrb[0].mxu0
    %v1068 = vpop.f32.mrb[0].mxu0
    %v1069 = vadd.f32 %v938, %v1068
    %v1070 = vpop.f32.mrb[0].mxu0
    %1071 = vmatprep.mubr.bf16.mxu0 0
    %1072 = vmatmul.mubr.bf16.gmra.mrb[0].mxu0 %v740
    %v1073 = vpop.f32.mrb[0].mxu0
    %v1074 = vadd.f32 %v938, %v1073
    %v1075 = vpop.f32.mrb[0].mxu0
    %v1076 = vpop.f32.mrb[0].mxu0
    %v1077 = vadd.f32 %v938, %v1076
    %v1078 = vpop.f32.mrb[0].mxu0
    %1079 = vmatprep.mubr.bf16.mxu0 0
    %1080 = vmatmul.mubr.bf16.gmra.mrb[0].mxu0 %v743
    %v1081 = vpop.f32.mrb[0].mxu0
    %v1082 = vadd.f32 %v938, %v1081
    %v1083 = vpop.f32.mrb[0].mxu0
    %v1084 = vpop.f32.mrb[0].mxu0
    %v1085 = vadd.f32 %v938, %v1084
    %v1086 = vpop.f32.mrb[0].mxu0
    %1087 = vmatprep.mubr.bf16.mxu0 0
    %1088 = vmatmul.mubr.bf16.gmra.mrb[0].mxu0 %v746
    %v1089 = vpop.f32.mrb[0].mxu0
    %v1090 = vadd.f32 %v938, %v1089
    %v1091 = vpop.f32.mrb[0].mxu0
    %v1092 = vpop.f32.mrb[0].mxu0
    %v1093 = vadd.f32 %v938, %v1092
    %v1094 = vpop.f32.mrb[0].mxu0
    %1095 = vmatprep.mubr.bf16.mxu0 0
    %1096 = vmatmul.mubr.bf16.gmra.mrb[0].mxu0 %v749
    %v1097 = vpop.f32.mrb[0].mxu0
    %v1098 = vadd.f32 %v938, %v1097
    %v1099 = vpop.f32.mrb[0].mxu0
    %v1100 = vpop.f32.mrb[0].mxu0
    %v1101 = vadd.f32 %v938, %v1100
    %v1102 = vpop.f32.mrb[0].mxu0
    %1103 = vmatprep.mubr.bf16.mxu0 0
    %1104 = vmatmul.mubr.bf16.gmra.mrb[0].mxu0 %v752
    %v1105 = vpop.f32.mrb[0].mxu0
    %v1106 = vadd.f32 %v938, %v1105
    %v1107 = vpop.f32.mrb[0].mxu0
    %v1108 = vpop.f32.mrb[0].mxu0
    %v1109 = vadd.f32 %v938, %v1108
    %v1110 = vpop.f32.mrb[0].mxu0
    %1111 = vdwg.mxu0
    %v1112 = vpack.c.bf16 %v989, %v986
    %v1113 = vpack.c.bf16 %v997, %v994
    %v1114 = vpack.c.bf16 %v1005, %v1002
    %v1115 = vpack.c.bf16 %v1013, %v1010
    %v1116 = vpack.c.bf16 %v1021, %v1018
    %v1117 = vpack.c.bf16 %v1029, %v1026
    %v1118 = vpack.c.bf16 %v1037, %v1034
    %v1119 = vpack.c.bf16 %v1045, %v1042
    %v1120 = vpack.c.bf16 %v1053, %v1050
    %v1121 = vpack.c.bf16 %v1061, %v1058
    %v1122 = vpack.c.bf16 %v1069, %v1066
    %v1123 = vpack.c.bf16 %v1077, %v1074
    %v1124 = vpack.c.bf16 %v1085, %v1082
    %v1125 = vpack.c.bf16 %v1093, %v1090
    %v1126 = vpack.c.bf16 %v1101, %v1098
    %v1127 = vpack.c.bf16 %v1109, %v1106
    %v1128 = vld [vmem:[#allocation7] sm:$0xf]
    %v1129 = vld [vmem:[#allocation7 + $0x4] sm:$0xf]
    %v1130 = vld [vmem:[#allocation7 + $0x8] sm:$0xf]
    %v1131 = vld [vmem:[#allocation7 + $0xc] sm:$0xf]
    %v1132 = vlaneseq
    %v1133 = vshrl.u32 %v1132, 7
    %v1134 = vsub.s32 0, %v1133
    %v1135 = vrot.slane %v175, %v1134
    %v1140 = vunpack.c.l.b16 %v1128
    %v1141 = vunpack.c.l.b16 %v1129
    %v1142 = vunpack.c.l.b16 %v1130
    %v1143 = vunpack.c.l.b16 %v1131
    %v1144 = vpack.c.b16 %v1141, %v1140
    %v1145 = vpack.c.b16 %v1143, %v1142
    %1148 = vmatprep.subr.bf16.mxu0 0
    %1149 = vmatpush1.bf16.msra.mxu0 %v1144
    %1150 = vmatprep.subr.bf16.mxu0 0
    %1151 = vmatpush1.bf16.msra.mxu0 %v1145
    %1152 = vmatprep.subr.bf16.mxu0 0
    %1153 = vmatpush1.bf16.msra.mxu0 0
    %1154 = vmatprep.subr.bf16.mxu0 0
    %1155 = vmatpush1.bf16.msra.mxu0 0
    %1156 = vmatprep.subr.bf16.mxu0 0
    %1157 = vmatpush1.bf16.msra.mxu0 0
    %1158 = vmatprep.subr.bf16.mxu0 0
    %1159 = vmatpush1.bf16.msra.mxu0 0
    %1160 = vmatprep.subr.bf16.mxu0 0
    %1161 = vmatpush1.bf16.msra.mxu0 0
    %1162 = vmatprep.subr.bf16.mxu0 0
    %1163 = vmatpush1.bf16.msra.mxu0 0
    %1164 = vmatprep.subr.bf16.mxu0 0
    %1165 = vmatpush1.bf16.msra.mxu0 0
    %1166 = vmatprep.subr.bf16.mxu0 0
    %1167 = vmatpush1.bf16.msra.mxu0 0
    %1168 = vmatprep.subr.bf16.mxu0 0
    %1169 = vmatpush1.bf16.msra.mxu0 0
    %1170 = vmatprep.subr.bf16.mxu0 0
    %1171 = vmatpush1.bf16.msra.mxu0 0
    %1172 = vmatprep.subr.bf16.mxu0 0
    %1173 = vmatpush1.bf16.msra.mxu0 0
    %1174 = vmatprep.subr.bf16.mxu0 0
    %1175 = vmatpush1.bf16.msra.mxu0 0
    %1176 = vmatprep.subr.bf16.mxu0 0
    %1177 = vmatpush1.bf16.msra.mxu0 0
    %1178 = vmatprep.subr.bf16.mxu0 0
    %1179 = vmatpush1.bf16.msra.mxu0 0
    %1180 = vmatprep.mubr.bf16.mxu0 0
    %1181 = vmatmul.mubr.bf16.gmra.mrb[0].mxu0 %v707
    %v1182 = vpop.f32.mrb[0].mxu0
    %v1183 = vadd.f32 %v1135, %v1182
    %v1184 = vpop.f32.mrb[0].mxu0
    %v1185 = vpop.f32.mrb[0].mxu0
    %v1186 = vadd.f32 %v1135, %v1185
    %v1187 = vpop.f32.mrb[0].mxu0
    %1188 = vmatprep.mubr.bf16.mxu0 0
    %1189 = vmatmul.mubr.bf16.gmra.mrb[0].mxu0 %v710
    %v1190 = vpop.f32.mrb[0].mxu0
    %v1191 = vadd.f32 %v1135, %v1190
    %v1192 = vpop.f32.mrb[0].mxu0
    %v1193 = vpop.f32.mrb[0].mxu0
    %v1194 = vadd.f32 %v1135, %v1193
    %v1195 = vpop.f32.mrb[0].mxu0
    %1196 = vmatprep.mubr.bf16.mxu0 0
    %1197 = vmatmul.mubr.bf16.gmra.mrb[0].mxu0 %v713
    %v1198 = vpop.f32.mrb[0].mxu0
    %v1199 = vadd.f32 %v1135, %v1198
    %v1200 = vpop.f32.mrb[0].mxu0
    %v1201 = vpop.f32.mrb[0].mxu0
    %v1202 = vadd.f32 %v1135, %v1201
    %v1203 = vpop.f32.mrb[0].mxu0
    %1204 = vmatprep.mubr.bf16.mxu0 0
    %1205 = vmatmul.mubr.bf16.gmra.mrb[0].mxu0 %v716
    %v1206 = vpop.f32.mrb[0].mxu0
    %v1207 = vadd.f32 %v1135, %v1206
    %v1208 = vpop.f32.mrb[0].mxu0
    %v1209 = vpop.f32.mrb[0].mxu0
    %v1210 = vadd.f32 %v1135, %v1209
    %v1211 = vpop.f32.mrb[0].mxu0
    %1212 = vmatprep.mubr.bf16.mxu0 0
    %1213 = vmatmul.mubr.bf16.gmra.mrb[0].mxu0 %v719
    %v1214 = vpop.f32.mrb[0].mxu0
    %v1215 = vadd.f32 %v1135, %v1214
    %v1216 = vpop.f32.mrb[0].mxu0
    %v1217 = vpop.f32.mrb[0].mxu0
    %v1218 = vadd.f32 %v1135, %v1217
    %v1219 = vpop.f32.mrb[0].mxu0
    %1220 = vmatprep.mubr.bf16.mxu0 0
    %1221 = vmatmul.mubr.bf16.gmra.mrb[0].mxu0 %v722
    %v1222 = vpop.f32.mrb[0].mxu0
    %v1223 = vadd.f32 %v1135, %v1222
    %v1224 = vpop.f32.mrb[0].mxu0
    %v1225 = vpop.f32.mrb[0].mxu0
    %v1226 = vadd.f32 %v1135, %v1225
    %v1227 = vpop.f32.mrb[0].mxu0
    %1228 = vmatprep.mubr.bf16.mxu0 0
    %1229 = vmatmul.mubr.bf16.gmra.mrb[0].mxu0 %v725
    %v1230 = vpop.f32.mrb[0].mxu0
    %v1231 = vadd.f32 %v1135, %v1230
    %v1232 = vpop.f32.mrb[0].mxu0
    %v1233 = vpop.f32.mrb[0].mxu0
    %v1234 = vadd.f32 %v1135, %v1233
    %v1235 = vpop.f32.mrb[0].mxu0
    %1236 = vmatprep.mubr.bf16.mxu0 0
    %1237 = vmatmul.mubr.bf16.gmra.mrb[0].mxu0 %v728
    %v1238 = vpop.f32.mrb[0].mxu0
    %v1239 = vadd.f32 %v1135, %v1238
    %v1240 = vpop.f32.mrb[0].mxu0
    %v1241 = vpop.f32.mrb[0].mxu0
    %v1242 = vadd.f32 %v1135, %v1241
    %v1243 = vpop.f32.mrb[0].mxu0
    %1244 = vmatprep.mubr.bf16.mxu0 0
    %1245 = vmatmul.mubr.bf16.gmra.mrb[0].mxu0 %v731
    %v1246 = vpop.f32.mrb[0].mxu0
    %v1247 = vadd.f32 %v1135, %v1246
    %v1248 = vpop.f32.mrb[0].mxu0
    %v1249 = vpop.f32.mrb[0].mxu0
    %v1250 = vadd.f32 %v1135, %v1249
    %v1251 = vpop.f32.mrb[0].mxu0
    %1252 = vmatprep.mubr.bf16.mxu0 0
    %1253 = vmatmul.mubr.bf16.gmra.mrb[0].mxu0 %v734
    %v1254 = vpop.f32.mrb[0].mxu0
    %v1255 = vadd.f32 %v1135, %v1254
    %v1256 = vpop.f32.mrb[0].mxu0
    %v1257 = vpop.f32.mrb[0].mxu0
    %v1258 = vadd.f32 %v1135, %v1257
    %v1259 = vpop.f32.mrb[0].mxu0
    %1260 = vmatprep.mubr.bf16.mxu0 0
    %1261 = vmatmul.mubr.bf16.gmra.mrb[0].mxu0 %v737
    %v1262 = vpop.f32.mrb[0].mxu0
    %v1263 = vadd.f32 %v1135, %v1262
    %v1264 = vpop.f32.mrb[0].mxu0
    %v1265 = vpop.f32.mrb[0].mxu0
    %v1266 = vadd.f32 %v1135, %v1265
    %v1267 = vpop.f32.mrb[0].mxu0
    %1268 = vmatprep.mubr.bf16.mxu0 0
    %1269 = vmatmul.mubr.bf16.gmra.mrb[0].mxu0 %v740
    %v1270 = vpop.f32.mrb[0].mxu0
    %v1271 = vadd.f32 %v1135, %v1270
    %v1272 = vpop.f32.mrb[0].mxu0
    %v1273 = vpop.f32.mrb[0].mxu0
    %v1274 = vadd.f32 %v1135, %v1273
    %v1275 = vpop.f32.mrb[0].mxu0
    %1276 = vmatprep.mubr.bf16.mxu0 0
    %1277 = vmatmul.mubr.bf16.gmra.mrb[0].mxu0 %v743
    %v1278 = vpop.f32.mrb[0].mxu0
    %v1279 = vadd.f32 %v1135, %v1278
    %v1280 = vpop.f32.mrb[0].mxu0
    %v1281 = vpop.f32.mrb[0].mxu0
    %v1282 = vadd.f32 %v1135, %v1281
    %v1283 = vpop.f32.mrb[0].mxu0
    %1284 = vmatprep.mubr.bf16.mxu0 0
    %1285 = vmatmul.mubr.bf16.gmra.mrb[0].mxu0 %v746
    %v1286 = vpop.f32.mrb[0].mxu0
    %v1287 = vadd.f32 %v1135, %v1286
    %v1288 = vpop.f32.mrb[0].mxu0
    %v1289 = vpop.f32.mrb[0].mxu0
    %v1290 = vadd.f32 %v1135, %v1289
    %v1291 = vpop.f32.mrb[0].mxu0
    %1292 = vmatprep.mubr.bf16.mxu0 0
    %1293 = vmatmul.mubr.bf16.gmra.mrb[0].mxu0 %v749
    %v1294 = vpop.f32.mrb[0].mxu0
    %v1295 = vadd.f32 %v1135, %v1294
    %v1296 = vpop.f32.mrb[0].mxu0
    %v1297 = vpop.f32.mrb[0].mxu0
    %v1298 = vadd.f32 %v1135, %v1297
    %v1299 = vpop.f32.mrb[0].mxu0
    %1300 = vmatprep.mubr.bf16.mxu0 0
    %1301 = vmatmul.mubr.bf16.gmra.mrb[0].mxu0 %v752
    %v1302 = vpop.f32.mrb[0].mxu0
    %v1303 = vadd.f32 %v1135, %v1302
    %v1304 = vpop.f32.mrb[0].mxu0
    %v1305 = vpop.f32.mrb[0].mxu0
    %v1306 = vadd.f32 %v1135, %v1305
    %v1307 = vpop.f32.mrb[0].mxu0
    %1308 = vdwg.mxu0
    %v1309 = vpack.c.bf16 %v1186, %v1183
    %v1310 = vpack.c.bf16 %v1194, %v1191
    %v1311 = vpack.c.bf16 %v1202, %v1199
    %v1312 = vpack.c.bf16 %v1210, %v1207
    %v1313 = vpack.c.bf16 %v1218, %v1215
    %v1314 = vpack.c.bf16 %v1226, %v1223
    %v1315 = vpack.c.bf16 %v1234, %v1231
    %v1316 = vpack.c.bf16 %v1242, %v1239
    %v1317 = vpack.c.bf16 %v1250, %v1247
    %v1318 = vpack.c.bf16 %v1258, %v1255
    %v1319 = vpack.c.bf16 %v1266, %v1263
    %v1320 = vpack.c.bf16 %v1274, %v1271
    %v1321 = vpack.c.bf16 %v1282, %v1279
    %v1322 = vpack.c.bf16 %v1290, %v1287
    %v1323 = vpack.c.bf16 %v1298, %v1295
    %v1324 = vpack.c.bf16 %v1306, %v1303
    %v1325 = vld [vmem:[#allocation5] sm:$0xff]
    %v1326 = vld [vmem:[#allocation5 + $0x8] sm:$0xff]
    %v1327 = vld [vmem:[#allocation5 + $0x10] sm:$0xff]
    %v1328 = vld [vmem:[#allocation5 + $0x18] sm:$0xff]
    %v1329 = vld [vmem:[#allocation5 + $0x20] sm:$0xff]
    %v1330 = vld [vmem:[#allocation5 + $0x28] sm:$0xff]
    %v1331 = vld [vmem:[#allocation5 + $0x30] sm:$0xff]
    %v1332 = vld [vmem:[#allocation5 + $0x38] sm:$0xff]
    %v1333 = vld [vmem:[#allocation5 + $0x40] sm:$0xff]
    %v1334 = vld [vmem:[#allocation5 + $0x48] sm:$0xff]
    %v1335 = vld [vmem:[#allocation5 + $0x50] sm:$0xff]
    %v1336 = vld [vmem:[#allocation5 + $0x58] sm:$0xff]
    %v1337 = vld [vmem:[#allocation5 + $0x60] sm:$0xff]
    %v1338 = vld [vmem:[#allocation5 + $0x68] sm:$0xff]
    %v1339 = vld [vmem:[#allocation5 + $0x70] sm:$0xff]
    %v1340 = vld [vmem:[#allocation5 + $0x78] sm:$0xff]
    %v1341 = vld [vmem:[#allocation5 + $0x80] sm:$0xff]
    %v1342 = vld [vmem:[#allocation5 + $0x88] sm:$0xff]
    %v1343 = vld [vmem:[#allocation5 + $0x90] sm:$0xff]
    %v1344 = vld [vmem:[#allocation5 + $0x98] sm:$0xff]
    %v1345 = vld [vmem:[#allocation5 + $0xa0] sm:$0xff]
    %v1346 = vld [vmem:[#allocation5 + $0xa8] sm:$0xff]
    %v1347 = vld [vmem:[#allocation5 + $0xb0] sm:$0xff]
    %v1348 = vld [vmem:[#allocation5 + $0xb8] sm:$0xff]
    %v1349 = vld [vmem:[#allocation5 + $0xc0] sm:$0xff]
    %v1350 = vld [vmem:[#allocation5 + $0xc8] sm:$0xff]
    %v1351 = vld [vmem:[#allocation5 + $0xd0] sm:$0xff]
    %v1352 = vld [vmem:[#allocation5 + $0xd8] sm:$0xff]
    %v1353 = vld [vmem:[#allocation5 + $0xe0] sm:$0xff]
    %v1354 = vld [vmem:[#allocation5 + $0xe8] sm:$0xff]
    %v1355 = vld [vmem:[#allocation5 + $0xf0] sm:$0xff]
    %v1356 = vld [vmem:[#allocation5 + $0xf8] sm:$0xff]
    %v1357 = vld [vmem:[#allocation5 + $0x100] sm:$0xff]
    %v1358 = vld [vmem:[#allocation5 + $0x108] sm:$0xff]
    %v1359 = vld [vmem:[#allocation5 + $0x110] sm:$0xff]
    %v1360 = vld [vmem:[#allocation5 + $0x118] sm:$0xff]
    %v1361 = vld [vmem:[#allocation5 + $0x120] sm:$0xff]
    %v1362 = vld [vmem:[#allocation5 + $0x128] sm:$0xff]
    %v1363 = vld [vmem:[#allocation5 + $0x130] sm:$0xff]
    %v1364 = vld [vmem:[#allocation5 + $0x138] sm:$0xff]
    %v1365 = vld [vmem:[#allocation5 + $0x140] sm:$0xff]
    %v1366 = vld [vmem:[#allocation5 + $0x148] sm:$0xff]
    %v1367 = vld [vmem:[#allocation5 + $0x150] sm:$0xff]
    %v1368 = vld [vmem:[#allocation5 + $0x158] sm:$0xff]
    %v1369 = vld [vmem:[#allocation5 + $0x160] sm:$0xff]
    %v1370 = vld [vmem:[#allocation5 + $0x168] sm:$0xff]
    %v1371 = vld [vmem:[#allocation5 + $0x170] sm:$0xff]
    %v1372 = vld [vmem:[#allocation5 + $0x178] sm:$0xff]
    %v1373 = vld [vmem:[#allocation5 + $0x180] sm:$0xff]
    %v1374 = vld [vmem:[#allocation5 + $0x188] sm:$0xff]
    %v1375 = vld [vmem:[#allocation5 + $0x190] sm:$0xff]
    %v1376 = vld [vmem:[#allocation5 + $0x198] sm:$0xff]
    %v1377 = vld [vmem:[#allocation5 + $0x1a0] sm:$0xff]
    %v1378 = vld [vmem:[#allocation5 + $0x1a8] sm:$0xff]
    %v1379 = vld [vmem:[#allocation5 + $0x1b0] sm:$0xff]
    %v1380 = vld [vmem:[#allocation5 + $0x1b8] sm:$0xff]
    %v1381 = vld [vmem:[#allocation5 + $0x1c0] sm:$0xff]
    %v1382 = vld [vmem:[#allocation5 + $0x1c8] sm:$0xff]
    %v1383 = vld [vmem:[#allocation5 + $0x1d0] sm:$0xff]
    %v1384 = vld [vmem:[#allocation5 + $0x1d8] sm:$0xff]
    %v1385 = vld [vmem:[#allocation5 + $0x1e0] sm:$0xff]
    %v1386 = vld [vmem:[#allocation5 + $0x1e8] sm:$0xff]
    %v1387 = vld [vmem:[#allocation5 + $0x1f0] sm:$0xff]
    %v1388 = vld [vmem:[#allocation5 + $0x1f8] sm:$0xff]
    %v1390 = vsel %vm180, %v915, 0
    %v1393 = vsel %vm180, %v916, 0
    %v1396 = vsel %vm180, %v917, 0
    %v1399 = vsel %vm180, %v918, 0
    %v1402 = vsel %vm180, %v919, 0
    %v1405 = vsel %vm180, %v920, 0
    %v1408 = vsel %vm180, %v921, 0
    %v1411 = vsel %vm180, %v922, 0
    %v1414 = vsel %vm180, %v923, 0
    %v1417 = vsel %vm180, %v924, 0
    %v1420 = vsel %vm180, %v925, 0
    %v1423 = vsel %vm180, %v926, 0
    %v1426 = vsel %vm180, %v927, 0
    %v1429 = vsel %vm180, %v928, 0
    %v1432 = vsel %vm180, %v929, 0
    %v1435 = vsel %vm180, %v930, 0
    %v1438 = vsel %vm180, %v1112, 0
    %v1441 = vsel %vm180, %v1113, 0
    %v1444 = vsel %vm180, %v1114, 0
    %v1447 = vsel %vm180, %v1115, 0
    %v1450 = vsel %vm180, %v1116, 0
    %v1453 = vsel %vm180, %v1117, 0
    %v1456 = vsel %vm180, %v1118, 0
    %v1459 = vsel %vm180, %v1119, 0
    %v1462 = vsel %vm180, %v1120, 0
    %v1465 = vsel %vm180, %v1121, 0
    %v1468 = vsel %vm180, %v1122, 0
    %v1471 = vsel %vm180, %v1123, 0
    %v1474 = vsel %vm180, %v1124, 0
    %v1477 = vsel %vm180, %v1125, 0
    %v1480 = vsel %vm180, %v1126, 0
    %v1483 = vsel %vm180, %v1127, 0
    %1485 = vmatprep.subr.bf16.mxu0 0
    %1486 = vmatpush1.bf16.xpose.msra.mxu0 %v1438
    %1487 = vmatprep.subr.bf16.mxu0 0
    %1488 = vmatpush1.bf16.xpose.msra.mxu0 %v1441
    %1489 = vmatprep.subr.bf16.mxu0 0
    %1490 = vmatpush1.bf16.xpose.msra.mxu0 %v1444
    %1491 = vmatprep.subr.bf16.mxu0 0
    %1492 = vmatpush1.bf16.xpose.msra.mxu0 %v1447
    %1493 = vmatprep.subr.bf16.mxu0 0
    %1494 = vmatpush1.bf16.xpose.msra.mxu0 %v1450
    %1495 = vmatprep.subr.bf16.mxu0 0
    %1496 = vmatpush1.bf16.xpose.msra.mxu0 %v1453
    %1497 = vmatprep.subr.bf16.mxu0 0
    %1498 = vmatpush1.bf16.xpose.msra.mxu0 %v1456
    %1499 = vmatprep.subr.bf16.mxu0 0
    %1500 = vmatpush1.bf16.xpose.msra.mxu0 %v1459
    %1501 = vmatprep.subr.bf16.mxu0 0
    %1502 = vmatpush1.bf16.xpose.msra.mxu0 %v1462
    %1503 = vmatprep.subr.bf16.mxu0 0
    %1504 = vmatpush1.bf16.xpose.msra.mxu0 %v1465
    %1505 = vmatprep.subr.bf16.mxu0 0
    %1506 = vmatpush1.bf16.xpose.msra.mxu0 %v1468
    %1507 = vmatprep.subr.bf16.mxu0 0
    %1508 = vmatpush1.bf16.xpose.msra.mxu0 %v1471
    %1509 = vmatprep.subr.bf16.mxu0 0
    %1510 = vmatpush1.bf16.xpose.msra.mxu0 %v1474
    %1511 = vmatprep.subr.bf16.mxu0 0
    %1512 = vmatpush1.bf16.xpose.msra.mxu0 %v1477
    %1513 = vmatprep.subr.bf16.mxu0 0
    %1514 = vmatpush1.bf16.xpose.msra.mxu0 %v1480
    %1515 = vmatprep.subr.bf16.mxu0 0
    %1516 = vmatpush1.bf16.xpose.msra.mxu0 %v1483
    %1517 = vmatprep.mubr.bf16.mxu0 0
    %1518 = vmatmul.mubr.bf16.gmra.mrb[0].mxu0 %v1390
    %v1519 = vpop.f32.mrb[0].mxu0
    %v1520 = vadd.f32 %v1325, %v1519
    %v1521 = vpop.f32.mrb[0].mxu0
    %v1522 = vadd.f32 %v1326, %v1521
    %v1523 = vpop.f32.mrb[0].mxu0
    %v1524 = vadd.f32 %v1327, %v1523
    %v1525 = vpop.f32.mrb[0].mxu0
    %v1526 = vadd.f32 %v1328, %v1525
    %1527 = vmatprep.mubr.bf16.mxu0 0
    %1528 = vmatmul.mubr.bf16.gmra.mrb[0].mxu0 %v1393
    %v1529 = vpop.f32.mrb[0].mxu0
    %v1530 = vadd.f32 %v1329, %v1529
    %v1531 = vpop.f32.mrb[0].mxu0
    %v1532 = vadd.f32 %v1330, %v1531
    %v1533 = vpop.f32.mrb[0].mxu0
    %v1534 = vadd.f32 %v1331, %v1533
    %v1535 = vpop.f32.mrb[0].mxu0
    %v1536 = vadd.f32 %v1332, %v1535
    %1537 = vmatprep.mubr.bf16.mxu0 0
    %1538 = vmatmul.mubr.bf16.gmra.mrb[0].mxu0 %v1396
    %v1539 = vpop.f32.mrb[0].mxu0
    %v1540 = vadd.f32 %v1333, %v1539
    %v1541 = vpop.f32.mrb[0].mxu0
    %v1542 = vadd.f32 %v1334, %v1541
    %v1543 = vpop.f32.mrb[0].mxu0
    %v1544 = vadd.f32 %v1335, %v1543
    %v1545 = vpop.f32.mrb[0].mxu0
    %v1546 = vadd.f32 %v1336, %v1545
    %1547 = vmatprep.mubr.bf16.mxu0 0
    %1548 = vmatmul.mubr.bf16.gmra.mrb[0].mxu0 %v1399
    %v1549 = vpop.f32.mrb[0].mxu0
    %v1550 = vadd.f32 %v1337, %v1549
    %v1551 = vpop.f32.mrb[0].mxu0
    %v1552 = vadd.f32 %v1338, %v1551
    %v1553 = vpop.f32.mrb[0].mxu0
    %v1554 = vadd.f32 %v1339, %v1553
    %v1555 = vpop.f32.mrb[0].mxu0
    %v1556 = vadd.f32 %v1340, %v1555
    %1557 = vmatprep.mubr.bf16.mxu0 0
    %1558 = vmatmul.mubr.bf16.gmra.mrb[0].mxu0 %v1402
    %v1559 = vpop.f32.mrb[0].mxu0
    %v1560 = vadd.f32 %v1341, %v1559
    %v1561 = vpop.f32.mrb[0].mxu0
    %v1562 = vadd.f32 %v1342, %v1561
    %v1563 = vpop.f32.mrb[0].mxu0
    %v1564 = vadd.f32 %v1343, %v1563
    %v1565 = vpop.f32.mrb[0].mxu0
    %v1566 = vadd.f32 %v1344, %v1565
    %1567 = vmatprep.mubr.bf16.mxu0 0
    %1568 = vmatmul.mubr.bf16.gmra.mrb[0].mxu0 %v1405
    %v1569 = vpop.f32.mrb[0].mxu0
    %v1570 = vadd.f32 %v1345, %v1569
    %v1571 = vpop.f32.mrb[0].mxu0
    %v1572 = vadd.f32 %v1346, %v1571
    %v1573 = vpop.f32.mrb[0].mxu0
    %v1574 = vadd.f32 %v1347, %v1573
    %v1575 = vpop.f32.mrb[0].mxu0
    %v1576 = vadd.f32 %v1348, %v1575
    %1577 = vmatprep.mubr.bf16.mxu0 0
    %1578 = vmatmul.mubr.bf16.gmra.mrb[0].mxu0 %v1408
    %v1579 = vpop.f32.mrb[0].mxu0
    %v1580 = vadd.f32 %v1349, %v1579
    %v1581 = vpop.f32.mrb[0].mxu0
    %v1582 = vadd.f32 %v1350, %v1581
    %v1583 = vpop.f32.mrb[0].mxu0
    %v1584 = vadd.f32 %v1351, %v1583
    %v1585 = vpop.f32.mrb[0].mxu0
    %v1586 = vadd.f32 %v1352, %v1585
    %1587 = vmatprep.mubr.bf16.mxu0 0
    %1588 = vmatmul.mubr.bf16.gmra.mrb[0].mxu0 %v1411
    %v1589 = vpop.f32.mrb[0].mxu0
    %v1590 = vadd.f32 %v1353, %v1589
    %v1591 = vpop.f32.mrb[0].mxu0
    %v1592 = vadd.f32 %v1354, %v1591
    %v1593 = vpop.f32.mrb[0].mxu0
    %v1594 = vadd.f32 %v1355, %v1593
    %v1595 = vpop.f32.mrb[0].mxu0
    %v1596 = vadd.f32 %v1356, %v1595
    %1597 = vmatprep.mubr.bf16.mxu0 0
    %1598 = vmatmul.mubr.bf16.gmra.mrb[0].mxu0 %v1414
    %v1599 = vpop.f32.mrb[0].mxu0
    %v1600 = vadd.f32 %v1357, %v1599
    %v1601 = vpop.f32.mrb[0].mxu0
    %v1602 = vadd.f32 %v1358, %v1601
    %v1603 = vpop.f32.mrb[0].mxu0
    %v1604 = vadd.f32 %v1359, %v1603
    %v1605 = vpop.f32.mrb[0].mxu0
    %v1606 = vadd.f32 %v1360, %v1605
    %1607 = vmatprep.mubr.bf16.mxu0 0
    %1608 = vmatmul.mubr.bf16.gmra.mrb[0].mxu0 %v1417
    %v1609 = vpop.f32.mrb[0].mxu0
    %v1610 = vadd.f32 %v1361, %v1609
    %v1611 = vpop.f32.mrb[0].mxu0
    %v1612 = vadd.f32 %v1362, %v1611
    %v1613 = vpop.f32.mrb[0].mxu0
    %v1614 = vadd.f32 %v1363, %v1613
    %v1615 = vpop.f32.mrb[0].mxu0
    %v1616 = vadd.f32 %v1364, %v1615
    %1617 = vmatprep.mubr.bf16.mxu0 0
    %1618 = vmatmul.mubr.bf16.gmra.mrb[0].mxu0 %v1420
    %v1619 = vpop.f32.mrb[0].mxu0
    %v1620 = vadd.f32 %v1365, %v1619
    %v1621 = vpop.f32.mrb[0].mxu0
    %v1622 = vadd.f32 %v1366, %v1621
    %v1623 = vpop.f32.mrb[0].mxu0
    %v1624 = vadd.f32 %v1367, %v1623
    %v1625 = vpop.f32.mrb[0].mxu0
    %v1626 = vadd.f32 %v1368, %v1625
    %1627 = vmatprep.mubr.bf16.mxu0 0
    %1628 = vmatmul.mubr.bf16.gmra.mrb[0].mxu0 %v1423
    %v1629 = vpop.f32.mrb[0].mxu0
    %v1630 = vadd.f32 %v1369, %v1629
    %v1631 = vpop.f32.mrb[0].mxu0
    %v1632 = vadd.f32 %v1370, %v1631
    %v1633 = vpop.f32.mrb[0].mxu0
    %v1634 = vadd.f32 %v1371, %v1633
    %v1635 = vpop.f32.mrb[0].mxu0
    %v1636 = vadd.f32 %v1372, %v1635
    %1637 = vmatprep.mubr.bf16.mxu0 0
    %1638 = vmatmul.mubr.bf16.gmra.mrb[0].mxu0 %v1426
    %v1639 = vpop.f32.mrb[0].mxu0
    %v1640 = vadd.f32 %v1373, %v1639
    %v1641 = vpop.f32.mrb[0].mxu0
    %v1642 = vadd.f32 %v1374, %v1641
    %v1643 = vpop.f32.mrb[0].mxu0
    %v1644 = vadd.f32 %v1375, %v1643
    %v1645 = vpop.f32.mrb[0].mxu0
    %v1646 = vadd.f32 %v1376, %v1645
    %1647 = vmatprep.mubr.bf16.mxu0 0
    %1648 = vmatmul.mubr.bf16.gmra.mrb[0].mxu0 %v1429
    %v1649 = vpop.f32.mrb[0].mxu0
    %v1650 = vadd.f32 %v1377, %v1649
    %v1651 = vpop.f32.mrb[0].mxu0
    %v1652 = vadd.f32 %v1378, %v1651
    %v1653 = vpop.f32.mrb[0].mxu0
    %v1654 = vadd.f32 %v1379, %v1653
    %v1655 = vpop.f32.mrb[0].mxu0
    %v1656 = vadd.f32 %v1380, %v1655
    %1657 = vmatprep.mubr.bf16.mxu0 0
    %1658 = vmatmul.mubr.bf16.gmra.mrb[0].mxu0 %v1432
    %v1659 = vpop.f32.mrb[0].mxu0
    %v1660 = vadd.f32 %v1381, %v1659
    %v1661 = vpop.f32.mrb[0].mxu0
    %v1662 = vadd.f32 %v1382, %v1661
    %v1663 = vpop.f32.mrb[0].mxu0
    %v1664 = vadd.f32 %v1383, %v1663
    %v1665 = vpop.f32.mrb[0].mxu0
    %v1666 = vadd.f32 %v1384, %v1665
    %1667 = vmatprep.mubr.bf16.mxu0 0
    %1668 = vmatmul.mubr.bf16.gmra.mrb[0].mxu0 %v1435
    %v1669 = vpop.f32.mrb[0].mxu0
    %v1670 = vadd.f32 %v1385, %v1669
    %v1671 = vpop.f32.mrb[0].mxu0
    %v1672 = vadd.f32 %v1386, %v1671
    %v1673 = vpop.f32.mrb[0].mxu0
    %v1674 = vadd.f32 %v1387, %v1673
    %v1675 = vpop.f32.mrb[0].mxu0
    %v1676 = vadd.f32 %v1388, %v1675
    %1677 = vdwg.mxu0
    %v1678 = vmax.f32 %v1520, %v1522
    %1679 = vmax.xlane.f32.xlu0 %v1678
    %v1680 = vpop.xlane.xlu0 %1679
    %v1681 = vmax.f32 %v1524, %v1526
    %1682 = vmax.xlane.f32.xlu0 %v1681
    %v1683 = vpop.xlane.xlu0 %1682
    %v1684 = vmax.f32 %v1530, %v1532
    %1685 = vmax.xlane.f32.xlu0 %v1684
    %v1686 = vpop.xlane.xlu0 %1685
    %v1687 = vmax.f32 %v1534, %v1536
    %1688 = vmax.xlane.f32.xlu0 %v1687
    %v1689 = vpop.xlane.xlu0 %1688
    %v1690 = vmax.f32 %v1540, %v1542
    %1691 = vmax.xlane.f32.xlu0 %v1690
    %v1692 = vpop.xlane.xlu0 %1691
    %v1693 = vmax.f32 %v1544, %v1546
    %1694 = vmax.xlane.f32.xlu0 %v1693
    %v1695 = vpop.xlane.xlu0 %1694
    %v1696 = vmax.f32 %v1550, %v1552
    %1697 = vmax.xlane.f32.xlu0 %v1696
    %v1698 = vpop.xlane.xlu0 %1697
    %v1699 = vmax.f32 %v1554, %v1556
    %1700 = vmax.xlane.f32.xlu0 %v1699
    %v1701 = vpop.xlane.xlu0 %1700
    %v1702 = vmax.f32 %v1560, %v1562
    %1703 = vmax.xlane.f32.xlu0 %v1702
    %v1704 = vpop.xlane.xlu0 %1703
    %v1705 = vmax.f32 %v1564, %v1566
    %1706 = vmax.xlane.f32.xlu0 %v1705
    %v1707 = vpop.xlane.xlu0 %1706
    %v1708 = vmax.f32 %v1570, %v1572
    %1709 = vmax.xlane.f32.xlu0 %v1708
    %v1710 = vpop.xlane.xlu0 %1709
    %v1711 = vmax.f32 %v1574, %v1576
    %1712 = vmax.xlane.f32.xlu0 %v1711
    %v1713 = vpop.xlane.xlu0 %1712
    %v1714 = vmax.f32 %v1580, %v1582
    %1715 = vmax.xlane.f32.xlu0 %v1714
    %v1716 = vpop.xlane.xlu0 %1715
    %v1717 = vmax.f32 %v1584, %v1586
    %1718 = vmax.xlane.f32.xlu0 %v1717
    %v1719 = vpop.xlane.xlu0 %1718
    %v1720 = vmax.f32 %v1590, %v1592
    %1721 = vmax.xlane.f32.xlu0 %v1720
    %v1722 = vpop.xlane.xlu0 %1721
    %v1723 = vmax.f32 %v1594, %v1596
    %1724 = vmax.xlane.f32.xlu0 %v1723
    %v1725 = vpop.xlane.xlu0 %1724
    %v1726 = vmax.f32 %v1600, %v1602
    %1727 = vmax.xlane.f32.xlu0 %v1726
    %v1728 = vpop.xlane.xlu0 %1727
    %v1729 = vmax.f32 %v1604, %v1606
    %1730 = vmax.xlane.f32.xlu0 %v1729
    %v1731 = vpop.xlane.xlu0 %1730
    %v1732 = vmax.f32 %v1610, %v1612
    %1733 = vmax.xlane.f32.xlu0 %v1732
    %v1734 = vpop.xlane.xlu0 %1733
    %v1735 = vmax.f32 %v1614, %v1616
    %1736 = vmax.xlane.f32.xlu0 %v1735
    %v1737 = vpop.xlane.xlu0 %1736
    %v1738 = vmax.f32 %v1620, %v1622
    %1739 = vmax.xlane.f32.xlu0 %v1738
    %v1740 = vpop.xlane.xlu0 %1739
    %v1741 = vmax.f32 %v1624, %v1626
    %1742 = vmax.xlane.f32.xlu0 %v1741
    %v1743 = vpop.xlane.xlu0 %1742
    %v1744 = vmax.f32 %v1630, %v1632
    %1745 = vmax.xlane.f32.xlu0 %v1744
    %v1746 = vpop.xlane.xlu0 %1745
    %v1747 = vmax.f32 %v1634, %v1636
    %1748 = vmax.xlane.f32.xlu0 %v1747
    %v1749 = vpop.xlane.xlu0 %1748
    %v1750 = vmax.f32 %v1640, %v1642
    %1751 = vmax.xlane.f32.xlu0 %v1750
    %v1752 = vpop.xlane.xlu0 %1751
    %v1753 = vmax.f32 %v1644, %v1646
    %1754 = vmax.xlane.f32.xlu0 %v1753
    %v1755 = vpop.xlane.xlu0 %1754
    %v1756 = vmax.f32 %v1650, %v1652
    %1757 = vmax.xlane.f32.xlu0 %v1756
    %v1758 = vpop.xlane.xlu0 %1757
    %v1759 = vmax.f32 %v1654, %v1656
    %1760 = vmax.xlane.f32.xlu0 %v1759
    %v1761 = vpop.xlane.xlu0 %1760
    %v1762 = vmax.f32 %v1660, %v1662
    %1763 = vmax.xlane.f32.xlu0 %v1762
    %v1764 = vpop.xlane.xlu0 %1763
    %v1765 = vmax.f32 %v1664, %v1666
    %1766 = vmax.xlane.f32.xlu0 %v1765
    %v1767 = vpop.xlane.xlu0 %1766
    %v1768 = vmax.f32 %v1670, %v1672
    %1769 = vmax.xlane.f32.xlu0 %v1768
    %v1770 = vpop.xlane.xlu0 %1769
    %v1771 = vmax.f32 %v1674, %v1676
    %1772 = vmax.xlane.f32.xlu0 %v1771
    %v1773 = vpop.xlane.xlu0 %1772
    %v1774 = vsub.f32 %v1520, %v1680
    %v1775 = vsub.f32 %v1522, %v1680
    %v1776 = vsub.f32 %v1524, %v1683
    %v1777 = vsub.f32 %v1526, %v1683
    %v1778 = vsub.f32 %v1530, %v1686
    %v1779 = vsub.f32 %v1532, %v1686
    %v1780 = vsub.f32 %v1534, %v1689
    %v1781 = vsub.f32 %v1536, %v1689
    %v1782 = vsub.f32 %v1540, %v1692
    %v1783 = vsub.f32 %v1542, %v1692
    %v1784 = vsub.f32 %v1544, %v1695
    %v1785 = vsub.f32 %v1546, %v1695
    %v1786 = vsub.f32 %v1550, %v1698
    %v1787 = vsub.f32 %v1552, %v1698
    %v1788 = vsub.f32 %v1554, %v1701
    %v1789 = vsub.f32 %v1556, %v1701
    %v1790 = vsub.f32 %v1560, %v1704
    %v1791 = vsub.f32 %v1562, %v1704
    %v1792 = vsub.f32 %v1564, %v1707
    %v1793 = vsub.f32 %v1566, %v1707
    %v1794 = vsub.f32 %v1570, %v1710
    %v1795 = vsub.f32 %v1572, %v1710
    %v1796 = vsub.f32 %v1574, %v1713
    %v1797 = vsub.f32 %v1576, %v1713
    %v1798 = vsub.f32 %v1580, %v1716
    %v1799 = vsub.f32 %v1582, %v1716
    %v1800 = vsub.f32 %v1584, %v1719
    %v1801 = vsub.f32 %v1586, %v1719
    %v1802 = vsub.f32 %v1590, %v1722
    %v1803 = vsub.f32 %v1592, %v1722
    %v1804 = vsub.f32 %v1594, %v1725
    %v1805 = vsub.f32 %v1596, %v1725
    %v1806 = vsub.f32 %v1600, %v1728
    %v1807 = vsub.f32 %v1602, %v1728
    %v1808 = vsub.f32 %v1604, %v1731
    %v1809 = vsub.f32 %v1606, %v1731
    %v1810 = vsub.f32 %v1610, %v1734
    %v1811 = vsub.f32 %v1612, %v1734
    %v1812 = vsub.f32 %v1614, %v1737
    %v1813 = vsub.f32 %v1616, %v1737
    %v1814 = vsub.f32 %v1620, %v1740
    %v1815 = vsub.f32 %v1622, %v1740
    %v1816 = vsub.f32 %v1624, %v1743
    %v1817 = vsub.f32 %v1626, %v1743
    %v1818 = vsub.f32 %v1630, %v1746
    %v1819 = vsub.f32 %v1632, %v1746
    %v1820 = vsub.f32 %v1634, %v1749
    %v1821 = vsub.f32 %v1636, %v1749
    %v1822 = vsub.f32 %v1640, %v1752
    %v1823 = vsub.f32 %v1642, %v1752
    %v1824 = vsub.f32 %v1644, %v1755
    %v1825 = vsub.f32 %v1646, %v1755
    %v1826 = vsub.f32 %v1650, %v1758
    %v1827 = vsub.f32 %v1652, %v1758
    %v1828 = vsub.f32 %v1654, %v1761
    %v1829 = vsub.f32 %v1656, %v1761
    %v1830 = vsub.f32 %v1660, %v1764
    %v1831 = vsub.f32 %v1662, %v1764
    %v1832 = vsub.f32 %v1664, %v1767
    %v1833 = vsub.f32 %v1666, %v1767
    %v1834 = vsub.f32 %v1670, %v1770
    %v1835 = vsub.f32 %v1672, %v1770
    %v1836 = vsub.f32 %v1674, %v1773
    %v1837 = vsub.f32 %v1676, %v1773
    %v1838 = vmul.f32 %v1774, 1.442695
    %v1839 = vpow.pop %v1838
    %v1840 = vmul.f32 %v1775, 1.442695
    %v1841 = vpow.pop %v1840
    %v1842 = vmul.f32 %v1776, 1.442695
    %v1843 = vpow.pop %v1842
    %v1844 = vmul.f32 %v1777, 1.442695
    %v1845 = vpow.pop %v1844
    %v1846 = vmul.f32 %v1778, 1.442695
    %v1847 = vpow.pop %v1846
    %v1848 = vmul.f32 %v1779, 1.442695
    %v1849 = vpow.pop %v1848
    %v1850 = vmul.f32 %v1780, 1.442695
    %v1851 = vpow.pop %v1850
    %v1852 = vmul.f32 %v1781, 1.442695
    %v1853 = vpow.pop %v1852
    %v1854 = vmul.f32 %v1782, 1.442695
    %v1855 = vpow.pop %v1854
    %v1856 = vmul.f32 %v1783, 1.442695
    %v1857 = vpow.pop %v1856
    %v1858 = vmul.f32 %v1784, 1.442695
    %v1859 = vpow.pop %v1858
    %v1860 = vmul.f32 %v1785, 1.442695
    %v1861 = vpow.pop %v1860
    %v1862 = vmul.f32 %v1786, 1.442695
    %v1863 = vpow.pop %v1862
    %v1864 = vmul.f32 %v1787, 1.442695
    %v1865 = vpow.pop %v1864
    %v1866 = vmul.f32 %v1788, 1.442695
    %v1867 = vpow.pop %v1866
    %v1868 = vmul.f32 %v1789, 1.442695
    %v1869 = vpow.pop %v1868
    %v1870 = vmul.f32 %v1790, 1.442695
    %v1871 = vpow.pop %v1870
    %v1872 = vmul.f32 %v1791, 1.442695
    %v1873 = vpow.pop %v1872
    %v1874 = vmul.f32 %v1792, 1.442695
    %v1875 = vpow.pop %v1874
    %v1876 = vmul.f32 %v1793, 1.442695
    %v1877 = vpow.pop %v1876
    %v1878 = vmul.f32 %v1794, 1.442695
    %v1879 = vpow.pop %v1878
    %v1880 = vmul.f32 %v1795, 1.442695
    %v1881 = vpow.pop %v1880
    %v1882 = vmul.f32 %v1796, 1.442695
    %v1883 = vpow.pop %v1882
    %v1884 = vmul.f32 %v1797, 1.442695
    %v1885 = vpow.pop %v1884
    %v1886 = vmul.f32 %v1798, 1.442695
    %v1887 = vpow.pop %v1886
    %v1888 = vmul.f32 %v1799, 1.442695
    %v1889 = vpow.pop %v1888
    %v1890 = vmul.f32 %v1800, 1.442695
    %v1891 = vpow.pop %v1890
    %v1892 = vmul.f32 %v1801, 1.442695
    %v1893 = vpow.pop %v1892
    %v1894 = vmul.f32 %v1802, 1.442695
    %v1895 = vpow.pop %v1894
    %v1896 = vmul.f32 %v1803, 1.442695
    %v1897 = vpow.pop %v1896
    %v1898 = vmul.f32 %v1804, 1.442695
    %v1899 = vpow.pop %v1898
    %v1900 = vmul.f32 %v1805, 1.442695
    %v1901 = vpow.pop %v1900
    %v1902 = vmul.f32 %v1806, 1.442695
    %v1903 = vpow.pop %v1902
    %v1904 = vmul.f32 %v1807, 1.442695
    %v1905 = vpow.pop %v1904
    %v1906 = vmul.f32 %v1808, 1.442695
    %v1907 = vpow.pop %v1906
    %v1908 = vmul.f32 %v1809, 1.442695
    %v1909 = vpow.pop %v1908
    %v1910 = vmul.f32 %v1810, 1.442695
    %v1911 = vpow.pop %v1910
    %v1912 = vmul.f32 %v1811, 1.442695
    %v1913 = vpow.pop %v1912
    %v1914 = vmul.f32 %v1812, 1.442695
    %v1915 = vpow.pop %v1914
    %v1916 = vmul.f32 %v1813, 1.442695
    %v1917 = vpow.pop %v1916
    %v1918 = vmul.f32 %v1814, 1.442695
    %v1919 = vpow.pop %v1918
    %v1920 = vmul.f32 %v1815, 1.442695
    %v1921 = vpow.pop %v1920
    %v1922 = vmul.f32 %v1816, 1.442695
    %v1923 = vpow.pop %v1922
    %v1924 = vmul.f32 %v1817, 1.442695
    %v1925 = vpow.pop %v1924
    %v1926 = vmul.f32 %v1818, 1.442695
    %v1927 = vpow.pop %v1926
    %v1928 = vmul.f32 %v1819, 1.442695
    %v1929 = vpow.pop %v1928
    %v1930 = vmul.f32 %v1820, 1.442695
    %v1931 = vpow.pop %v1930
    %v1932 = vmul.f32 %v1821, 1.442695
    %v1933 = vpow.pop %v1932
    %v1934 = vmul.f32 %v1822, 1.442695
    %v1935 = vpow.pop %v1934
    %v1936 = vmul.f32 %v1823, 1.442695
    %v1937 = vpow.pop %v1936
    %v1938 = vmul.f32 %v1824, 1.442695
    %v1939 = vpow.pop %v1938
    %v1940 = vmul.f32 %v1825, 1.442695
    %v1941 = vpow.pop %v1940
    %v1942 = vmul.f32 %v1826, 1.442695
    %v1943 = vpow.pop %v1942
    %v1944 = vmul.f32 %v1827, 1.442695
    %v1945 = vpow.pop %v1944
    %v1946 = vmul.f32 %v1828, 1.442695
    %v1947 = vpow.pop %v1946
    %v1948 = vmul.f32 %v1829, 1.442695
    %v1949 = vpow.pop %v1948
    %v1950 = vmul.f32 %v1830, 1.442695
    %v1951 = vpow.pop %v1950
    %v1952 = vmul.f32 %v1831, 1.442695
    %v1953 = vpow.pop %v1952
    %v1954 = vmul.f32 %v1832, 1.442695
    %v1955 = vpow.pop %v1954
    %v1956 = vmul.f32 %v1833, 1.442695
    %v1957 = vpow.pop %v1956
    %v1958 = vmul.f32 %v1834, 1.442695
    %v1959 = vpow.pop %v1958
    %v1960 = vmul.f32 %v1835, 1.442695
    %v1961 = vpow.pop %v1960
    %v1962 = vmul.f32 %v1836, 1.442695
    %v1963 = vpow.pop %v1962
    %v1964 = vmul.f32 %v1837, 1.442695
    %v1965 = vpow.pop %v1964
    %v1966 = vadd.f32 %v1839, %v1841
    %1967 = vadd.xlane.f32.xlu0 %v1966
    %v1968 = vpop.xlane.xlu0 %1967
    %v1969 = vadd.f32 %v1843, %v1845
    %1970 = vadd.xlane.f32.xlu0 %v1969
    %v1971 = vpop.xlane.xlu0 %1970
    %v1972 = vadd.f32 %v1847, %v1849
    %1973 = vadd.xlane.f32.xlu0 %v1972
    %v1974 = vpop.xlane.xlu0 %1973
    %v1975 = vadd.f32 %v1851, %v1853
    %1976 = vadd.xlane.f32.xlu0 %v1975
    %v1977 = vpop.xlane.xlu0 %1976
    %v1978 = vadd.f32 %v1855, %v1857
    %1979 = vadd.xlane.f32.xlu0 %v1978
    %v1980 = vpop.xlane.xlu0 %1979
    %v1981 = vadd.f32 %v1859, %v1861
    %1982 = vadd.xlane.f32.xlu0 %v1981
    %v1983 = vpop.xlane.xlu0 %1982
    %v1984 = vadd.f32 %v1863, %v1865
    %1985 = vadd.xlane.f32.xlu0 %v1984
    %v1986 = vpop.xlane.xlu0 %1985
    %v1987 = vadd.f32 %v1867, %v1869
    %1988 = vadd.xlane.f32.xlu0 %v1987
    %v1989 = vpop.xlane.xlu0 %1988
    %v1990 = vadd.f32 %v1871, %v1873
    %1991 = vadd.xlane.f32.xlu0 %v1990
    %v1992 = vpop.xlane.xlu0 %1991
    %v1993 = vadd.f32 %v1875, %v1877
    %1994 = vadd.xlane.f32.xlu0 %v1993
    %v1995 = vpop.xlane.xlu0 %1994
    %v1996 = vadd.f32 %v1879, %v1881
    %1997 = vadd.xlane.f32.xlu0 %v1996
    %v1998 = vpop.xlane.xlu0 %1997
    %v1999 = vadd.f32 %v1883, %v1885
    %2000 = vadd.xlane.f32.xlu0 %v1999
    %v2001 = vpop.xlane.xlu0 %2000
    %v2002 = vadd.f32 %v1887, %v1889
    %2003 = vadd.xlane.f32.xlu0 %v2002
    %v2004 = vpop.xlane.xlu0 %2003
    %v2005 = vadd.f32 %v1891, %v1893
    %2006 = vadd.xlane.f32.xlu0 %v2005
    %v2007 = vpop.xlane.xlu0 %2006
    %v2008 = vadd.f32 %v1895, %v1897
    %2009 = vadd.xlane.f32.xlu0 %v2008
    %v2010 = vpop.xlane.xlu0 %2009
    %v2011 = vadd.f32 %v1899, %v1901
    %2012 = vadd.xlane.f32.xlu0 %v2011
    %v2013 = vpop.xlane.xlu0 %2012
    %v2014 = vadd.f32 %v1903, %v1905
    %2015 = vadd.xlane.f32.xlu0 %v2014
    %v2016 = vpop.xlane.xlu0 %2015
    %v2017 = vadd.f32 %v1907, %v1909
    %2018 = vadd.xlane.f32.xlu0 %v2017
    %v2019 = vpop.xlane.xlu0 %2018
    %v2020 = vadd.f32 %v1911, %v1913
    %2021 = vadd.xlane.f32.xlu0 %v2020
    %v2022 = vpop.xlane.xlu0 %2021
    %v2023 = vadd.f32 %v1915, %v1917
    %2024 = vadd.xlane.f32.xlu0 %v2023
    %v2025 = vpop.xlane.xlu0 %2024
    %v2026 = vadd.f32 %v1919, %v1921
    %2027 = vadd.xlane.f32.xlu0 %v2026
    %v2028 = vpop.xlane.xlu0 %2027
    %v2029 = vadd.f32 %v1923, %v1925
    %2030 = vadd.xlane.f32.xlu0 %v2029
    %v2031 = vpop.xlane.xlu0 %2030
    %v2032 = vadd.f32 %v1927, %v1929
    %2033 = vadd.xlane.f32.xlu0 %v2032
    %v2034 = vpop.xlane.xlu0 %2033
    %v2035 = vadd.f32 %v1931, %v1933
    %2036 = vadd.xlane.f32.xlu0 %v2035
    %v2037 = vpop.xlane.xlu0 %2036
    %v2038 = vadd.f32 %v1935, %v1937
    %2039 = vadd.xlane.f32.xlu0 %v2038
    %v2040 = vpop.xlane.xlu0 %2039
    %v2041 = vadd.f32 %v1939, %v1941
    %2042 = vadd.xlane.f32.xlu0 %v2041
    %v2043 = vpop.xlane.xlu0 %2042
    %v2044 = vadd.f32 %v1943, %v1945
    %2045 = vadd.xlane.f32.xlu0 %v2044
    %v2046 = vpop.xlane.xlu0 %2045
    %v2047 = vadd.f32 %v1947, %v1949
    %2048 = vadd.xlane.f32.xlu0 %v2047
    %v2049 = vpop.xlane.xlu0 %2048
    %v2050 = vadd.f32 %v1951, %v1953
    %2051 = vadd.xlane.f32.xlu0 %v2050
    %v2052 = vpop.xlane.xlu0 %2051
    %v2053 = vadd.f32 %v1955, %v1957
    %2054 = vadd.xlane.f32.xlu0 %v2053
    %v2055 = vpop.xlane.xlu0 %2054
    %v2056 = vadd.f32 %v1959, %v1961
    %2057 = vadd.xlane.f32.xlu0 %v2056
    %v2058 = vpop.xlane.xlu0 %2057
    %v2059 = vadd.f32 %v1963, %v1965
    %2060 = vadd.xlane.f32.xlu0 %v2059
    %v2061 = vpop.xlane.xlu0 %2060
    %v2062 = vrcp.pop %v1968
    %v2063 = vrcp.pop %v1971
    %v2064 = vrcp.pop %v1974
    %v2065 = vrcp.pop %v1977
    %v2066 = vrcp.pop %v1980
    %v2067 = vrcp.pop %v1983
    %v2068 = vrcp.pop %v1986
    %v2069 = vrcp.pop %v1989
    %v2070 = vrcp.pop %v1992
    %v2071 = vrcp.pop %v1995
    %v2072 = vrcp.pop %v1998
    %v2073 = vrcp.pop %v2001
    %v2074 = vrcp.pop %v2004
    %v2075 = vrcp.pop %v2007
    %v2076 = vrcp.pop %v2010
    %v2077 = vrcp.pop %v2013
    %v2078 = vrcp.pop %v2016
    %v2079 = vrcp.pop %v2019
    %v2080 = vrcp.pop %v2022
    %v2081 = vrcp.pop %v2025
    %v2082 = vrcp.pop %v2028
    %v2083 = vrcp.pop %v2031
    %v2084 = vrcp.pop %v2034
    %v2085 = vrcp.pop %v2037
    %v2086 = vrcp.pop %v2040
    %v2087 = vrcp.pop %v2043
    %v2088 = vrcp.pop %v2046
    %v2089 = vrcp.pop %v2049
    %v2090 = vrcp.pop %v2052
    %v2091 = vrcp.pop %v2055
    %v2092 = vrcp.pop %v2058
    %v2093 = vrcp.pop %v2061
    %v2094 = vmul.f32 %v1839, %v2062
    %v2095 = vmul.f32 %v1841, %v2062
    %v2096 = vmul.f32 %v1843, %v2063
    %v2097 = vmul.f32 %v1845, %v2063
    %v2098 = vmul.f32 %v1847, %v2064
    %v2099 = vmul.f32 %v1849, %v2064
    %v2100 = vmul.f32 %v1851, %v2065
    %v2101 = vmul.f32 %v1853, %v2065
    %v2102 = vmul.f32 %v1855, %v2066
    %v2103 = vmul.f32 %v1857, %v2066
    %v2104 = vmul.f32 %v1859, %v2067
    %v2105 = vmul.f32 %v1861, %v2067
    %v2106 = vmul.f32 %v1863, %v2068
    %v2107 = vmul.f32 %v1865, %v2068
    %v2108 = vmul.f32 %v1867, %v2069
    %v2109 = vmul.f32 %v1869, %v2069
    %v2110 = vmul.f32 %v1871, %v2070
    %v2111 = vmul.f32 %v1873, %v2070
    %v2112 = vmul.f32 %v1875, %v2071
    %v2113 = vmul.f32 %v1877, %v2071
    %v2114 = vmul.f32 %v1879, %v2072
    %v2115 = vmul.f32 %v1881, %v2072
    %v2116 = vmul.f32 %v1883, %v2073
    %v2117 = vmul.f32 %v1885, %v2073
    %v2118 = vmul.f32 %v1887, %v2074
    %v2119 = vmul.f32 %v1889, %v2074
    %v2120 = vmul.f32 %v1891, %v2075
    %v2121 = vmul.f32 %v1893, %v2075
    %v2122 = vmul.f32 %v1895, %v2076
    %v2123 = vmul.f32 %v1897, %v2076
    %v2124 = vmul.f32 %v1899, %v2077
    %v2125 = vmul.f32 %v1901, %v2077
    %v2126 = vmul.f32 %v1903, %v2078
    %v2127 = vmul.f32 %v1905, %v2078
    %v2128 = vmul.f32 %v1907, %v2079
    %v2129 = vmul.f32 %v1909, %v2079
    %v2130 = vmul.f32 %v1911, %v2080
    %v2131 = vmul.f32 %v1913, %v2080
    %v2132 = vmul.f32 %v1915, %v2081
    %v2133 = vmul.f32 %v1917, %v2081
    %v2134 = vmul.f32 %v1919, %v2082
    %v2135 = vmul.f32 %v1921, %v2082
    %v2136 = vmul.f32 %v1923, %v2083
    %v2137 = vmul.f32 %v1925, %v2083
    %v2138 = vmul.f32 %v1927, %v2084
    %v2139 = vmul.f32 %v1929, %v2084
    %v2140 = vmul.f32 %v1931, %v2085
    %v2141 = vmul.f32 %v1933, %v2085
    %v2142 = vmul.f32 %v1935, %v2086
    %v2143 = vmul.f32 %v1937, %v2086
    %v2144 = vmul.f32 %v1939, %v2087
    %v2145 = vmul.f32 %v1941, %v2087
    %v2146 = vmul.f32 %v1943, %v2088
    %v2147 = vmul.f32 %v1945, %v2088
    %v2148 = vmul.f32 %v1947, %v2089
    %v2149 = vmul.f32 %v1949, %v2089
    %v2150 = vmul.f32 %v1951, %v2090
    %v2151 = vmul.f32 %v1953, %v2090
    %v2152 = vmul.f32 %v1955, %v2091
    %v2153 = vmul.f32 %v1957, %v2091
    %v2154 = vmul.f32 %v1959, %v2092
    %v2155 = vmul.f32 %v1961, %v2092
    %v2156 = vmul.f32 %v1963, %v2093
    %v2157 = vmul.f32 %v1965, %v2093
    %v2158 = vpack.c.bf16 %v2096, %v2094
    %v2159 = vpack.c.bf16 %v2097, %v2095
    %v2160 = vpack.c.bf16 %v2100, %v2098
    %v2161 = vpack.c.bf16 %v2101, %v2099
    %v2162 = vpack.c.bf16 %v2104, %v2102
    %v2163 = vpack.c.bf16 %v2105, %v2103
    %v2164 = vpack.c.bf16 %v2108, %v2106
    %v2165 = vpack.c.bf16 %v2109, %v2107
    %v2166 = vpack.c.bf16 %v2112, %v2110
    %v2167 = vpack.c.bf16 %v2113, %v2111
    %v2168 = vpack.c.bf16 %v2116, %v2114
    %v2169 = vpack.c.bf16 %v2117, %v2115
    %v2170 = vpack.c.bf16 %v2120, %v2118
    %v2171 = vpack.c.bf16 %v2121, %v2119
    %v2172 = vpack.c.bf16 %v2124, %v2122
    %v2173 = vpack.c.bf16 %v2125, %v2123
    %v2174 = vpack.c.bf16 %v2128, %v2126
    %v2175 = vpack.c.bf16 %v2129, %v2127
    %v2176 = vpack.c.bf16 %v2132, %v2130
    %v2177 = vpack.c.bf16 %v2133, %v2131
    %v2178 = vpack.c.bf16 %v2136, %v2134
    %v2179 = vpack.c.bf16 %v2137, %v2135
    %v2180 = vpack.c.bf16 %v2140, %v2138
    %v2181 = vpack.c.bf16 %v2141, %v2139
    %v2182 = vpack.c.bf16 %v2144, %v2142
    %v2183 = vpack.c.bf16 %v2145, %v2143
    %v2184 = vpack.c.bf16 %v2148, %v2146
    %v2185 = vpack.c.bf16 %v2149, %v2147
    %v2186 = vpack.c.bf16 %v2152, %v2150
    %v2187 = vpack.c.bf16 %v2153, %v2151
    %v2188 = vpack.c.bf16 %v2156, %v2154
    %v2189 = vpack.c.bf16 %v2157, %v2155
    %2190 = vmatprep.subr.bf16.mxu0 0
    %2191 = vmatpush1.bf16.msra.mxu0 %v1309
    %2192 = vmatprep.subr.bf16.mxu0 0
    %2193 = vmatpush1.bf16.msra.mxu0 %v1310
    %2194 = vmatprep.subr.bf16.mxu0 0
    %2195 = vmatpush1.bf16.msra.mxu0 %v1311
    %2196 = vmatprep.subr.bf16.mxu0 0
    %2197 = vmatpush1.bf16.msra.mxu0 %v1312
    %2198 = vmatprep.subr.bf16.mxu0 0
    %2199 = vmatpush1.bf16.msra.mxu0 %v1313
    %2200 = vmatprep.subr.bf16.mxu0 0
    %2201 = vmatpush1.bf16.msra.mxu0 %v1314
    %2202 = vmatprep.subr.bf16.mxu0 0
    %2203 = vmatpush1.bf16.msra.mxu0 %v1315
    %2204 = vmatprep.subr.bf16.mxu0 0
    %2205 = vmatpush1.bf16.msra.mxu0 %v1316
    %2206 = vmatprep.subr.bf16.mxu0 0
    %2207 = vmatpush1.bf16.msra.mxu0 %v1317
    %2208 = vmatprep.subr.bf16.mxu0 0
    %2209 = vmatpush1.bf16.msra.mxu0 %v1318
    %2210 = vmatprep.subr.bf16.mxu0 0
    %2211 = vmatpush1.bf16.msra.mxu0 %v1319
    %2212 = vmatprep.subr.bf16.mxu0 0
    %2213 = vmatpush1.bf16.msra.mxu0 %v1320
    %2214 = vmatprep.subr.bf16.mxu0 0
    %2215 = vmatpush1.bf16.msra.mxu0 %v1321
    %2216 = vmatprep.subr.bf16.mxu0 0
    %2217 = vmatpush1.bf16.msra.mxu0 %v1322
    %2218 = vmatprep.subr.bf16.mxu0 0
    %2219 = vmatpush1.bf16.msra.mxu0 %v1323
    %2220 = vmatprep.subr.bf16.mxu0 0
    %2221 = vmatpush1.bf16.msra.mxu0 %v1324
    %2222 = vmatprep.mubr.bf16.mxu0 %v2159
    %2223 = vmatmul.mubr.bf16.gmra.mrb[0].mxu0 %v2158
    %v2224 = vpop.f32.mrb[0].mxu0
    %v2225 = vadd.f32 0.0, %v2224
    %v2226 = vpop.f32.mrb[0].mxu0
    %v2227 = vpop.f32.mrb[0].mxu0
    %v2228 = vadd.f32 0.0, %v2227
    %v2229 = vpop.f32.mrb[0].mxu0
    %2230 = vmatprep.mubr.bf16.mxu0 %v2161
    %2231 = vmatmul.mubr.bf16.gmra.mrb[0].mxu0 %v2160
    %v2232 = vpop.f32.mrb[0].mxu0
    %v2233 = vadd.f32 0.0, %v2232
    %v2234 = vpop.f32.mrb[0].mxu0
    %v2235 = vpop.f32.mrb[0].mxu0
    %v2236 = vadd.f32 0.0, %v2235
    %v2237 = vpop.f32.mrb[0].mxu0
    %2238 = vmatprep.mubr.bf16.mxu0 %v2163
    %2239 = vmatmul.mubr.bf16.gmra.mrb[0].mxu0 %v2162
    %v2240 = vpop.f32.mrb[0].mxu0
    %v2241 = vadd.f32 0.0, %v2240
    %v2242 = vpop.f32.mrb[0].mxu0
    %v2243 = vpop.f32.mrb[0].mxu0
    %v2244 = vadd.f32 0.0, %v2243
    %v2245 = vpop.f32.mrb[0].mxu0
    %2246 = vmatprep.mubr.bf16.mxu0 %v2165
    %2247 = vmatmul.mubr.bf16.gmra.mrb[0].mxu0 %v2164
    %v2248 = vpop.f32.mrb[0].mxu0
    %v2249 = vadd.f32 0.0, %v2248
    %v2250 = vpop.f32.mrb[0].mxu0
    %v2251 = vpop.f32.mrb[0].mxu0
    %v2252 = vadd.f32 0.0, %v2251
    %v2253 = vpop.f32.mrb[0].mxu0
    %2254 = vmatprep.mubr.bf16.mxu0 %v2167
    %2255 = vmatmul.mubr.bf16.gmra.mrb[0].mxu0 %v2166
    %v2256 = vpop.f32.mrb[0].mxu0
    %v2257 = vadd.f32 0.0, %v2256
    %v2258 = vpop.f32.mrb[0].mxu0
    %v2259 = vpop.f32.mrb[0].mxu0
    %v2260 = vadd.f32 0.0, %v2259
    %v2261 = vpop.f32.mrb[0].mxu0
    %2262 = vmatprep.mubr.bf16.mxu0 %v2169
    %2263 = vmatmul.mubr.bf16.gmra.mrb[0].mxu0 %v2168
    %v2264 = vpop.f32.mrb[0].mxu0
    %v2265 = vadd.f32 0.0, %v2264
    %v2266 = vpop.f32.mrb[0].mxu0
    %v2267 = vpop.f32.mrb[0].mxu0
    %v2268 = vadd.f32 0.0, %v2267
    %v2269 = vpop.f32.mrb[0].mxu0
    %2270 = vmatprep.mubr.bf16.mxu0 %v2171
    %2271 = vmatmul.mubr.bf16.gmra.mrb[0].mxu0 %v2170
    %v2272 = vpop.f32.mrb[0].mxu0
    %v2273 = vadd.f32 0.0, %v2272
    %v2274 = vpop.f32.mrb[0].mxu0
    %v2275 = vpop.f32.mrb[0].mxu0
    %v2276 = vadd.f32 0.0, %v2275
    %v2277 = vpop.f32.mrb[0].mxu0
    %2278 = vmatprep.mubr.bf16.mxu0 %v2173
    %2279 = vmatmul.mubr.bf16.gmra.mrb[0].mxu0 %v2172
    %v2280 = vpop.f32.mrb[0].mxu0
    %v2281 = vadd.f32 0.0, %v2280
    %v2282 = vpop.f32.mrb[0].mxu0
    %v2283 = vpop.f32.mrb[0].mxu0
    %v2284 = vadd.f32 0.0, %v2283
    %v2285 = vpop.f32.mrb[0].mxu0
    %2286 = vmatprep.mubr.bf16.mxu0 %v2175
    %2287 = vmatmul.mubr.bf16.gmra.mrb[0].mxu0 %v2174
    %v2288 = vpop.f32.mrb[0].mxu0
    %v2289 = vadd.f32 0.0, %v2288
    %v2290 = vpop.f32.mrb[0].mxu0
    %v2291 = vpop.f32.mrb[0].mxu0
    %v2292 = vadd.f32 0.0, %v2291
    %v2293 = vpop.f32.mrb[0].mxu0
    %2294 = vmatprep.mubr.bf16.mxu0 %v2177
    %2295 = vmatmul.mubr.bf16.gmra.mrb[0].mxu0 %v2176
    %v2296 = vpop.f32.mrb[0].mxu0
    %v2297 = vadd.f32 0.0, %v2296
    %v2298 = vpop.f32.mrb[0].mxu0
    %v2299 = vpop.f32.mrb[0].mxu0
    %v2300 = vadd.f32 0.0, %v2299
    %v2301 = vpop.f32.mrb[0].mxu0
    %2302 = vmatprep.mubr.bf16.mxu0 %v2179
    %2303 = vmatmul.mubr.bf16.gmra.mrb[0].mxu0 %v2178
    %v2304 = vpop.f32.mrb[0].mxu0
    %v2305 = vadd.f32 0.0, %v2304
    %v2306 = vpop.f32.mrb[0].mxu0
    %v2307 = vpop.f32.mrb[0].mxu0
    %v2308 = vadd.f32 0.0, %v2307
    %v2309 = vpop.f32.mrb[0].mxu0
    %2310 = vmatprep.mubr.bf16.mxu0 %v2181
    %2311 = vmatmul.mubr.bf16.gmra.mrb[0].mxu0 %v2180
    %v2312 = vpop.f32.mrb[0].mxu0
    %v2313 = vadd.f32 0.0, %v2312
    %v2314 = vpop.f32.mrb[0].mxu0
    %v2315 = vpop.f32.mrb[0].mxu0
    %v2316 = vadd.f32 0.0, %v2315
    %v2317 = vpop.f32.mrb[0].mxu0
    %2318 = vmatprep.mubr.bf16.mxu0 %v2183
    %2319 = vmatmul.mubr.bf16.gmra.mrb[0].mxu0 %v2182
    %v2320 = vpop.f32.mrb[0].mxu0
    %v2321 = vadd.f32 0.0, %v2320
    %v2322 = vpop.f32.mrb[0].mxu0
    %v2323 = vpop.f32.mrb[0].mxu0
    %v2324 = vadd.f32 0.0, %v2323
    %v2325 = vpop.f32.mrb[0].mxu0
    %2326 = vmatprep.mubr.bf16.mxu0 %v2185
    %2327 = vmatmul.mubr.bf16.gmra.mrb[0].mxu0 %v2184
    %v2328 = vpop.f32.mrb[0].mxu0
    %v2329 = vadd.f32 0.0, %v2328
    %v2330 = vpop.f32.mrb[0].mxu0
    %v2331 = vpop.f32.mrb[0].mxu0
    %v2332 = vadd.f32 0.0, %v2331
    %v2333 = vpop.f32.mrb[0].mxu0
    %2334 = vmatprep.mubr.bf16.mxu0 %v2187
    %2335 = vmatmul.mubr.bf16.gmra.mrb[0].mxu0 %v2186
    %v2336 = vpop.f32.mrb[0].mxu0
    %v2337 = vadd.f32 0.0, %v2336
    %v2338 = vpop.f32.mrb[0].mxu0
    %v2339 = vpop.f32.mrb[0].mxu0
    %v2340 = vadd.f32 0.0, %v2339
    %v2341 = vpop.f32.mrb[0].mxu0
    %2342 = vmatprep.mubr.bf16.mxu0 %v2189
    %2343 = vmatmul.mubr.bf16.gmra.mrb[0].mxu0 %v2188
    %v2344 = vpop.f32.mrb[0].mxu0
    %v2345 = vadd.f32 0.0, %v2344
    %v2346 = vpop.f32.mrb[0].mxu0
    %v2347 = vpop.f32.mrb[0].mxu0
    %v2348 = vadd.f32 0.0, %v2347
    %v2349 = vpop.f32.mrb[0].mxu0
    %2350 = vdwg.mxu0
    %v2351 = vpack.c.bf16 %v2228, %v2225
    %v2352 = vpack.c.bf16 %v2236, %v2233
    %v2353 = vpack.c.bf16 %v2244, %v2241
    %v2354 = vpack.c.bf16 %v2252, %v2249
    %v2355 = vpack.c.bf16 %v2260, %v2257
    %v2356 = vpack.c.bf16 %v2268, %v2265
    %v2357 = vpack.c.bf16 %v2276, %v2273
    %v2358 = vpack.c.bf16 %v2284, %v2281
    %v2359 = vpack.c.bf16 %v2292, %v2289
    %v2360 = vpack.c.bf16 %v2300, %v2297
    %v2361 = vpack.c.bf16 %v2308, %v2305
    %v2362 = vpack.c.bf16 %v2316, %v2313
    %v2363 = vpack.c.bf16 %v2324, %v2321
    %v2364 = vpack.c.bf16 %v2332, %v2329
    %v2365 = vpack.c.bf16 %v2340, %v2337
    %v2366 = vpack.c.bf16 %v2348, %v2345
    %v2367 = vld [vmem:[#allocation8] sm:$0xf]
    %v2368 = vld [vmem:[#allocation8 + $0x4] sm:$0xf]
    %v2369 = vld [vmem:[#allocation8 + $0x8] sm:$0xf]
    %v2370 = vld [vmem:[#allocation8 + $0xc] sm:$0xf]
    %v2371 = vlaneseq
    %v2372 = vshrl.u32 %v2371, 7
    %v2373 = vsub.s32 0, %v2372
    %v2374 = vrot.slane %v176, %v2373
    %v2379 = vunpack.c.l.b16 %v2367
    %v2380 = vunpack.c.l.b16 %v2368
    %v2381 = vunpack.c.l.b16 %v2369
    %v2382 = vunpack.c.l.b16 %v2370
    %v2383 = vpack.c.b16 %v2380, %v2379
    %v2384 = vpack.c.b16 %v2382, %v2381
    %v2388 = vsel %vm180, %v2351, 0
    %v2391 = vsel %vm180, %v2352, 0
    %v2394 = vsel %vm180, %v2353, 0
    %v2397 = vsel %vm180, %v2354, 0
    %v2400 = vsel %vm180, %v2355, 0
    %v2403 = vsel %vm180, %v2356, 0
    %v2406 = vsel %vm180, %v2357, 0
    %v2409 = vsel %vm180, %v2358, 0
    %v2412 = vsel %vm180, %v2359, 0
    %v2415 = vsel %vm180, %v2360, 0
    %v2418 = vsel %vm180, %v2361, 0
    %v2421 = vsel %vm180, %v2362, 0
    %v2424 = vsel %vm180, %v2363, 0
    %v2427 = vsel %vm180, %v2364, 0
    %v2430 = vsel %vm180, %v2365, 0
    %v2433 = vsel %vm180, %v2366, 0
    %2435 = vmatprep.subr.bf16.mxu0 0
    %2436 = vmatpush1.bf16.msra.mxu0 %v2383
    %2437 = vmatprep.subr.bf16.mxu0 0
    %2438 = vmatpush1.bf16.msra.mxu0 %v2384
    %2439 = vmatprep.subr.bf16.mxu0 0
    %2440 = vmatpush1.bf16.msra.mxu0 0
    %2441 = vmatprep.subr.bf16.mxu0 0
    %2442 = vmatpush1.bf16.msra.mxu0 0
    %2443 = vmatprep.subr.bf16.mxu0 0
    %2444 = vmatpush1.bf16.msra.mxu0 0
    %2445 = vmatprep.subr.bf16.mxu0 0
    %2446 = vmatpush1.bf16.msra.mxu0 0
    %2447 = vmatprep.subr.bf16.mxu0 0
    %2448 = vmatpush1.bf16.msra.mxu0 0
    %2449 = vmatprep.subr.bf16.mxu0 0
    %2450 = vmatpush1.bf16.msra.mxu0 0
    %2451 = vmatprep.subr.bf16.mxu0 0
    %2452 = vmatpush1.bf16.msra.mxu0 0
    %2453 = vmatprep.subr.bf16.mxu0 0
    %2454 = vmatpush1.bf16.msra.mxu0 0
    %2455 = vmatprep.subr.bf16.mxu0 0
    %2456 = vmatpush1.bf16.msra.mxu0 0
    %2457 = vmatprep.subr.bf16.mxu0 0
    %2458 = vmatpush1.bf16.msra.mxu0 0
    %2459 = vmatprep.subr.bf16.mxu0 0
    %2460 = vmatpush1.bf16.msra.mxu0 0
    %2461 = vmatprep.subr.bf16.mxu0 0
    %2462 = vmatpush1.bf16.msra.mxu0 0
    %2463 = vmatprep.subr.bf16.mxu0 0
    %2464 = vmatpush1.bf16.msra.mxu0 0
    %2465 = vmatprep.subr.bf16.mxu0 0
    %2466 = vmatpush1.bf16.msra.mxu0 0
    %2467 = vmatprep.mubr.bf16.mxu0 0
    %2468 = vmatmul.mubr.bf16.gmra.mrb[0].mxu0 %v2388
    %v2469 = vpop.f32.mrb[0].mxu0
    %v2470 = vadd.f32 %v2374, %v2469
    %v2471 = vpop.f32.mrb[0].mxu0
    %v2472 = vpop.f32.mrb[0].mxu0
    %v2473 = vadd.f32 %v2374, %v2472
    %v2474 = vpop.f32.mrb[0].mxu0
    %2475 = vmatprep.mubr.bf16.mxu0 0
    %2476 = vmatmul.mubr.bf16.gmra.mrb[0].mxu0 %v2391
    %v2477 = vpop.f32.mrb[0].mxu0
    %v2478 = vadd.f32 %v2374, %v2477
    %v2479 = vpop.f32.mrb[0].mxu0
    %v2480 = vpop.f32.mrb[0].mxu0
    %v2481 = vadd.f32 %v2374, %v2480
    %v2482 = vpop.f32.mrb[0].mxu0
    %2483 = vmatprep.mubr.bf16.mxu0 0
    %2484 = vmatmul.mubr.bf16.gmra.mrb[0].mxu0 %v2394
    %v2485 = vpop.f32.mrb[0].mxu0
    %v2486 = vadd.f32 %v2374, %v2485
    %v2487 = vpop.f32.mrb[0].mxu0
    %v2488 = vpop.f32.mrb[0].mxu0
    %v2489 = vadd.f32 %v2374, %v2488
    %v2490 = vpop.f32.mrb[0].mxu0
    %2491 = vmatprep.mubr.bf16.mxu0 0
    %2492 = vmatmul.mubr.bf16.gmra.mrb[0].mxu0 %v2397
    %v2493 = vpop.f32.mrb[0].mxu0
    %v2494 = vadd.f32 %v2374, %v2493
    %v2495 = vpop.f32.mrb[0].mxu0
    %v2496 = vpop.f32.mrb[0].mxu0
    %v2497 = vadd.f32 %v2374, %v2496
    %v2498 = vpop.f32.mrb[0].mxu0
    %2499 = vmatprep.mubr.bf16.mxu0 0
    %2500 = vmatmul.mubr.bf16.gmra.mrb[0].mxu0 %v2400
    %v2501 = vpop.f32.mrb[0].mxu0
    %v2502 = vadd.f32 %v2374, %v2501
    %v2503 = vpop.f32.mrb[0].mxu0
    %v2504 = vpop.f32.mrb[0].mxu0
    %v2505 = vadd.f32 %v2374, %v2504
    %v2506 = vpop.f32.mrb[0].mxu0
    %2507 = vmatprep.mubr.bf16.mxu0 0
    %2508 = vmatmul.mubr.bf16.gmra.mrb[0].mxu0 %v2403
    %v2509 = vpop.f32.mrb[0].mxu0
    %v2510 = vadd.f32 %v2374, %v2509
    %v2511 = vpop.f32.mrb[0].mxu0
    %v2512 = vpop.f32.mrb[0].mxu0
    %v2513 = vadd.f32 %v2374, %v2512
    %v2514 = vpop.f32.mrb[0].mxu0
    %2515 = vmatprep.mubr.bf16.mxu0 0
    %2516 = vmatmul.mubr.bf16.gmra.mrb[0].mxu0 %v2406
    %v2517 = vpop.f32.mrb[0].mxu0
    %v2518 = vadd.f32 %v2374, %v2517
    %v2519 = vpop.f32.mrb[0].mxu0
    %v2520 = vpop.f32.mrb[0].mxu0
    %v2521 = vadd.f32 %v2374, %v2520
    %v2522 = vpop.f32.mrb[0].mxu0
    %2523 = vmatprep.mubr.bf16.mxu0 0
    %2524 = vmatmul.mubr.bf16.gmra.mrb[0].mxu0 %v2409
    %v2525 = vpop.f32.mrb[0].mxu0
    %v2526 = vadd.f32 %v2374, %v2525
    %v2527 = vpop.f32.mrb[0].mxu0
    %v2528 = vpop.f32.mrb[0].mxu0
    %v2529 = vadd.f32 %v2374, %v2528
    %v2530 = vpop.f32.mrb[0].mxu0
    %2531 = vmatprep.mubr.bf16.mxu0 0
    %2532 = vmatmul.mubr.bf16.gmra.mrb[0].mxu0 %v2412
    %v2533 = vpop.f32.mrb[0].mxu0
    %v2534 = vadd.f32 %v2374, %v2533
    %v2535 = vpop.f32.mrb[0].mxu0
    %v2536 = vpop.f32.mrb[0].mxu0
    %v2537 = vadd.f32 %v2374, %v2536
    %v2538 = vpop.f32.mrb[0].mxu0
    %2539 = vmatprep.mubr.bf16.mxu0 0
    %2540 = vmatmul.mubr.bf16.gmra.mrb[0].mxu0 %v2415
    %v2541 = vpop.f32.mrb[0].mxu0
    %v2542 = vadd.f32 %v2374, %v2541
    %v2543 = vpop.f32.mrb[0].mxu0
    %v2544 = vpop.f32.mrb[0].mxu0
    %v2545 = vadd.f32 %v2374, %v2544
    %v2546 = vpop.f32.mrb[0].mxu0
    %2547 = vmatprep.mubr.bf16.mxu0 0
    %2548 = vmatmul.mubr.bf16.gmra.mrb[0].mxu0 %v2418
    %v2549 = vpop.f32.mrb[0].mxu0
    %v2550 = vadd.f32 %v2374, %v2549
    %v2551 = vpop.f32.mrb[0].mxu0
    %v2552 = vpop.f32.mrb[0].mxu0
    %v2553 = vadd.f32 %v2374, %v2552
    %v2554 = vpop.f32.mrb[0].mxu0
    %2555 = vmatprep.mubr.bf16.mxu0 0
    %2556 = vmatmul.mubr.bf16.gmra.mrb[0].mxu0 %v2421
    %v2557 = vpop.f32.mrb[0].mxu0
    %v2558 = vadd.f32 %v2374, %v2557
    %v2559 = vpop.f32.mrb[0].mxu0
    %v2560 = vpop.f32.mrb[0].mxu0
    %v2561 = vadd.f32 %v2374, %v2560
    %v2562 = vpop.f32.mrb[0].mxu0
    %2563 = vmatprep.mubr.bf16.mxu0 0
    %2564 = vmatmul.mubr.bf16.gmra.mrb[0].mxu0 %v2424
    %v2565 = vpop.f32.mrb[0].mxu0
    %v2566 = vadd.f32 %v2374, %v2565
    %v2567 = vpop.f32.mrb[0].mxu0
    %v2568 = vpop.f32.mrb[0].mxu0
    %v2569 = vadd.f32 %v2374, %v2568
    %v2570 = vpop.f32.mrb[0].mxu0
    %2571 = vmatprep.mubr.bf16.mxu0 0
    %2572 = vmatmul.mubr.bf16.gmra.mrb[0].mxu0 %v2427
    %v2573 = vpop.f32.mrb[0].mxu0
    %v2574 = vadd.f32 %v2374, %v2573
    %v2575 = vpop.f32.mrb[0].mxu0
    %v2576 = vpop.f32.mrb[0].mxu0
    %v2577 = vadd.f32 %v2374, %v2576
    %v2578 = vpop.f32.mrb[0].mxu0
    %2579 = vmatprep.mubr.bf16.mxu0 0
    %2580 = vmatmul.mubr.bf16.gmra.mrb[0].mxu0 %v2430
    %v2581 = vpop.f32.mrb[0].mxu0
    %v2582 = vadd.f32 %v2374, %v2581
    %v2583 = vpop.f32.mrb[0].mxu0
    %v2584 = vpop.f32.mrb[0].mxu0
    %v2585 = vadd.f32 %v2374, %v2584
    %v2586 = vpop.f32.mrb[0].mxu0
    %2587 = vmatprep.mubr.bf16.mxu0 0
    %2588 = vmatmul.mubr.bf16.gmra.mrb[0].mxu0 %v2433
    %v2589 = vpop.f32.mrb[0].mxu0
    %v2590 = vadd.f32 %v2374, %v2589
    %v2591 = vpop.f32.mrb[0].mxu0
    %v2592 = vpop.f32.mrb[0].mxu0
    %v2593 = vadd.f32 %v2374, %v2592
    %v2594 = vpop.f32.mrb[0].mxu0
    %2595 = vdwg.mxu0
    %v2596 = vadd.f32 %v137, %v2470
    %v2597 = vadd.f32 %v138, %v2473
    %v2598 = vadd.f32 %v139, %v2478
    %v2599 = vadd.f32 %v140, %v2481
    %v2600 = vadd.f32 %v141, %v2486
    %v2601 = vadd.f32 %v142, %v2489
    %v2602 = vadd.f32 %v143, %v2494
    %v2603 = vadd.f32 %v144, %v2497
    %v2604 = vadd.f32 %v145, %v2502
    %v2605 = vadd.f32 %v146, %v2505
    %v2606 = vadd.f32 %v147, %v2510
    %v2607 = vadd.f32 %v148, %v2513
    %v2608 = vadd.f32 %v149, %v2518
    %v2609 = vadd.f32 %v150, %v2521
    %v2610 = vadd.f32 %v151, %v2526
    %v2611 = vadd.f32 %v152, %v2529
    %v2612 = vadd.f32 %v153, %v2534
    %v2613 = vadd.f32 %v154, %v2537
    %v2614 = vadd.f32 %v155, %v2542
    %v2615 = vadd.f32 %v156, %v2545
    %v2616 = vadd.f32 %v157, %v2550
    %v2617 = vadd.f32 %v158, %v2553
    %v2618 = vadd.f32 %v159, %v2558
    %v2619 = vadd.f32 %v160, %v2561
    %v2620 = vadd.f32 %v161, %v2566
    %v2621 = vadd.f32 %v162, %v2569
    %v2622 = vadd.f32 %v163, %v2574
    %v2623 = vadd.f32 %v164, %v2577
    %v2624 = vadd.f32 %v165, %v2582
    %v2625 = vadd.f32 %v166, %v2585
    %v2626 = vadd.f32 %v167, %v2590
    %v2627 = vadd.f32 %v168, %v2593
    %v2628 = vsel %vm180, %v2596, 0.0
    %2629 = vadd.xlane.f32.xlu0 %v2628
    %v2630 = vpop.xlane.xlu0 %2629
    %v2631 = vsel %vm180, %v2597, 0.0
    %2632 = vadd.xlane.f32.xlu0 %v2631
    %v2633 = vpop.xlane.xlu0 %2632
    %v2634 = vsel %vm180, %v2598, 0.0
    %2635 = vadd.xlane.f32.xlu0 %v2634
    %v2636 = vpop.xlane.xlu0 %2635
    %v2637 = vsel %vm180, %v2599, 0.0
    %2638 = vadd.xlane.f32.xlu0 %v2637
    %v2639 = vpop.xlane.xlu0 %2638
    %v2640 = vsel %vm180, %v2600, 0.0
    %2641 = vadd.xlane.f32.xlu0 %v2640
    %v2642 = vpop.xlane.xlu0 %2641
    %v2643 = vsel %vm180, %v2601, 0.0
    %2644 = vadd.xlane.f32.xlu0 %v2643
    %v2645 = vpop.xlane.xlu0 %2644
    %v2646 = vsel %vm180, %v2602, 0.0
    %2647 = vadd.xlane.f32.xlu0 %v2646
    %v2648 = vpop.xlane.xlu0 %2647
    %v2649 = vsel %vm180, %v2603, 0.0
    %2650 = vadd.xlane.f32.xlu0 %v2649
    %v2651 = vpop.xlane.xlu0 %2650
    %v2652 = vsel %vm180, %v2604, 0.0
    %2653 = vadd.xlane.f32.xlu0 %v2652
    %v2654 = vpop.xlane.xlu0 %2653
    %v2655 = vsel %vm180, %v2605, 0.0
    %2656 = vadd.xlane.f32.xlu0 %v2655
    %v2657 = vpop.xlane.xlu0 %2656
    %v2658 = vsel %vm180, %v2606, 0.0
    %2659 = vadd.xlane.f32.xlu0 %v2658
    %v2660 = vpop.xlane.xlu0 %2659
    %v2661 = vsel %vm180, %v2607, 0.0
    %2662 = vadd.xlane.f32.xlu0 %v2661
    %v2663 = vpop.xlane.xlu0 %2662
    %v2664 = vsel %vm180, %v2608, 0.0
    %2665 = vadd.xlane.f32.xlu0 %v2664
    %v2666 = vpop.xlane.xlu0 %2665
    %v2667 = vsel %vm180, %v2609, 0.0
    %2668 = vadd.xlane.f32.xlu0 %v2667
    %v2669 = vpop.xlane.xlu0 %2668
    %v2670 = vsel %vm180, %v2610, 0.0
    %2671 = vadd.xlane.f32.xlu0 %v2670
    %v2672 = vpop.xlane.xlu0 %2671
    %v2673 = vsel %vm180, %v2611, 0.0
    %2674 = vadd.xlane.f32.xlu0 %v2673
    %v2675 = vpop.xlane.xlu0 %2674
    %v2676 = vsel %vm180, %v2612, 0.0
    %2677 = vadd.xlane.f32.xlu0 %v2676
    %v2678 = vpop.xlane.xlu0 %2677
    %v2679 = vsel %vm180, %v2613, 0.0
    %2680 = vadd.xlane.f32.xlu0 %v2679
    %v2681 = vpop.xlane.xlu0 %2680
    %v2682 = vsel %vm180, %v2614, 0.0
    %2683 = vadd.xlane.f32.xlu0 %v2682
    %v2684 = vpop.xlane.xlu0 %2683
    %v2685 = vsel %vm180, %v2615, 0.0
    %2686 = vadd.xlane.f32.xlu0 %v2685
    %v2687 = vpop.xlane.xlu0 %2686
    %v2688 = vsel %vm180, %v2616, 0.0
    %2689 = vadd.xlane.f32.xlu0 %v2688
    %v2690 = vpop.xlane.xlu0 %2689
    %v2691 = vsel %vm180, %v2617, 0.0
    %2692 = vadd.xlane.f32.xlu0 %v2691
    %v2693 = vpop.xlane.xlu0 %2692
    %v2694 = vsel %vm180, %v2618, 0.0
    %2695 = vadd.xlane.f32.xlu0 %v2694
    %v2696 = vpop.xlane.xlu0 %2695
    %v2697 = vsel %vm180, %v2619, 0.0
    %2698 = vadd.xlane.f32.xlu0 %v2697
    %v2699 = vpop.xlane.xlu0 %2698
    %v2700 = vsel %vm180, %v2620, 0.0
    %2701 = vadd.xlane.f32.xlu0 %v2700
    %v2702 = vpop.xlane.xlu0 %2701
    %v2703 = vsel %vm180, %v2621, 0.0
    %2704 = vadd.xlane.f32.xlu0 %v2703
    %v2705 = vpop.xlane.xlu0 %2704
    %v2706 = vsel %vm180, %v2622, 0.0
    %2707 = vadd.xlane.f32.xlu0 %v2706
    %v2708 = vpop.xlane.xlu0 %2707
    %v2709 = vsel %vm180, %v2623, 0.0
    %2710 = vadd.xlane.f32.xlu0 %v2709
    %v2711 = vpop.xlane.xlu0 %2710
    %v2712 = vsel %vm180, %v2624, 0.0
    %2713 = vadd.xlane.f32.xlu0 %v2712
    %v2714 = vpop.xlane.xlu0 %2713
    %v2715 = vsel %vm180, %v2625, 0.0
    %2716 = vadd.xlane.f32.xlu0 %v2715
    %v2717 = vpop.xlane.xlu0 %2716
    %v2718 = vsel %vm180, %v2626, 0.0
    %2719 = vadd.xlane.f32.xlu0 %v2718
    %v2720 = vpop.xlane.xlu0 %2719
    %v2721 = vsel %vm180, %v2627, 0.0
    %2722 = vadd.xlane.f32.xlu0 %v2721
    %v2723 = vpop.xlane.xlu0 %2722
    %v2724 = vmul.f32 %v2630, %v277
    %v2725 = vmul.f32 %v2633, %v277
    %v2726 = vmul.f32 %v2636, %v277
    %v2727 = vmul.f32 %v2639, %v277
    %v2728 = vmul.f32 %v2642, %v277
    %v2729 = vmul.f32 %v2645, %v277
    %v2730 = vmul.f32 %v2648, %v277
    %v2731 = vmul.f32 %v2651, %v277
    %v2732 = vmul.f32 %v2654, %v277
    %v2733 = vmul.f32 %v2657, %v277
    %v2734 = vmul.f32 %v2660, %v277
    %v2735 = vmul.f32 %v2663, %v277
    %v2736 = vmul.f32 %v2666, %v277
    %v2737 = vmul.f32 %v2669, %v277
    %v2738 = vmul.f32 %v2672, %v277
    %v2739 = vmul.f32 %v2675, %v277
    %v2740 = vmul.f32 %v2678, %v277
    %v2741 = vmul.f32 %v2681, %v277
    %v2742 = vmul.f32 %v2684, %v277
    %v2743 = vmul.f32 %v2687, %v277
    %v2744 = vmul.f32 %v2690, %v277
    %v2745 = vmul.f32 %v2693, %v277
    %v2746 = vmul.f32 %v2696, %v277
    %v2747 = vmul.f32 %v2699, %v277
    %v2748 = vmul.f32 %v2702, %v277
    %v2749 = vmul.f32 %v2705, %v277
    %v2750 = vmul.f32 %v2708, %v277
    %v2751 = vmul.f32 %v2711, %v277
    %v2752 = vmul.f32 %v2714, %v277
    %v2753 = vmul.f32 %v2717, %v277
    %v2754 = vmul.f32 %v2720, %v277
    %v2755 = vmul.f32 %v2723, %v277
    %v2756 = vsub.f32 %v2596, %v2724
    %v2757 = vsub.f32 %v2597, %v2725
    %v2758 = vsub.f32 %v2598, %v2726
    %v2759 = vsub.f32 %v2599, %v2727
    %v2760 = vsub.f32 %v2600, %v2728
    %v2761 = vsub.f32 %v2601, %v2729
    %v2762 = vsub.f32 %v2602, %v2730
    %v2763 = vsub.f32 %v2603, %v2731
    %v2764 = vsub.f32 %v2604, %v2732
    %v2765 = vsub.f32 %v2605, %v2733
    %v2766 = vsub.f32 %v2606, %v2734
    %v2767 = vsub.f32 %v2607, %v2735
    %v2768 = vsub.f32 %v2608, %v2736
    %v2769 = vsub.f32 %v2609, %v2737
    %v2770 = vsub.f32 %v2610, %v2738
    %v2771 = vsub.f32 %v2611, %v2739
    %v2772 = vsub.f32 %v2612, %v2740
    %v2773 = vsub.f32 %v2613, %v2741
    %v2774 = vsub.f32 %v2614, %v2742
    %v2775 = vsub.f32 %v2615, %v2743
    %v2776 = vsub.f32 %v2616, %v2744
    %v2777 = vsub.f32 %v2617, %v2745
    %v2778 = vsub.f32 %v2618, %v2746
    %v2779 = vsub.f32 %v2619, %v2747
    %v2780 = vsub.f32 %v2620, %v2748
    %v2781 = vsub.f32 %v2621, %v2749
    %v2782 = vsub.f32 %v2622, %v2750
    %v2783 = vsub.f32 %v2623, %v2751
    %v2784 = vsub.f32 %v2624, %v2752
    %v2785 = vsub.f32 %v2625, %v2753
    %v2786 = vsub.f32 %v2626, %v2754
    %v2787 = vsub.f32 %v2627, %v2755
    %v2788 = vmul.f32 %v2756, %v2756
    %v2789 = vmul.f32 %v2757, %v2757
    %v2790 = vmul.f32 %v2758, %v2758
    %v2791 = vmul.f32 %v2759, %v2759
    %v2792 = vmul.f32 %v2760, %v2760
    %v2793 = vmul.f32 %v2761, %v2761
    %v2794 = vmul.f32 %v2762, %v2762
    %v2795 = vmul.f32 %v2763, %v2763
    %v2796 = vmul.f32 %v2764, %v2764
    %v2797 = vmul.f32 %v2765, %v2765
    %v2798 = vmul.f32 %v2766, %v2766
    %v2799 = vmul.f32 %v2767, %v2767
    %v2800 = vmul.f32 %v2768, %v2768
    %v2801 = vmul.f32 %v2769, %v2769
    %v2802 = vmul.f32 %v2770, %v2770
    %v2803 = vmul.f32 %v2771, %v2771
    %v2804 = vmul.f32 %v2772, %v2772
    %v2805 = vmul.f32 %v2773, %v2773
    %v2806 = vmul.f32 %v2774, %v2774
    %v2807 = vmul.f32 %v2775, %v2775
    %v2808 = vmul.f32 %v2776, %v2776
    %v2809 = vmul.f32 %v2777, %v2777
    %v2810 = vmul.f32 %v2778, %v2778
    %v2811 = vmul.f32 %v2779, %v2779
    %v2812 = vmul.f32 %v2780, %v2780
    %v2813 = vmul.f32 %v2781, %v2781
    %v2814 = vmul.f32 %v2782, %v2782
    %v2815 = vmul.f32 %v2783, %v2783
    %v2816 = vmul.f32 %v2784, %v2784
    %v2817 = vmul.f32 %v2785, %v2785
    %v2818 = vmul.f32 %v2786, %v2786
    %v2819 = vmul.f32 %v2787, %v2787
    %v2820 = vsel %vm180, %v2788, 0.0
    %2821 = vadd.xlane.f32.xlu0 %v2820
    %v2822 = vpop.xlane.xlu0 %2821
    %v2823 = vsel %vm180, %v2789, 0.0
    %2824 = vadd.xlane.f32.xlu0 %v2823
    %v2825 = vpop.xlane.xlu0 %2824
    %v2826 = vsel %vm180, %v2790, 0.0
    %2827 = vadd.xlane.f32.xlu0 %v2826
    %v2828 = vpop.xlane.xlu0 %2827
    %v2829 = vsel %vm180, %v2791, 0.0
    %2830 = vadd.xlane.f32.xlu0 %v2829
    %v2831 = vpop.xlane.xlu0 %2830
    %v2832 = vsel %vm180, %v2792, 0.0
    %2833 = vadd.xlane.f32.xlu0 %v2832
    %v2834 = vpop.xlane.xlu0 %2833
    %v2835 = vsel %vm180, %v2793, 0.0
    %2836 = vadd.xlane.f32.xlu0 %v2835
    %v2837 = vpop.xlane.xlu0 %2836
    %v2838 = vsel %vm180, %v2794, 0.0
    %2839 = vadd.xlane.f32.xlu0 %v2838
    %v2840 = vpop.xlane.xlu0 %2839
    %v2841 = vsel %vm180, %v2795, 0.0
    %2842 = vadd.xlane.f32.xlu0 %v2841
    %v2843 = vpop.xlane.xlu0 %2842
    %v2844 = vsel %vm180, %v2796, 0.0
    %2845 = vadd.xlane.f32.xlu0 %v2844
    %v2846 = vpop.xlane.xlu0 %2845
    %v2847 = vsel %vm180, %v2797, 0.0
    %2848 = vadd.xlane.f32.xlu0 %v2847
    %v2849 = vpop.xlane.xlu0 %2848
    %v2850 = vsel %vm180, %v2798, 0.0
    %2851 = vadd.xlane.f32.xlu0 %v2850
    %v2852 = vpop.xlane.xlu0 %2851
    %v2853 = vsel %vm180, %v2799, 0.0
    %2854 = vadd.xlane.f32.xlu0 %v2853
    %v2855 = vpop.xlane.xlu0 %2854
    %v2856 = vsel %vm180, %v2800, 0.0
    %2857 = vadd.xlane.f32.xlu0 %v2856
    %v2858 = vpop.xlane.xlu0 %2857
    %v2859 = vsel %vm180, %v2801, 0.0
    %2860 = vadd.xlane.f32.xlu0 %v2859
    %v2861 = vpop.xlane.xlu0 %2860
    %v2862 = vsel %vm180, %v2802, 0.0
    %2863 = vadd.xlane.f32.xlu0 %v2862
    %v2864 = vpop.xlane.xlu0 %2863
    %v2865 = vsel %vm180, %v2803, 0.0
    %2866 = vadd.xlane.f32.xlu0 %v2865
    %v2867 = vpop.xlane.xlu0 %2866
    %v2868 = vsel %vm180, %v2804, 0.0
    %2869 = vadd.xlane.f32.xlu0 %v2868
    %v2870 = vpop.xlane.xlu0 %2869
    %v2871 = vsel %vm180, %v2805, 0.0
    %2872 = vadd.xlane.f32.xlu0 %v2871
    %v2873 = vpop.xlane.xlu0 %2872
    %v2874 = vsel %vm180, %v2806, 0.0
    %2875 = vadd.xlane.f32.xlu0 %v2874
    %v2876 = vpop.xlane.xlu0 %2875
    %v2877 = vsel %vm180, %v2807, 0.0
    %2878 = vadd.xlane.f32.xlu0 %v2877
    %v2879 = vpop.xlane.xlu0 %2878
    %v2880 = vsel %vm180, %v2808, 0.0
    %2881 = vadd.xlane.f32.xlu0 %v2880
    %v2882 = vpop.xlane.xlu0 %2881
    %v2883 = vsel %vm180, %v2809, 0.0
    %2884 = vadd.xlane.f32.xlu0 %v2883
    %v2885 = vpop.xlane.xlu0 %2884
    %v2886 = vsel %vm180, %v2810, 0.0
    %2887 = vadd.xlane.f32.xlu0 %v2886
    %v2888 = vpop.xlane.xlu0 %2887
    %v2889 = vsel %vm180, %v2811, 0.0
    %2890 = vadd.xlane.f32.xlu0 %v2889
    %v2891 = vpop.xlane.xlu0 %2890
    %v2892 = vsel %vm180, %v2812, 0.0
    %2893 = vadd.xlane.f32.xlu0 %v2892
    %v2894 = vpop.xlane.xlu0 %2893
    %v2895 = vsel %vm180, %v2813, 0.0
    %2896 = vadd.xlane.f32.xlu0 %v2895
    %v2897 = vpop.xlane.xlu0 %2896
    %v2898 = vsel %vm180, %v2814, 0.0
    %2899 = vadd.xlane.f32.xlu0 %v2898
    %v2900 = vpop.xlane.xlu0 %2899
    %v2901 = vsel %vm180, %v2815, 0.0
    %2902 = vadd.xlane.f32.xlu0 %v2901
    %v2903 = vpop.xlane.xlu0 %2902
    %v2904 = vsel %vm180, %v2816, 0.0
    %2905 = vadd.xlane.f32.xlu0 %v2904
    %v2906 = vpop.xlane.xlu0 %2905
    %v2907 = vsel %vm180, %v2817, 0.0
    %2908 = vadd.xlane.f32.xlu0 %v2907
    %v2909 = vpop.xlane.xlu0 %2908
    %v2910 = vsel %vm180, %v2818, 0.0
    %2911 = vadd.xlane.f32.xlu0 %v2910
    %v2912 = vpop.xlane.xlu0 %2911
    %v2913 = vsel %vm180, %v2819, 0.0
    %2914 = vadd.xlane.f32.xlu0 %v2913
    %v2915 = vpop.xlane.xlu0 %2914
    %v2916 = vmul.f32 %v2822, %v277
    %v2917 = vmul.f32 %v2825, %v277
    %v2918 = vmul.f32 %v2828, %v277
    %v2919 = vmul.f32 %v2831, %v277
    %v2920 = vmul.f32 %v2834, %v277
    %v2921 = vmul.f32 %v2837, %v277
    %v2922 = vmul.f32 %v2840, %v277
    %v2923 = vmul.f32 %v2843, %v277
    %v2924 = vmul.f32 %v2846, %v277
    %v2925 = vmul.f32 %v2849, %v277
    %v2926 = vmul.f32 %v2852, %v277
    %v2927 = vmul.f32 %v2855, %v277
    %v2928 = vmul.f32 %v2858, %v277
    %v2929 = vmul.f32 %v2861, %v277
    %v2930 = vmul.f32 %v2864, %v277
    %v2931 = vmul.f32 %v2867, %v277
    %v2932 = vmul.f32 %v2870, %v277
    %v2933 = vmul.f32 %v2873, %v277
    %v2934 = vmul.f32 %v2876, %v277
    %v2935 = vmul.f32 %v2879, %v277
    %v2936 = vmul.f32 %v2882, %v277
    %v2937 = vmul.f32 %v2885, %v277
    %v2938 = vmul.f32 %v2888, %v277
    %v2939 = vmul.f32 %v2891, %v277
    %v2940 = vmul.f32 %v2894, %v277
    %v2941 = vmul.f32 %v2897, %v277
    %v2942 = vmul.f32 %v2900, %v277
    %v2943 = vmul.f32 %v2903, %v277
    %v2944 = vmul.f32 %v2906, %v277
    %v2945 = vmul.f32 %v2909, %v277
    %v2946 = vmul.f32 %v2912, %v277
    %v2947 = vmul.f32 %v2915, %v277
    %v2948 = vadd.f32 %v2916, 1e-05
    %v2949 = vadd.f32 %v2917, 1e-05
    %v2950 = vadd.f32 %v2918, 1e-05
    %v2951 = vadd.f32 %v2919, 1e-05
    %v2952 = vadd.f32 %v2920, 1e-05
    %v2953 = vadd.f32 %v2921, 1e-05
    %v2954 = vadd.f32 %v2922, 1e-05
    %v2955 = vadd.f32 %v2923, 1e-05
    %v2956 = vadd.f32 %v2924, 1e-05
    %v2957 = vadd.f32 %v2925, 1e-05
    %v2958 = vadd.f32 %v2926, 1e-05
    %v2959 = vadd.f32 %v2927, 1e-05
    %v2960 = vadd.f32 %v2928, 1e-05
    %v2961 = vadd.f32 %v2929, 1e-05
    %v2962 = vadd.f32 %v2930, 1e-05
    %v2963 = vadd.f32 %v2931, 1e-05
    %v2964 = vadd.f32 %v2932, 1e-05
    %v2965 = vadd.f32 %v2933, 1e-05
    %v2966 = vadd.f32 %v2934, 1e-05
    %v2967 = vadd.f32 %v2935, 1e-05
    %v2968 = vadd.f32 %v2936, 1e-05
    %v2969 = vadd.f32 %v2937, 1e-05
    %v2970 = vadd.f32 %v2938, 1e-05
    %v2971 = vadd.f32 %v2939, 1e-05
    %v2972 = vadd.f32 %v2940, 1e-05
    %v2973 = vadd.f32 %v2941, 1e-05
    %v2974 = vadd.f32 %v2942, 1e-05
    %v2975 = vadd.f32 %v2943, 1e-05
    %v2976 = vadd.f32 %v2944, 1e-05
    %v2977 = vadd.f32 %v2945, 1e-05
    %v2978 = vadd.f32 %v2946, 1e-05
    %v2979 = vadd.f32 %v2947, 1e-05
    %v2980 = vrsqrt.pop %v2948
    %v2981 = vrsqrt.pop %v2949
    %v2982 = vrsqrt.pop %v2950
    %v2983 = vrsqrt.pop %v2951
    %v2984 = vrsqrt.pop %v2952
    %v2985 = vrsqrt.pop %v2953
    %v2986 = vrsqrt.pop %v2954
    %v2987 = vrsqrt.pop %v2955
    %v2988 = vrsqrt.pop %v2956
    %v2989 = vrsqrt.pop %v2957
    %v2990 = vrsqrt.pop %v2958
    %v2991 = vrsqrt.pop %v2959
    %v2992 = vrsqrt.pop %v2960
    %v2993 = vrsqrt.pop %v2961
    %v2994 = vrsqrt.pop %v2962
    %v2995 = vrsqrt.pop %v2963
    %v2996 = vrsqrt.pop %v2964
    %v2997 = vrsqrt.pop %v2965
    %v2998 = vrsqrt.pop %v2966
    %v2999 = vrsqrt.pop %v2967
    %v3000 = vrsqrt.pop %v2968
    %v3001 = vrsqrt.pop %v2969
    %v3002 = vrsqrt.pop %v2970
    %v3003 = vrsqrt.pop %v2971
    %v3004 = vrsqrt.pop %v2972
    %v3005 = vrsqrt.pop %v2973
    %v3006 = vrsqrt.pop %v2974
    %v3007 = vrsqrt.pop %v2975
    %v3008 = vrsqrt.pop %v2976
    %v3009 = vrsqrt.pop %v2977
    %v3010 = vrsqrt.pop %v2978
    %v3011 = vrsqrt.pop %v2979
    %v3012 = vmul.f32 %v2756, %v2980
    %v3013 = vmul.f32 %v2757, %v2981
    %v3014 = vmul.f32 %v2758, %v2982
    %v3015 = vmul.f32 %v2759, %v2983
    %v3016 = vmul.f32 %v2760, %v2984
    %v3017 = vmul.f32 %v2761, %v2985
    %v3018 = vmul.f32 %v2762, %v2986
    %v3019 = vmul.f32 %v2763, %v2987
    %v3020 = vmul.f32 %v2764, %v2988
    %v3021 = vmul.f32 %v2765, %v2989
    %v3022 = vmul.f32 %v2766, %v2990
    %v3023 = vmul.f32 %v2767, %v2991
    %v3024 = vmul.f32 %v2768, %v2992
    %v3025 = vmul.f32 %v2769, %v2993
    %v3026 = vmul.f32 %v2770, %v2994
    %v3027 = vmul.f32 %v2771, %v2995
    %v3028 = vmul.f32 %v2772, %v2996
    %v3029 = vmul.f32 %v2773, %v2997
    %v3030 = vmul.f32 %v2774, %v2998
    %v3031 = vmul.f32 %v2775, %v2999
    %v3032 = vmul.f32 %v2776, %v3000
    %v3033 = vmul.f32 %v2777, %v3001
    %v3034 = vmul.f32 %v2778, %v3002
    %v3035 = vmul.f32 %v2779, %v3003
    %v3036 = vmul.f32 %v2780, %v3004
    %v3037 = vmul.f32 %v2781, %v3005
    %v3038 = vmul.f32 %v2782, %v3006
    %v3039 = vmul.f32 %v2783, %v3007
    %v3040 = vmul.f32 %v2784, %v3008
    %v3041 = vmul.f32 %v2785, %v3009
    %v3042 = vmul.f32 %v2786, %v3010
    %v3043 = vmul.f32 %v2787, %v3011
    %v3044 = vlaneseq
    %v3045 = vshrl.u32 %v3044, 7
    %v3046 = vsub.s32 0, %v3045
    %v3047 = vrot.slane %v171, %v3046
    %v3048 = vmul.f32 %v3012, %v3047
    %v3049 = vmul.f32 %v3013, %v3047
    %v3050 = vmul.f32 %v3014, %v3047
    %v3051 = vmul.f32 %v3015, %v3047
    %v3052 = vmul.f32 %v3016, %v3047
    %v3053 = vmul.f32 %v3017, %v3047
    %v3054 = vmul.f32 %v3018, %v3047
    %v3055 = vmul.f32 %v3019, %v3047
    %v3056 = vmul.f32 %v3020, %v3047
    %v3057 = vmul.f32 %v3021, %v3047
    %v3058 = vmul.f32 %v3022, %v3047
    %v3059 = vmul.f32 %v3023, %v3047
    %v3060 = vmul.f32 %v3024, %v3047
    %v3061 = vmul.f32 %v3025, %v3047
    %v3062 = vmul.f32 %v3026, %v3047
    %v3063 = vmul.f32 %v3027, %v3047
    %v3064 = vmul.f32 %v3028, %v3047
    %v3065 = vmul.f32 %v3029, %v3047
    %v3066 = vmul.f32 %v3030, %v3047
    %v3067 = vmul.f32 %v3031, %v3047
    %v3068 = vmul.f32 %v3032, %v3047
    %v3069 = vmul.f32 %v3033, %v3047
    %v3070 = vmul.f32 %v3034, %v3047
    %v3071 = vmul.f32 %v3035, %v3047
    %v3072 = vmul.f32 %v3036, %v3047
    %v3073 = vmul.f32 %v3037, %v3047
    %v3074 = vmul.f32 %v3038, %v3047
    %v3075 = vmul.f32 %v3039, %v3047
    %v3076 = vmul.f32 %v3040, %v3047
    %v3077 = vmul.f32 %v3041, %v3047
    %v3078 = vmul.f32 %v3042, %v3047
    %v3079 = vmul.f32 %v3043, %v3047
    %v3080 = vlaneseq
    %v3081 = vshrl.u32 %v3080, 7
    %v3082 = vsub.s32 0, %v3081
    %v3083 = vrot.slane %v172, %v3082
    %v3084 = vadd.f32 %v3048, %v3083
    %v3085 = vadd.f32 %v3049, %v3083
    %v3086 = vadd.f32 %v3050, %v3083
    %v3087 = vadd.f32 %v3051, %v3083
    %v3088 = vadd.f32 %v3052, %v3083
    %v3089 = vadd.f32 %v3053, %v3083
    %v3090 = vadd.f32 %v3054, %v3083
    %v3091 = vadd.f32 %v3055, %v3083
    %v3092 = vadd.f32 %v3056, %v3083
    %v3093 = vadd.f32 %v3057, %v3083
    %v3094 = vadd.f32 %v3058, %v3083
    %v3095 = vadd.f32 %v3059, %v3083
    %v3096 = vadd.f32 %v3060, %v3083
    %v3097 = vadd.f32 %v3061, %v3083
    %v3098 = vadd.f32 %v3062, %v3083
    %v3099 = vadd.f32 %v3063, %v3083
    %v3100 = vadd.f32 %v3064, %v3083
    %v3101 = vadd.f32 %v3065, %v3083
    %v3102 = vadd.f32 %v3066, %v3083
    %v3103 = vadd.f32 %v3067, %v3083
    %v3104 = vadd.f32 %v3068, %v3083
    %v3105 = vadd.f32 %v3069, %v3083
    %v3106 = vadd.f32 %v3070, %v3083
    %v3107 = vadd.f32 %v3071, %v3083
    %v3108 = vadd.f32 %v3072, %v3083
    %v3109 = vadd.f32 %v3073, %v3083
    %v3110 = vadd.f32 %v3074, %v3083
    %v3111 = vadd.f32 %v3075, %v3083
    %v3112 = vadd.f32 %v3076, %v3083
    %v3113 = vadd.f32 %v3077, %v3083
    %v3114 = vadd.f32 %v3078, %v3083
    %v3115 = vadd.f32 %v3079, %v3083
    %v3116 = vpack.c.bf16 %v3085, %v3084
    %v3117 = vpack.c.bf16 %v3087, %v3086
    %v3118 = vpack.c.bf16 %v3089, %v3088
    %v3119 = vpack.c.bf16 %v3091, %v3090
    %v3120 = vpack.c.bf16 %v3093, %v3092
    %v3121 = vpack.c.bf16 %v3095, %v3094
    %v3122 = vpack.c.bf16 %v3097, %v3096
    %v3123 = vpack.c.bf16 %v3099, %v3098
    %v3124 = vpack.c.bf16 %v3101, %v3100
    %v3125 = vpack.c.bf16 %v3103, %v3102
    %v3126 = vpack.c.bf16 %v3105, %v3104
    %v3127 = vpack.c.bf16 %v3107, %v3106
    %v3128 = vpack.c.bf16 %v3109, %v3108
    %v3129 = vpack.c.bf16 %v3111, %v3110
    %v3130 = vpack.c.bf16 %v3113, %v3112
    %v3131 = vpack.c.bf16 %v3115, %v3114
    %v3132 = vld [vmem:[#allocation10] sm:$0xf]
    %v3133 = vld [vmem:[#allocation10 + $0x4] sm:$0xf]
    %v3134 = vld [vmem:[#allocation10 + $0x8] sm:$0xf]
    %v3135 = vld [vmem:[#allocation10 + $0xc] sm:$0xf]
    %v3136 = vlaneseq
    %v3137 = vshrl.u32 %v3136, 7
    %v3138 = vsub.s32 0, %v3137
    %v3139 = vrot.slane %v177, %v3138
    %v3144 = vunpack.c.l.b16 %v3132
    %v3145 = vunpack.c.l.b16 %v3133
    %v3146 = vunpack.c.l.b16 %v3134
    %v3147 = vunpack.c.l.b16 %v3135
    %v3148 = vpack.c.b16 %v3145, %v3144
    %v3149 = vpack.c.b16 %v3147, %v3146
    %v3153 = vsel %vm180, %v3116, 0
    %v3156 = vsel %vm180, %v3117, 0
    %v3159 = vsel %vm180, %v3118, 0
    %v3162 = vsel %vm180, %v3119, 0
    %v3165 = vsel %vm180, %v3120, 0
    %v3168 = vsel %vm180, %v3121, 0
    %v3171 = vsel %vm180, %v3122, 0
    %v3174 = vsel %vm180, %v3123, 0
    %v3177 = vsel %vm180, %v3124, 0
    %v3180 = vsel %vm180, %v3125, 0
    %v3183 = vsel %vm180, %v3126, 0
    %v3186 = vsel %vm180, %v3127, 0
    %v3189 = vsel %vm180, %v3128, 0
    %v3192 = vsel %vm180, %v3129, 0
    %v3195 = vsel %vm180, %v3130, 0
    %v3198 = vsel %vm180, %v3131, 0
    %3200 = vmatprep.subr.bf16.mxu0 0
    %3201 = vmatpush1.bf16.msra.mxu0 %v3148
    %3202 = vmatprep.subr.bf16.mxu0 0
    %3203 = vmatpush1.bf16.msra.mxu0 %v3149
    %3204 = vmatprep.subr.bf16.mxu0 0
    %3205 = vmatpush1.bf16.msra.mxu0 0
    %3206 = vmatprep.subr.bf16.mxu0 0
    %3207 = vmatpush1.bf16.msra.mxu0 0
    %3208 = vmatprep.subr.bf16.mxu0 0
    %3209 = vmatpush1.bf16.msra.mxu0 0
    %3210 = vmatprep.subr.bf16.mxu0 0
    %3211 = vmatpush1.bf16.msra.mxu0 0
    %3212 = vmatprep.subr.bf16.mxu0 0
    %3213 = vmatpush1.bf16.msra.mxu0 0
    %3214 = vmatprep.subr.bf16.mxu0 0
    %3215 = vmatpush1.bf16.msra.mxu0 0
    %3216 = vmatprep.subr.bf16.mxu0 0
    %3217 = vmatpush1.bf16.msra.mxu0 0
    %3218 = vmatprep.subr.bf16.mxu0 0
    %3219 = vmatpush1.bf16.msra.mxu0 0
    %3220 = vmatprep.subr.bf16.mxu0 0
    %3221 = vmatpush1.bf16.msra.mxu0 0
    %3222 = vmatprep.subr.bf16.mxu0 0
    %3223 = vmatpush1.bf16.msra.mxu0 0
    %3224 = vmatprep.subr.bf16.mxu0 0
    %3225 = vmatpush1.bf16.msra.mxu0 0
    %3226 = vmatprep.subr.bf16.mxu0 0
    %3227 = vmatpush1.bf16.msra.mxu0 0
    %3228 = vmatprep.subr.bf16.mxu0 0
    %3229 = vmatpush1.bf16.msra.mxu0 0
    %3230 = vmatprep.subr.bf16.mxu0 0
    %3231 = vmatpush1.bf16.msra.mxu0 0
    %3232 = vmatprep.mubr.bf16.mxu0 0
    %3233 = vmatmul.mubr.bf16.gmra.mrb[0].mxu0 %v3153
    %v3234 = vpop.f32.mrb[0].mxu0
    %v3235 = vadd.f32 %v3139, %v3234
    %v3236 = vpop.f32.mrb[0].mxu0
    %v3237 = vpop.f32.mrb[0].mxu0
    %v3238 = vadd.f32 %v3139, %v3237
    %v3239 = vpop.f32.mrb[0].mxu0
    %3240 = vmatprep.mubr.bf16.mxu0 0
    %3241 = vmatmul.mubr.bf16.gmra.mrb[0].mxu0 %v3156
    %v3242 = vpop.f32.mrb[0].mxu0
    %v3243 = vadd.f32 %v3139, %v3242
    %v3244 = vpop.f32.mrb[0].mxu0
    %v3245 = vpop.f32.mrb[0].mxu0
    %v3246 = vadd.f32 %v3139, %v3245
    %v3247 = vpop.f32.mrb[0].mxu0
    %3248 = vmatprep.mubr.bf16.mxu0 0
    %3249 = vmatmul.mubr.bf16.gmra.mrb[0].mxu0 %v3159
    %v3250 = vpop.f32.mrb[0].mxu0
    %v3251 = vadd.f32 %v3139, %v3250
    %v3252 = vpop.f32.mrb[0].mxu0
    %v3253 = vpop.f32.mrb[0].mxu0
    %v3254 = vadd.f32 %v3139, %v3253
    %v3255 = vpop.f32.mrb[0].mxu0
    %3256 = vmatprep.mubr.bf16.mxu0 0
    %3257 = vmatmul.mubr.bf16.gmra.mrb[0].mxu0 %v3162
    %v3258 = vpop.f32.mrb[0].mxu0
    %v3259 = vadd.f32 %v3139, %v3258
    %v3260 = vpop.f32.mrb[0].mxu0
    %v3261 = vpop.f32.mrb[0].mxu0
    %v3262 = vadd.f32 %v3139, %v3261
    %v3263 = vpop.f32.mrb[0].mxu0
    %3264 = vmatprep.mubr.bf16.mxu0 0
    %3265 = vmatmul.mubr.bf16.gmra.mrb[0].mxu0 %v3165
    %v3266 = vpop.f32.mrb[0].mxu0
    %v3267 = vadd.f32 %v3139, %v3266
    %v3268 = vpop.f32.mrb[0].mxu0
    %v3269 = vpop.f32.mrb[0].mxu0
    %v3270 = vadd.f32 %v3139, %v3269
    %v3271 = vpop.f32.mrb[0].mxu0
    %3272 = vmatprep.mubr.bf16.mxu0 0
    %3273 = vmatmul.mubr.bf16.gmra.mrb[0].mxu0 %v3168
    %v3274 = vpop.f32.mrb[0].mxu0
    %v3275 = vadd.f32 %v3139, %v3274
    %v3276 = vpop.f32.mrb[0].mxu0
    %v3277 = vpop.f32.mrb[0].mxu0
    %v3278 = vadd.f32 %v3139, %v3277
    %v3279 = vpop.f32.mrb[0].mxu0
    %3280 = vmatprep.mubr.bf16.mxu0 0
    %3281 = vmatmul.mubr.bf16.gmra.mrb[0].mxu0 %v3171
    %v3282 = vpop.f32.mrb[0].mxu0
    %v3283 = vadd.f32 %v3139, %v3282
    %v3284 = vpop.f32.mrb[0].mxu0
    %v3285 = vpop.f32.mrb[0].mxu0
    %v3286 = vadd.f32 %v3139, %v3285
    %v3287 = vpop.f32.mrb[0].mxu0
    %3288 = vmatprep.mubr.bf16.mxu0 0
    %3289 = vmatmul.mubr.bf16.gmra.mrb[0].mxu0 %v3174
    %v3290 = vpop.f32.mrb[0].mxu0
    %v3291 = vadd.f32 %v3139, %v3290
    %v3292 = vpop.f32.mrb[0].mxu0
    %v3293 = vpop.f32.mrb[0].mxu0
    %v3294 = vadd.f32 %v3139, %v3293
    %v3295 = vpop.f32.mrb[0].mxu0
    %3296 = vmatprep.mubr.bf16.mxu0 0
    %3297 = vmatmul.mubr.bf16.gmra.mrb[0].mxu0 %v3177
    %v3298 = vpop.f32.mrb[0].mxu0
    %v3299 = vadd.f32 %v3139, %v3298
    %v3300 = vpop.f32.mrb[0].mxu0
    %v3301 = vpop.f32.mrb[0].mxu0
    %v3302 = vadd.f32 %v3139, %v3301
    %v3303 = vpop.f32.mrb[0].mxu0
    %3304 = vmatprep.mubr.bf16.mxu0 0
    %3305 = vmatmul.mubr.bf16.gmra.mrb[0].mxu0 %v3180
    %v3306 = vpop.f32.mrb[0].mxu0
    %v3307 = vadd.f32 %v3139, %v3306
    %v3308 = vpop.f32.mrb[0].mxu0
    %v3309 = vpop.f32.mrb[0].mxu0
    %v3310 = vadd.f32 %v3139, %v3309
    %v3311 = vpop.f32.mrb[0].mxu0
    %3312 = vmatprep.mubr.bf16.mxu0 0
    %3313 = vmatmul.mubr.bf16.gmra.mrb[0].mxu0 %v3183
    %v3314 = vpop.f32.mrb[0].mxu0
    %v3315 = vadd.f32 %v3139, %v3314
    %v3316 = vpop.f32.mrb[0].mxu0
    %v3317 = vpop.f32.mrb[0].mxu0
    %v3318 = vadd.f32 %v3139, %v3317
    %v3319 = vpop.f32.mrb[0].mxu0
    %3320 = vmatprep.mubr.bf16.mxu0 0
    %3321 = vmatmul.mubr.bf16.gmra.mrb[0].mxu0 %v3186
    %v3322 = vpop.f32.mrb[0].mxu0
    %v3323 = vadd.f32 %v3139, %v3322
    %v3324 = vpop.f32.mrb[0].mxu0
    %v3325 = vpop.f32.mrb[0].mxu0
    %v3326 = vadd.f32 %v3139, %v3325
    %v3327 = vpop.f32.mrb[0].mxu0
    %3328 = vmatprep.mubr.bf16.mxu0 0
    %3329 = vmatmul.mubr.bf16.gmra.mrb[0].mxu0 %v3189
    %v3330 = vpop.f32.mrb[0].mxu0
    %v3331 = vadd.f32 %v3139, %v3330
    %v3332 = vpop.f32.mrb[0].mxu0
    %v3333 = vpop.f32.mrb[0].mxu0
    %v3334 = vadd.f32 %v3139, %v3333
    %v3335 = vpop.f32.mrb[0].mxu0
    %3336 = vmatprep.mubr.bf16.mxu0 0
    %3337 = vmatmul.mubr.bf16.gmra.mrb[0].mxu0 %v3192
    %v3338 = vpop.f32.mrb[0].mxu0
    %v3339 = vadd.f32 %v3139, %v3338
    %v3340 = vpop.f32.mrb[0].mxu0
    %v3341 = vpop.f32.mrb[0].mxu0
    %v3342 = vadd.f32 %v3139, %v3341
    %v3343 = vpop.f32.mrb[0].mxu0
    %3344 = vmatprep.mubr.bf16.mxu0 0
    %3345 = vmatmul.mubr.bf16.gmra.mrb[0].mxu0 %v3195
    %v3346 = vpop.f32.mrb[0].mxu0
    %v3347 = vadd.f32 %v3139, %v3346
    %v3348 = vpop.f32.mrb[0].mxu0
    %v3349 = vpop.f32.mrb[0].mxu0
    %v3350 = vadd.f32 %v3139, %v3349
    %v3351 = vpop.f32.mrb[0].mxu0
    %3352 = vmatprep.mubr.bf16.mxu0 0
    %3353 = vmatmul.mubr.bf16.gmra.mrb[0].mxu0 %v3198
    %v3354 = vpop.f32.mrb[0].mxu0
    %v3355 = vadd.f32 %v3139, %v3354
    %v3356 = vpop.f32.mrb[0].mxu0
    %v3357 = vpop.f32.mrb[0].mxu0
    %v3358 = vadd.f32 %v3139, %v3357
    %v3359 = vpop.f32.mrb[0].mxu0
    %3360 = vdwg.mxu0
    %v3361 = vmul.f32 %v3235, %v3235
    %v3362 = vmul.f32 %v3238, %v3238
    %v3363 = vmul.f32 %v3243, %v3243
    %v3364 = vmul.f32 %v3246, %v3246
    %v3365 = vmul.f32 %v3251, %v3251
    %v3366 = vmul.f32 %v3254, %v3254
    %v3367 = vmul.f32 %v3259, %v3259
    %v3368 = vmul.f32 %v3262, %v3262
    %v3369 = vmul.f32 %v3267, %v3267
    %v3370 = vmul.f32 %v3270, %v3270
    %v3371 = vmul.f32 %v3275, %v3275
    %v3372 = vmul.f32 %v3278, %v3278
    %v3373 = vmul.f32 %v3283, %v3283
    %v3374 = vmul.f32 %v3286, %v3286
    %v3375 = vmul.f32 %v3291, %v3291
    %v3376 = vmul.f32 %v3294, %v3294
    %v3377 = vmul.f32 %v3299, %v3299
    %v3378 = vmul.f32 %v3302, %v3302
    %v3379 = vmul.f32 %v3307, %v3307
    %v3380 = vmul.f32 %v3310, %v3310
    %v3381 = vmul.f32 %v3315, %v3315
    %v3382 = vmul.f32 %v3318, %v3318
    %v3383 = vmul.f32 %v3323, %v3323
    %v3384 = vmul.f32 %v3326, %v3326
    %v3385 = vmul.f32 %v3331, %v3331
    %v3386 = vmul.f32 %v3334, %v3334
    %v3387 = vmul.f32 %v3339, %v3339
    %v3388 = vmul.f32 %v3342, %v3342
    %v3389 = vmul.f32 %v3347, %v3347
    %v3390 = vmul.f32 %v3350, %v3350
    %v3391 = vmul.f32 %v3355, %v3355
    %v3392 = vmul.f32 %v3358, %v3358
    %v3393 = vmul.f32 %v3235, %v3361
    %v3394 = vmul.f32 %v3238, %v3362
    %v3395 = vmul.f32 %v3243, %v3363
    %v3396 = vmul.f32 %v3246, %v3364
    %v3397 = vmul.f32 %v3251, %v3365
    %v3398 = vmul.f32 %v3254, %v3366
    %v3399 = vmul.f32 %v3259, %v3367
    %v3400 = vmul.f32 %v3262, %v3368
    %v3401 = vmul.f32 %v3267, %v3369
    %v3402 = vmul.f32 %v3270, %v3370
    %v3403 = vmul.f32 %v3275, %v3371
    %v3404 = vmul.f32 %v3278, %v3372
    %v3405 = vmul.f32 %v3283, %v3373
    %v3406 = vmul.f32 %v3286, %v3374
    %v3407 = vmul.f32 %v3291, %v3375
    %v3408 = vmul.f32 %v3294, %v3376
    %v3409 = vmul.f32 %v3299, %v3377
    %v3410 = vmul.f32 %v3302, %v3378
    %v3411 = vmul.f32 %v3307, %v3379
    %v3412 = vmul.f32 %v3310, %v3380
    %v3413 = vmul.f32 %v3315, %v3381
    %v3414 = vmul.f32 %v3318, %v3382
    %v3415 = vmul.f32 %v3323, %v3383
    %v3416 = vmul.f32 %v3326, %v3384
    %v3417 = vmul.f32 %v3331, %v3385
    %v3418 = vmul.f32 %v3334, %v3386
    %v3419 = vmul.f32 %v3339, %v3387
    %v3420 = vmul.f32 %v3342, %v3388
    %v3421 = vmul.f32 %v3347, %v3389
    %v3422 = vmul.f32 %v3350, %v3390
    %v3423 = vmul.f32 %v3355, %v3391
    %v3424 = vmul.f32 %v3358, %v3392
    %v3425 = vmul.f32 %v3393, 0.044715
    %v3426 = vmul.f32 %v3394, 0.044715
    %v3427 = vmul.f32 %v3395, 0.044715
    %v3428 = vmul.f32 %v3396, 0.044715
    %v3429 = vmul.f32 %v3397, 0.044715
    %v3430 = vmul.f32 %v3398, 0.044715
    %v3431 = vmul.f32 %v3399, 0.044715
    %v3432 = vmul.f32 %v3400, 0.044715
    %v3433 = vmul.f32 %v3401, 0.044715
    %v3434 = vmul.f32 %v3402, 0.044715
    %v3435 = vmul.f32 %v3403, 0.044715
    %v3436 = vmul.f32 %v3404, 0.044715
    %v3437 = vmul.f32 %v3405, 0.044715
    %v3438 = vmul.f32 %v3406, 0.044715
    %v3439 = vmul.f32 %v3407, 0.044715
    %v3440 = vmul.f32 %v3408, 0.044715
    %v3441 = vmul.f32 %v3409, 0.044715
    %v3442 = vmul.f32 %v3410, 0.044715
    %v3443 = vmul.f32 %v3411, 0.044715
    %v3444 = vmul.f32 %v3412, 0.044715
    %v3445 = vmul.f32 %v3413, 0.044715
    %v3446 = vmul.f32 %v3414, 0.044715
    %v3447 = vmul.f32 %v3415, 0.044715
    %v3448 = vmul.f32 %v3416, 0.044715
    %v3449 = vmul.f32 %v3417, 0.044715
    %v3450 = vmul.f32 %v3418, 0.044715
    %v3451 = vmul.f32 %v3419, 0.044715
    %v3452 = vmul.f32 %v3420, 0.044715
    %v3453 = vmul.f32 %v3421, 0.044715
    %v3454 = vmul.f32 %v3422, 0.044715
    %v3455 = vmul.f32 %v3423, 0.044715
    %v3456 = vmul.f32 %v3424, 0.044715
    %v3457 = vadd.f32 %v3235, %v3425
    %v3458 = vadd.f32 %v3238, %v3426
    %v3459 = vadd.f32 %v3243, %v3427
    %v3460 = vadd.f32 %v3246, %v3428
    %v3461 = vadd.f32 %v3251, %v3429
    %v3462 = vadd.f32 %v3254, %v3430
    %v3463 = vadd.f32 %v3259, %v3431
    %v3464 = vadd.f32 %v3262, %v3432
    %v3465 = vadd.f32 %v3267, %v3433
    %v3466 = vadd.f32 %v3270, %v3434
    %v3467 = vadd.f32 %v3275, %v3435
    %v3468 = vadd.f32 %v3278, %v3436
    %v3469 = vadd.f32 %v3283, %v3437
    %v3470 = vadd.f32 %v3286, %v3438
    %v3471 = vadd.f32 %v3291, %v3439
    %v3472 = vadd.f32 %v3294, %v3440
    %v3473 = vadd.f32 %v3299, %v3441
    %v3474 = vadd.f32 %v3302, %v3442
    %v3475 = vadd.f32 %v3307, %v3443
    %v3476 = vadd.f32 %v3310, %v3444
    %v3477 = vadd.f32 %v3315, %v3445
    %v3478 = vadd.f32 %v3318, %v3446
    %v3479 = vadd.f32 %v3323, %v3447
    %v3480 = vadd.f32 %v3326, %v3448
    %v3481 = vadd.f32 %v3331, %v3449
    %v3482 = vadd.f32 %v3334, %v3450
    %v3483 = vadd.f32 %v3339, %v3451
    %v3484 = vadd.f32 %v3342, %v3452
    %v3485 = vadd.f32 %v3347, %v3453
    %v3486 = vadd.f32 %v3350, %v3454
    %v3487 = vadd.f32 %v3355, %v3455
    %v3488 = vadd.f32 %v3358, %v3456
    %v3489 = vmul.f32 %v3457, 0.7978846
    %v3490 = vmul.f32 %v3458, 0.7978846
    %v3491 = vmul.f32 %v3459, 0.7978846
    %v3492 = vmul.f32 %v3460, 0.7978846
    %v3493 = vmul.f32 %v3461, 0.7978846
    %v3494 = vmul.f32 %v3462, 0.7978846
    %v3495 = vmul.f32 %v3463, 0.7978846
    %v3496 = vmul.f32 %v3464, 0.7978846
    %v3497 = vmul.f32 %v3465, 0.7978846
    %v3498 = vmul.f32 %v3466, 0.7978846
    %v3499 = vmul.f32 %v3467, 0.7978846
    %v3500 = vmul.f32 %v3468, 0.7978846
    %v3501 = vmul.f32 %v3469, 0.7978846
    %v3502 = vmul.f32 %v3470, 0.7978846
    %v3503 = vmul.f32 %v3471, 0.7978846
    %v3504 = vmul.f32 %v3472, 0.7978846
    %v3505 = vmul.f32 %v3473, 0.7978846
    %v3506 = vmul.f32 %v3474, 0.7978846
    %v3507 = vmul.f32 %v3475, 0.7978846
    %v3508 = vmul.f32 %v3476, 0.7978846
    %v3509 = vmul.f32 %v3477, 0.7978846
    %v3510 = vmul.f32 %v3478, 0.7978846
    %v3511 = vmul.f32 %v3479, 0.7978846
    %v3512 = vmul.f32 %v3480, 0.7978846
    %v3513 = vmul.f32 %v3481, 0.7978846
    %v3514 = vmul.f32 %v3482, 0.7978846
    %v3515 = vmul.f32 %v3483, 0.7978846
    %v3516 = vmul.f32 %v3484, 0.7978846
    %v3517 = vmul.f32 %v3485, 0.7978846
    %v3518 = vmul.f32 %v3486, 0.7978846
    %v3519 = vmul.f32 %v3487, 0.7978846
    %v3520 = vmul.f32 %v3488, 0.7978846
    %v3521 = vtanh.pop %v3489
    %v3522 = vtanh.pop %v3490
    %v3523 = vtanh.pop %v3491
    %v3524 = vtanh.pop %v3492
    %v3525 = vtanh.pop %v3493
    %v3526 = vtanh.pop %v3494
    %v3527 = vtanh.pop %v3495
    %v3528 = vtanh.pop %v3496
    %v3529 = vtanh.pop %v3497
    %v3530 = vtanh.pop %v3498
    %v3531 = vtanh.pop %v3499
    %v3532 = vtanh.pop %v3500
    %v3533 = vtanh.pop %v3501
    %v3534 = vtanh.pop %v3502
    %v3535 = vtanh.pop %v3503
    %v3536 = vtanh.pop %v3504
    %v3537 = vtanh.pop %v3505
    %v3538 = vtanh.pop %v3506
    %v3539 = vtanh.pop %v3507
    %v3540 = vtanh.pop %v3508
    %v3541 = vtanh.pop %v3509
    %v3542 = vtanh.pop %v3510
    %v3543 = vtanh.pop %v3511
    %v3544 = vtanh.pop %v3512
    %v3545 = vtanh.pop %v3513
    %v3546 = vtanh.pop %v3514
    %v3547 = vtanh.pop %v3515
    %v3548 = vtanh.pop %v3516
    %v3549 = vtanh.pop %v3517
    %v3550 = vtanh.pop %v3518
    %v3551 = vtanh.pop %v3519
    %v3552 = vtanh.pop %v3520
    %v3553 = vadd.f32 %v3521, 1.0
    %v3554 = vadd.f32 %v3522, 1.0
    %v3555 = vadd.f32 %v3523, 1.0
    %v3556 = vadd.f32 %v3524, 1.0
    %v3557 = vadd.f32 %v3525, 1.0
    %v3558 = vadd.f32 %v3526, 1.0
    %v3559 = vadd.f32 %v3527, 1.0
    %v3560 = vadd.f32 %v3528, 1.0
    %v3561 = vadd.f32 %v3529, 1.0
    %v3562 = vadd.f32 %v3530, 1.0
    %v3563 = vadd.f32 %v3531, 1.0
    %v3564 = vadd.f32 %v3532, 1.0
    %v3565 = vadd.f32 %v3533, 1.0
    %v3566 = vadd.f32 %v3534, 1.0
    %v3567 = vadd.f32 %v3535, 1.0
    %v3568 = vadd.f32 %v3536, 1.0
    %v3569 = vadd.f32 %v3537, 1.0
    %v3570 = vadd.f32 %v3538, 1.0
    %v3571 = vadd.f32 %v3539, 1.0
    %v3572 = vadd.f32 %v3540, 1.0
    %v3573 = vadd.f32 %v3541, 1.0
    %v3574 = vadd.f32 %v3542, 1.0
    %v3575 = vadd.f32 %v3543, 1.0
    %v3576 = vadd.f32 %v3544, 1.0
    %v3577 = vadd.f32 %v3545, 1.0
    %v3578 = vadd.f32 %v3546, 1.0
    %v3579 = vadd.f32 %v3547, 1.0
    %v3580 = vadd.f32 %v3548, 1.0
    %v3581 = vadd.f32 %v3549, 1.0
    %v3582 = vadd.f32 %v3550, 1.0
    %v3583 = vadd.f32 %v3551, 1.0
    %v3584 = vadd.f32 %v3552, 1.0
    %v3585 = vmul.f32 %v3553, 0.5
    %v3586 = vmul.f32 %v3554, 0.5
    %v3587 = vmul.f32 %v3555, 0.5
    %v3588 = vmul.f32 %v3556, 0.5
    %v3589 = vmul.f32 %v3557, 0.5
    %v3590 = vmul.f32 %v3558, 0.5
    %v3591 = vmul.f32 %v3559, 0.5
    %v3592 = vmul.f32 %v3560, 0.5
    %v3593 = vmul.f32 %v3561, 0.5
    %v3594 = vmul.f32 %v3562, 0.5
    %v3595 = vmul.f32 %v3563, 0.5
    %v3596 = vmul.f32 %v3564, 0.5
    %v3597 = vmul.f32 %v3565, 0.5
    %v3598 = vmul.f32 %v3566, 0.5
    %v3599 = vmul.f32 %v3567, 0.5
    %v3600 = vmul.f32 %v3568, 0.5
    %v3601 = vmul.f32 %v3569, 0.5
    %v3602 = vmul.f32 %v3570, 0.5
    %v3603 = vmul.f32 %v3571, 0.5
    %v3604 = vmul.f32 %v3572, 0.5
    %v3605 = vmul.f32 %v3573, 0.5
    %v3606 = vmul.f32 %v3574, 0.5
    %v3607 = vmul.f32 %v3575, 0.5
    %v3608 = vmul.f32 %v3576, 0.5
    %v3609 = vmul.f32 %v3577, 0.5
    %v3610 = vmul.f32 %v3578, 0.5
    %v3611 = vmul.f32 %v3579, 0.5
    %v3612 = vmul.f32 %v3580, 0.5
    %v3613 = vmul.f32 %v3581, 0.5
    %v3614 = vmul.f32 %v3582, 0.5
    %v3615 = vmul.f32 %v3583, 0.5
    %v3616 = vmul.f32 %v3584, 0.5
    %v3617 = vmul.f32 %v3235, %v3585
    %v3618 = vmul.f32 %v3238, %v3586
    %v3619 = vmul.f32 %v3243, %v3587
    %v3620 = vmul.f32 %v3246, %v3588
    %v3621 = vmul.f32 %v3251, %v3589
    %v3622 = vmul.f32 %v3254, %v3590
    %v3623 = vmul.f32 %v3259, %v3591
    %v3624 = vmul.f32 %v3262, %v3592
    %v3625 = vmul.f32 %v3267, %v3593
    %v3626 = vmul.f32 %v3270, %v3594
    %v3627 = vmul.f32 %v3275, %v3595
    %v3628 = vmul.f32 %v3278, %v3596
    %v3629 = vmul.f32 %v3283, %v3597
    %v3630 = vmul.f32 %v3286, %v3598
    %v3631 = vmul.f32 %v3291, %v3599
    %v3632 = vmul.f32 %v3294, %v3600
    %v3633 = vmul.f32 %v3299, %v3601
    %v3634 = vmul.f32 %v3302, %v3602
    %v3635 = vmul.f32 %v3307, %v3603
    %v3636 = vmul.f32 %v3310, %v3604
    %v3637 = vmul.f32 %v3315, %v3605
    %v3638 = vmul.f32 %v3318, %v3606
    %v3639 = vmul.f32 %v3323, %v3607
    %v3640 = vmul.f32 %v3326, %v3608
    %v3641 = vmul.f32 %v3331, %v3609
    %v3642 = vmul.f32 %v3334, %v3610
    %v3643 = vmul.f32 %v3339, %v3611
    %v3644 = vmul.f32 %v3342, %v3612
    %v3645 = vmul.f32 %v3347, %v3613
    %v3646 = vmul.f32 %v3350, %v3614
    %v3647 = vmul.f32 %v3355, %v3615
    %v3648 = vmul.f32 %v3358, %v3616
    %v3649 = vpack.c.bf16 %v3618, %v3617
    %v3650 = vpack.c.bf16 %v3620, %v3619
    %v3651 = vpack.c.bf16 %v3622, %v3621
    %v3652 = vpack.c.bf16 %v3624, %v3623
    %v3653 = vpack.c.bf16 %v3626, %v3625
    %v3654 = vpack.c.bf16 %v3628, %v3627
    %v3655 = vpack.c.bf16 %v3630, %v3629
    %v3656 = vpack.c.bf16 %v3632, %v3631
    %v3657 = vpack.c.bf16 %v3634, %v3633
    %v3658 = vpack.c.bf16 %v3636, %v3635
    %v3659 = vpack.c.bf16 %v3638, %v3637
    %v3660 = vpack.c.bf16 %v3640, %v3639
    %v3661 = vpack.c.bf16 %v3642, %v3641
    %v3662 = vpack.c.bf16 %v3644, %v3643
    %v3663 = vpack.c.bf16 %v3646, %v3645
    %v3664 = vpack.c.bf16 %v3648, %v3647
    %v3665 = vld [vmem:[%s8] sm:$0xf]
    %v3666 = vld [vmem:[%s8 + $0x4] sm:$0xf]
    %v3667 = vld [vmem:[%s8 + $0x8] sm:$0xf]
    %v3668 = vld [vmem:[%s8 + $0xc] sm:$0xf]
    %v3669 = vld [vmem:[%s8 + $0x10] sm:$0xf]
    %v3670 = vld [vmem:[%s8 + $0x14] sm:$0xf]
    %v3671 = vld [vmem:[%s8 + $0x18] sm:$0xf]
    %v3672 = vld [vmem:[%s8 + $0x1c] sm:$0xf]
    %v3673 = vlaneseq
    %v3674 = vshrl.u32 %v3673, 7
    %v3675 = vsub.s32 0, %v3674
    %v3676 = vrot.slane %v178, %v3675
    %v3685 = vunpack.c.l.b16 %v3665
    %v3686 = vunpack.c.l.b16 %v3666
    %v3687 = vunpack.c.l.b16 %v3667
    %v3688 = vunpack.c.l.b16 %v3668
    %v3689 = vunpack.c.l.b16 %v3669
    %v3690 = vunpack.c.l.b16 %v3670
    %v3691 = vunpack.c.l.b16 %v3671
    %v3692 = vunpack.c.l.b16 %v3672
    %v3693 = vpack.c.b16 %v3686, %v3685
    %v3694 = vpack.c.b16 %v3688, %v3687
    %v3695 = vpack.c.b16 %v3690, %v3689
    %v3696 = vpack.c.b16 %v3692, %v3691
    %vm3701 = vcmask 523264
    %v3703 = vsel %vm3701, %v3649, 0
    %v3706 = vsel %vm3701, %v3650, 0
    %v3709 = vsel %vm3701, %v3651, 0
    %v3712 = vsel %vm3701, %v3652, 0
    %v3715 = vsel %vm3701, %v3653, 0
    %v3718 = vsel %vm3701, %v3654, 0
    %v3721 = vsel %vm3701, %v3655, 0
    %v3724 = vsel %vm3701, %v3656, 0
    %v3727 = vsel %vm3701, %v3657, 0
    %v3730 = vsel %vm3701, %v3658, 0
    %v3733 = vsel %vm3701, %v3659, 0
    %v3736 = vsel %vm3701, %v3660, 0
    %v3739 = vsel %vm3701, %v3661, 0
    %v3742 = vsel %vm3701, %v3662, 0
    %v3745 = vsel %vm3701, %v3663, 0
    %v3748 = vsel %vm3701, %v3664, 0
    %3750 = vmatprep.subr.bf16.mxu0 0
    %3751 = vmatpush1.bf16.msra.mxu0 %v3693
    %3752 = vmatprep.subr.bf16.mxu0 0
    %3753 = vmatpush1.bf16.msra.mxu0 %v3694
    %3754 = vmatprep.subr.bf16.mxu0 0
    %3755 = vmatpush1.bf16.msra.mxu0 %v3695
    %3756 = vmatprep.subr.bf16.mxu0 0
    %3757 = vmatpush1.bf16.msra.mxu0 %v3696
    %3758 = vmatprep.subr.bf16.mxu0 0
    %3759 = vmatpush1.bf16.msra.mxu0 0
    %3760 = vmatprep.subr.bf16.mxu0 0
    %3761 = vmatpush1.bf16.msra.mxu0 0
    %3762 = vmatprep.subr.bf16.mxu0 0
    %3763 = vmatpush1.bf16.msra.mxu0 0
    %3764 = vmatprep.subr.bf16.mxu0 0
    %3765 = vmatpush1.bf16.msra.mxu0 0
    %3766 = vmatprep.subr.bf16.mxu0 0
    %3767 = vmatpush1.bf16.msra.mxu0 0
    %3768 = vmatprep.subr.bf16.mxu0 0
    %3769 = vmatpush1.bf16.msra.mxu0 0
    %3770 = vmatprep.subr.bf16.mxu0 0
    %3771 = vmatpush1.bf16.msra.mxu0 0
    %3772 = vmatprep.subr.bf16.mxu0 0
    %3773 = vmatpush1.bf16.msra.mxu0 0
    %3774 = vmatprep.subr.bf16.mxu0 0
    %3775 = vmatpush1.bf16.msra.mxu0 0
    %3776 = vmatprep.subr.bf16.mxu0 0
    %3777 = vmatpush1.bf16.msra.mxu0 0
    %3778 = vmatprep.subr.bf16.mxu0 0
    %3779 = vmatpush1.bf16.msra.mxu0 0
    %3780 = vmatprep.subr.bf16.mxu0 0
    %3781 = vmatpush1.bf16.msra.mxu0 0
    %3782 = vmatprep.mubr.bf16.mxu0 0
    %3783 = vmatmul.mubr.bf16.gmra.mrb[0].mxu0 %v3703
    %v3784 = vpop.f32.mrb[0].mxu0
    %v3785 = vadd.f32 %v3676, %v3784
    %v3786 = vpop.f32.mrb[0].mxu0
    %v3787 = vpop.f32.mrb[0].mxu0
    %v3788 = vadd.f32 %v3676, %v3787
    %v3789 = vpop.f32.mrb[0].mxu0
    %3790 = vmatprep.mubr.bf16.mxu0 0
    %3791 = vmatmul.mubr.bf16.gmra.mrb[0].mxu0 %v3706
    %v3792 = vpop.f32.mrb[0].mxu0
    %v3793 = vadd.f32 %v3676, %v3792
    %v3794 = vpop.f32.mrb[0].mxu0
    %v3795 = vpop.f32.mrb[0].mxu0
    %v3796 = vadd.f32 %v3676, %v3795
    %v3797 = vpop.f32.mrb[0].mxu0
    %3798 = vmatprep.mubr.bf16.mxu0 0
    %3799 = vmatmul.mubr.bf16.gmra.mrb[0].mxu0 %v3709
    %v3800 = vpop.f32.mrb[0].mxu0
    %v3801 = vadd.f32 %v3676, %v3800
    %v3802 = vpop.f32.mrb[0].mxu0
    %v3803 = vpop.f32.mrb[0].mxu0
    %v3804 = vadd.f32 %v3676, %v3803
    %v3805 = vpop.f32.mrb[0].mxu0
    %3806 = vmatprep.mubr.bf16.mxu0 0
    %3807 = vmatmul.mubr.bf16.gmra.mrb[0].mxu0 %v3712
    %v3808 = vpop.f32.mrb[0].mxu0
    %v3809 = vadd.f32 %v3676, %v3808
    %v3810 = vpop.f32.mrb[0].mxu0
    %v3811 = vpop.f32.mrb[0].mxu0
    %v3812 = vadd.f32 %v3676, %v3811
    %v3813 = vpop.f32.mrb[0].mxu0
    %3814 = vmatprep.mubr.bf16.mxu0 0
    %3815 = vmatmul.mubr.bf16.gmra.mrb[0].mxu0 %v3715
    %v3816 = vpop.f32.mrb[0].mxu0
    %v3817 = vadd.f32 %v3676, %v3816
    %v3818 = vpop.f32.mrb[0].mxu0
    %v3819 = vpop.f32.mrb[0].mxu0
    %v3820 = vadd.f32 %v3676, %v3819
    %v3821 = vpop.f32.mrb[0].mxu0
    %3822 = vmatprep.mubr.bf16.mxu0 0
    %3823 = vmatmul.mubr.bf16.gmra.mrb[0].mxu0 %v3718
    %v3824 = vpop.f32.mrb[0].mxu0
    %v3825 = vadd.f32 %v3676, %v3824
    %v3826 = vpop.f32.mrb[0].mxu0
    %v3827 = vpop.f32.mrb[0].mxu0
    %v3828 = vadd.f32 %v3676, %v3827
    %v3829 = vpop.f32.mrb[0].mxu0
    %3830 = vmatprep.mubr.bf16.mxu0 0
    %3831 = vmatmul.mubr.bf16.gmra.mrb[0].mxu0 %v3721
    %v3832 = vpop.f32.mrb[0].mxu0
    %v3833 = vadd.f32 %v3676, %v3832
    %v3834 = vpop.f32.mrb[0].mxu0
    %v3835 = vpop.f32.mrb[0].mxu0
    %v3836 = vadd.f32 %v3676, %v3835
    %v3837 = vpop.f32.mrb[0].mxu0
    %3838 = vmatprep.mubr.bf16.mxu0 0
    %3839 = vmatmul.mubr.bf16.gmra.mrb[0].mxu0 %v3724
    %v3840 = vpop.f32.mrb[0].mxu0
    %v3841 = vadd.f32 %v3676, %v3840
    %v3842 = vpop.f32.mrb[0].mxu0
    %v3843 = vpop.f32.mrb[0].mxu0
    %v3844 = vadd.f32 %v3676, %v3843
    %v3845 = vpop.f32.mrb[0].mxu0
    %3846 = vmatprep.mubr.bf16.mxu0 0
    %3847 = vmatmul.mubr.bf16.gmra.mrb[0].mxu0 %v3727
    %v3848 = vpop.f32.mrb[0].mxu0
    %v3849 = vadd.f32 %v3676, %v3848
    %v3850 = vpop.f32.mrb[0].mxu0
    %v3851 = vpop.f32.mrb[0].mxu0
    %v3852 = vadd.f32 %v3676, %v3851
    %v3853 = vpop.f32.mrb[0].mxu0
    %3854 = vmatprep.mubr.bf16.mxu0 0
    %3855 = vmatmul.mubr.bf16.gmra.mrb[0].mxu0 %v3730
    %v3856 = vpop.f32.mrb[0].mxu0
    %v3857 = vadd.f32 %v3676, %v3856
    %v3858 = vpop.f32.mrb[0].mxu0
    %v3859 = vpop.f32.mrb[0].mxu0
    %v3860 = vadd.f32 %v3676, %v3859
    %v3861 = vpop.f32.mrb[0].mxu0
    %3862 = vmatprep.mubr.bf16.mxu0 0
    %3863 = vmatmul.mubr.bf16.gmra.mrb[0].mxu0 %v3733
    %v3864 = vpop.f32.mrb[0].mxu0
    %v3865 = vadd.f32 %v3676, %v3864
    %v3866 = vpop.f32.mrb[0].mxu0
    %v3867 = vpop.f32.mrb[0].mxu0
    %v3868 = vadd.f32 %v3676, %v3867
    %v3869 = vpop.f32.mrb[0].mxu0
    %3870 = vmatprep.mubr.bf16.mxu0 0
    %3871 = vmatmul.mubr.bf16.gmra.mrb[0].mxu0 %v3736
    %v3872 = vpop.f32.mrb[0].mxu0
    %v3873 = vadd.f32 %v3676, %v3872
    %v3874 = vpop.f32.mrb[0].mxu0
    %v3875 = vpop.f32.mrb[0].mxu0
    %v3876 = vadd.f32 %v3676, %v3875
    %v3877 = vpop.f32.mrb[0].mxu0
    %3878 = vmatprep.mubr.bf16.mxu0 0
    %3879 = vmatmul.mubr.bf16.gmra.mrb[0].mxu0 %v3739
    %v3880 = vpop.f32.mrb[0].mxu0
    %v3881 = vadd.f32 %v3676, %v3880
    %v3882 = vpop.f32.mrb[0].mxu0
    %v3883 = vpop.f32.mrb[0].mxu0
    %v3884 = vadd.f32 %v3676, %v3883
    %v3885 = vpop.f32.mrb[0].mxu0
    %3886 = vmatprep.mubr.bf16.mxu0 0
    %3887 = vmatmul.mubr.bf16.gmra.mrb[0].mxu0 %v3742
    %v3888 = vpop.f32.mrb[0].mxu0
    %v3889 = vadd.f32 %v3676, %v3888
    %v3890 = vpop.f32.mrb[0].mxu0
    %v3891 = vpop.f32.mrb[0].mxu0
    %v3892 = vadd.f32 %v3676, %v3891
    %v3893 = vpop.f32.mrb[0].mxu0
    %3894 = vmatprep.mubr.bf16.mxu0 0
    %3895 = vmatmul.mubr.bf16.gmra.mrb[0].mxu0 %v3745
    %v3896 = vpop.f32.mrb[0].mxu0
    %v3897 = vadd.f32 %v3676, %v3896
    %v3898 = vpop.f32.mrb[0].mxu0
    %v3899 = vpop.f32.mrb[0].mxu0
    %v3900 = vadd.f32 %v3676, %v3899
    %v3901 = vpop.f32.mrb[0].mxu0
    %3902 = vmatprep.mubr.bf16.mxu0 0
    %3903 = vmatmul.mubr.bf16.gmra.mrb[0].mxu0 %v3748
    %v3904 = vpop.f32.mrb[0].mxu0
    %v3905 = vadd.f32 %v3676, %v3904
    %v3906 = vpop.f32.mrb[0].mxu0
    %v3907 = vpop.f32.mrb[0].mxu0
    %v3908 = vadd.f32 %v3676, %v3907
    %v3909 = vpop.f32.mrb[0].mxu0
    %3910 = vdwg.mxu0
    %v3911 = vadd.f32 %v2596, %v3785
    %v3912 = vadd.f32 %v2597, %v3788
    %v3913 = vadd.f32 %v2598, %v3793
    %v3914 = vadd.f32 %v2599, %v3796
    %v3915 = vadd.f32 %v2600, %v3801
    %v3916 = vadd.f32 %v2601, %v3804
    %v3917 = vadd.f32 %v2602, %v3809
    %v3918 = vadd.f32 %v2603, %v3812
    %v3919 = vadd.f32 %v2604, %v3817
    %v3920 = vadd.f32 %v2605, %v3820
    %v3921 = vadd.f32 %v2606, %v3825
    %v3922 = vadd.f32 %v2607, %v3828
    %v3923 = vadd.f32 %v2608, %v3833
    %v3924 = vadd.f32 %v2609, %v3836
    %v3925 = vadd.f32 %v2610, %v3841
    %v3926 = vadd.f32 %v2611, %v3844
    %v3927 = vadd.f32 %v2612, %v3849
    %v3928 = vadd.f32 %v2613, %v3852
    %v3929 = vadd.f32 %v2614, %v3857
    %v3930 = vadd.f32 %v2615, %v3860
    %v3931 = vadd.f32 %v2616, %v3865
    %v3932 = vadd.f32 %v2617, %v3868
    %v3933 = vadd.f32 %v2618, %v3873
    %v3934 = vadd.f32 %v2619, %v3876
    %v3935 = vadd.f32 %v2620, %v3881
    %v3936 = vadd.f32 %v2621, %v3884
    %v3937 = vadd.f32 %v2622, %v3889
    %v3938 = vadd.f32 %v2623, %v3892
    %v3939 = vadd.f32 %v2624, %v3897
    %v3940 = vadd.f32 %v2625, %v3900
    %v3941 = vadd.f32 %v2626, %v3905
    %v3942 = vadd.f32 %v2627, %v3908
    %v3943 = vpack.c.bf16 %v3911, %v3911
    %v3944 = vpack.c.bf16 %v3912, %v3912
    %v3945 = vpack.c.bf16 %v3913, %v3913
    %v3946 = vpack.c.bf16 %v3914, %v3914
    %v3947 = vpack.c.bf16 %v3915, %v3915
    %v3948 = vpack.c.bf16 %v3916, %v3916
    %v3949 = vpack.c.bf16 %v3917, %v3917
    %v3950 = vpack.c.bf16 %v3918, %v3918
    %v3951 = vpack.c.bf16 %v3919, %v3919
    %v3952 = vpack.c.bf16 %v3920, %v3920
    %v3953 = vpack.c.bf16 %v3921, %v3921
    %v3954 = vpack.c.bf16 %v3922, %v3922
    %v3955 = vpack.c.bf16 %v3923, %v3923
    %v3956 = vpack.c.bf16 %v3924, %v3924
    %v3957 = vpack.c.bf16 %v3925, %v3925
    %v3958 = vpack.c.bf16 %v3926, %v3926
    %v3959 = vpack.c.bf16 %v3927, %v3927
    %v3960 = vpack.c.bf16 %v3928, %v3928
    %v3961 = vpack.c.bf16 %v3929, %v3929
    %v3962 = vpack.c.bf16 %v3930, %v3930
    %v3963 = vpack.c.bf16 %v3931, %v3931
    %v3964 = vpack.c.bf16 %v3932, %v3932
    %v3965 = vpack.c.bf16 %v3933, %v3933
    %v3966 = vpack.c.bf16 %v3934, %v3934
    %v3967 = vpack.c.bf16 %v3935, %v3935
    %v3968 = vpack.c.bf16 %v3936, %v3936
    %v3969 = vpack.c.bf16 %v3937, %v3937
    %v3970 = vpack.c.bf16 %v3938, %v3938
    %v3971 = vpack.c.bf16 %v3939, %v3939
    %v3972 = vpack.c.bf16 %v3940, %v3940
    %v3973 = vpack.c.bf16 %v3941, %v3941
    %v3974 = vpack.c.bf16 %v3942, %v3942
    %v3975 = vld [vmem:[%s9] sm:$0xf]
    %v3976 = vld [vmem:[%s9 + $0x4] sm:$0xf]
    %v3977 = vld [vmem:[%s9 + $0x8] sm:$0xf]
    %v3978 = vld [vmem:[%s9 + $0xc] sm:$0xf]
    %v3979 = vlaneseq
    %v3980 = vshrl.u32 %v3979, 7
    %v3981 = vsub.s32 0, %v3980
    %v3982 = vrot.slane %v179, %v3981
    %v4015 = vunpack.c.l.b16 %v3943
    %v4016 = vunpack.c.l.b16 %v3944
    %v4017 = vunpack.c.l.b16 %v3945
    %v4018 = vunpack.c.l.b16 %v3946
    %v4019 = vunpack.c.l.b16 %v3947
    %v4020 = vunpack.c.l.b16 %v3948
    %v4021 = vunpack.c.l.b16 %v3949
    %v4022 = vunpack.c.l.b16 %v3950
    %v4023 = vunpack.c.l.b16 %v3951
    %v4024 = vunpack.c.l.b16 %v3952
    %v4025 = vunpack.c.l.b16 %v3953
    %v4026 = vunpack.c.l.b16 %v3954
    %v4027 = vunpack.c.l.b16 %v3955
    %v4028 = vunpack.c.l.b16 %v3956
    %v4029 = vunpack.c.l.b16 %v3957
    %v4030 = vunpack.c.l.b16 %v3958
    %v4031 = vunpack.c.l.b16 %v3959
    %v4032 = vunpack.c.l.b16 %v3960
    %v4033 = vunpack.c.l.b16 %v3961
    %v4034 = vunpack.c.l.b16 %v3962
    %v4035 = vunpack.c.l.b16 %v3963
    %v4036 = vunpack.c.l.b16 %v3964
    %v4037 = vunpack.c.l.b16 %v3965
    %v4038 = vunpack.c.l.b16 %v3966
    %v4039 = vunpack.c.l.b16 %v3967
    %v4040 = vunpack.c.l.b16 %v3968
    %v4041 = vunpack.c.l.b16 %v3969
    %v4042 = vunpack.c.l.b16 %v3970
    %v4043 = vunpack.c.l.b16 %v3971
    %v4044 = vunpack.c.l.b16 %v3972
    %v4045 = vunpack.c.l.b16 %v3973
    %v4046 = vunpack.c.l.b16 %v3974
    %v4047 = vrot.slane %v4015, 7
    %v4048 = vrot.slane %v4016, 6
    %vm4049 = vcmask 1041409
    %v4050 = vsel %vm4049, %v4048, %v4047
    %v4051 = vrot.slane %v4017, 5
    %vm4052 = vcmask 1042434
    %v4053 = vsel %vm4052, %v4051, %v4050
    %v4054 = vrot.slane %v4018, 4
    %vm4055 = vcmask 1043459
    %v4056 = vsel %vm4055, %v4054, %v4053
    %v4057 = vrot.slane %v4019, 3
    %vm4058 = vcmask 1044484
    %v4059 = vsel %vm4058, %v4057, %v4056
    %v4060 = vrot.slane %v4020, 2
    %vm4061 = vcmask 1045509
    %v4062 = vsel %vm4061, %v4060, %v4059
    %v4063 = vrot.slane %v4021, 1
    %vm4064 = vcmask 1046534
    %v4065 = vsel %vm4064, %v4063, %v4062
    %vm4066 = vcmask 1047559
    %v4067 = vsel %vm4066, %v4022, %v4065
    %v4068 = vrot.slane %v4023, 7
    %v4069 = vrot.slane %v4024, 6
    %v4070 = vsel %vm4049, %v4069, %v4068
    %v4071 = vrot.slane %v4025, 5
    %v4072 = vsel %vm4052, %v4071, %v4070
    %v4073 = vrot.slane %v4026, 4
    %v4074 = vsel %vm4055, %v4073, %v4072
    %v4075 = vrot.slane %v4027, 3
    %v4076 = vsel %vm4058, %v4075, %v4074
    %v4077 = vrot.slane %v4028, 2
    %v4078 = vsel %vm4061, %v4077, %v4076
    %v4079 = vrot.slane %v4029, 1
    %v4080 = vsel %vm4064, %v4079, %v4078
    %v4081 = vsel %vm4066, %v4030, %v4080
    %v4082 = vrot.slane %v4031, 7
    %v4083 = vrot.slane %v4032, 6
    %v4084 = vsel %vm4049, %v4083, %v4082
    %v4085 = vrot.slane %v4033, 5
    %v4086 = vsel %vm4052, %v4085, %v4084
    %v4087 = vrot.slane %v4034, 4
    %v4088 = vsel %vm4055, %v4087, %v4086
    %v4089 = vrot.slane %v4035, 3
    %v4090 = vsel %vm4058, %v4089, %v4088
    %v4091 = vrot.slane %v4036, 2
    %v4092 = vsel %vm4061, %v4091, %v4090
    %v4093 = vrot.slane %v4037, 1
    %v4094 = vsel %vm4064, %v4093, %v4092
    %v4095 = vsel %vm4066, %v4038, %v4094
    %v4096 = vrot.slane %v4039, 7
    %v4097 = vrot.slane %v4040, 6
    %v4098 = vsel %vm4049, %v4097, %v4096
    %v4099 = vrot.slane %v4041, 5
    %v4100 = vsel %vm4052, %v4099, %v4098
    %v4101 = vrot.slane %v4042, 4
    %v4102 = vsel %vm4055, %v4101, %v4100
    %v4103 = vrot.slane %v4043, 3
    %v4104 = vsel %vm4058, %v4103, %v4102
    %v4105 = vrot.slane %v4044, 2
    %v4106 = vsel %vm4061, %v4105, %v4104
    %v4107 = vrot.slane %v4045, 1
    %v4108 = vsel %vm4064, %v4107, %v4106
    %v4109 = vsel %vm4066, %v4046, %v4108
    %v4110 = vpack.c.b16 %v4081, %v4067
    %v4111 = vpack.c.b16 %v4109, %v4095
    %v4116 = vunpack.c.l.b16 %v3975
    %v4117 = vunpack.c.l.b16 %v3976
    %v4118 = vunpack.c.l.b16 %v3977
    %v4119 = vunpack.c.l.b16 %v3978
    %v4120 = vpack.c.b16 %v4117, %v4116
    %v4121 = vpack.c.b16 %v4119, %v4118
    %v4125 = vsel %vm180, %v4110, 0
    %v4128 = vsel %vm180, %v4111, 0
    %4130 = vmatprep.subr.bf16.mxu0 0
    %4131 = vmatpush1.bf16.msra.mxu0 %v4120
    %4132 = vmatprep.subr.bf16.mxu0 0
    %4133 = vmatpush1.bf16.msra.mxu0 %v4121
    %4134 = vmatprep.subr.bf16.mxu0 0
    %4135 = vmatpush1.bf16.msra.mxu0 0
    %4136 = vmatprep.subr.bf16.mxu0 0
    %4137 = vmatpush1.bf16.msra.mxu0 0
    %4138 = vmatprep.subr.bf16.mxu0 0
    %4139 = vmatpush1.bf16.msra.mxu0 0
    %4140 = vmatprep.subr.bf16.mxu0 0
    %4141 = vmatpush1.bf16.msra.mxu0 0
    %4142 = vmatprep.subr.bf16.mxu0 0
    %4143 = vmatpush1.bf16.msra.mxu0 0
    %4144 = vmatprep.subr.bf16.mxu0 0
    %4145 = vmatpush1.bf16.msra.mxu0 0
    %4146 = vmatprep.subr.bf16.mxu0 0
    %4147 = vmatpush1.bf16.msra.mxu0 0
    %4148 = vmatprep.subr.bf16.mxu0 0
    %4149 = vmatpush1.bf16.msra.mxu0 0
    %4150 = vmatprep.subr.bf16.mxu0 0
    %4151 = vmatpush1.bf16.msra.mxu0 0
    %4152 = vmatprep.subr.bf16.mxu0 0
    %4153 = vmatpush1.bf16.msra.mxu0 0
    %4154 = vmatprep.subr.bf16.mxu0 0
    %4155 = vmatpush1.bf16.msra.mxu0 0
    %4156 = vmatprep.subr.bf16.mxu0 0
    %4157 = vmatpush1.bf16.msra.mxu0 0
    %4158 = vmatprep.subr.bf16.mxu0 0
    %4159 = vmatpush1.bf16.msra.mxu0 0
    %4160 = vmatprep.subr.bf16.mxu0 0
    %4161 = vmatpush1.bf16.msra.mxu0 0
    %4162 = vmatprep.mubr.bf16.mxu0 0
    %4163 = vmatmul.mubr.bf16.gmra.mrb[0].mxu0 %v4125
    %v4164 = vpop.f32.mrb[0].mxu0
    %v4165 = vadd.f32 %v3982, %v4164
    %v4166 = vpop.f32.mrb[0].mxu0
    %v4167 = vpop.f32.mrb[0].mxu0
    %v4168 = vadd.f32 %v3982, %v4167
    %v4169 = vpop.f32.mrb[0].mxu0
    %4170 = vmatprep.mubr.bf16.mxu0 0
    %4171 = vmatmul.mubr.bf16.gmra.mrb[0].mxu0 %v4128
    %v4172 = vpop.f32.mrb[0].mxu0
    %v4173 = vadd.f32 %v3982, %v4172
    %v4174 = vpop.f32.mrb[0].mxu0
    %v4175 = vpop.f32.mrb[0].mxu0
    %v4176 = vadd.f32 %v3982, %v4175
    %v4177 = vpop.f32.mrb[0].mxu0
    %4178 = vdwg.mxu0
    %v4179 = vpack.c.bf16 %v4168, %v4165
    %v4180 = vpack.c.bf16 %v4176, %v4173
    %v4183 = vunpack.c.l.b16 %v4179
    %v4184 = vunpack.c.h.b16 %v4179
    %v4185 = vunpack.c.l.b16 %v4180
    %v4186 = vunpack.c.h.b16 %v4180
    %v4187 = vpack.c.b16 %v4183, %v4183
    %v4188 = vpack.c.b16 %v4184, %v4184
    %v4189 = vpack.c.b16 %v4185, %v4185
    %v4190 = vpack.c.b16 %v4186, %v4186
    %4195 = vst [vmem:[#allocation11] sm:$0xf] %v4187
    %4196 = vst [vmem:[#allocation11 + $0x4] sm:$0xf] %v4188
    %4197 = vst [vmem:[#allocation11 + $0x8] sm:$0xf] %v4189
    %4198 = vst [vmem:[#allocation11 + $0xc] sm:$0xf] %v4190
    // Predicated region
    $region62: #{tpu_custom_call.1} parent=1 // pred_check
      _
    $region63: #{tpu_custom_call.1} parent=1 // pred_check_branch
      %4200 = sbr.rel (0) target = $region65
    $region64: #{tpu_custom_call.1} parent=1 // pred_region
      %s4202 = ssub.s32 256, 256
      %4203 = vsyncadd [#allocation4], %s4202
      %s4204 = sshll.u32 [#allocation11], 4
      %s4205 = int_to_ptr.vmem [resolvable:$true] %s4204
      %4210 = dma.vmem_to_hbm [thread:$0]  %s4205, 256, %s10, [#allocation4], 64, 64, 4
    $region65: #{tpu_custom_call.1} parent=1 // pred_fallthru
      _
    // Predicated region
    $region66: #{tpu_custom_call.1} parent=1 // pred_check
      _
    $region67: #{tpu_custom_call.1} parent=1 // pred_check_branch
      %4212 = sbr.rel (0) target = $region69
    $region68: #{tpu_custom_call.1} parent=1 // pred_region
      %4213 = dma.done [#allocation4], 256
    $region69: #{tpu_custom_call.1} parent=1 // pred_fallthru
      _
    %4214 = vsyncpa [#allocation3], 1
    %4215 = vsyncpa [#allocation6], 1
    %4216 = vsyncpa [#allocation9], 1
    %4217 = vsyncpa [#allocation4], 1

</llo_original>
